<compile_context>
chip_gen: v7x
topology: tpu7x:2x2x1
jax: 0.10.0
libtpu: 0.0.40
codegen_flags: <defaults>
</compile_context>

<pallas_src>
import functools

import numpy as np
import jax
import jax.numpy as jnp
from jax import lax
from jax.experimental import pallas as pl
from jax.experimental.pallas import tpu as pltpu


_HEAD_PAD = 128   # fused policy|value output slab width (lane-dense)
_MAX_ROW_TILE = 128


# ------------------------------ fused kernel ------------------------------- #

def _fused_kernel(*args, n_conv, tb, h0, compute_dtype):
    """One grid step pushes `tb` samples through conv stack + FC + heads.

    refs (in order):
      x_ref                : (tb*h0, W0*C0)  tall stack of samples (stride h0 rows each)
      [m_ref, bias_ref]*L  : per conv layer:
          m_ref            : (kh, Win*Cin, Wout*Cout) banded width-conv matrices
          bias_ref         : (1, Wout*Cout)           width-tiled bias (f32)
      wfc_ref              : (Hlast, Wlast*Clast, FC) row-permuted FC weight
      bfc_ref              : (1, FC)                  f32
      wh_ref, bh_ref       : (FC, 128), (1, 128)      fused policy|value head
      o_ref                : (tb, 128)
    """
    x_ref = args[0]
    conv_refs = args[1:1 + 2 * n_conv]
    wfc_ref, bfc_ref, wh_ref, bh_ref, o_ref = args[1 + 2 * n_conv:]

    # Tall activation stack: sample b's valid rows always start at b*h0; rows whose
    # conv window crosses a sample boundary are garbage and never read downstream.
    h = x_ref[...]                                       # (tb*h0, W*C) f32
    rows = tb * h0
    for l in range(n_conv):
        m_ref = conv_refs[2 * l]
        bias_ref = conv_refs[2 * l + 1]
        kh = m_ref.shape[0]
        rows_out = rows - kh + 1
        # One batched MXU dot per kernel-height offset (M = rows_out, not per-sample).
        acc = jnp.dot(h[0:rows_out, :].astype(compute_dtype), m_ref[0],
                      preferred_element_type=jnp.float32)
        for dh in range(1, kh):
            acc = acc + jnp.dot(h[dh:dh + rows_out, :].astype(compute_dtype),
                                m_ref[dh], preferred_element_type=jnp.float32)
        h = jnp.maximum(acc + bias_ref[...], 0.0)        # bias+ReLU stay f32 (VPU)
        rows = rows_out

    # FC as one more "height convolution" over the tall stack: sample b's FC
    # pre-activation lands in row b*h0 of fc_acc.
    hl = wfc_ref.shape[0]
    rows_fc = rows - hl + 1
    fc_acc = jnp.dot(h[0:rows_fc, :].astype(compute_dtype), wfc_ref[0],
                     preferred_element_type=jnp.float32)
    for r in range(1, hl):
        fc_acc = fc_acc + jnp.dot(h[r:r + rows_fc, :].astype(compute_dtype),
                                  wfc_ref[r], preferred_element_type=jnp.float32)

    # Gather the tb valid rows (per-sample stride h0) with a constant 0/1 selection
    # matmul — the MXU slot has slack; avoids sublane gathers/reshuffles entirely.
    row_id = lax.broadcasted_iota(jnp.int32, (tb, rows_fc), 0)
    col_id = lax.broadcasted_iota(jnp.int32, (tb, rows_fc), 1)
    sel = (col_id == row_id * h0).astype(jnp.float32)
    fc_pre = jnp.dot(sel, fc_acc, preferred_element_type=jnp.float32)   # (tb, FC)
    fc = jnp.maximum(fc_pre + bfc_ref[...], 0.0)

    # Fused policy|value head: one lane/sublane-dense (tb, 128) store.
    out = jnp.dot(fc.astype(compute_dtype), wh_ref[...],
                  preferred_element_type=jnp.float32)
    o_ref[...] = (out + bh_ref[...]).astype(o_ref.dtype)


# --------------------- host-side parameter preparation --------------------- #

def _banded_width_matrices(w_eff, w_in):
    """Fold the width convolution into per-height banded (block-Toeplitz) matrices.

    w_eff: (kh, kw, cin, cout) -> (kh, w_in*cin, w_out*cout) with
      M[dh, w*cin + ci, ow*cout + co] = w_eff[dh, w - ow, ci, co]  for 0 <= w-ow < kw
    """
    kh, kw, cin, cout = w_eff.shape
    w_out = w_in - kw + 1
    m = np.zeros((kh, w_in * cin, w_out * cout), np.float32)
    for dh in range(kh):
        for ow in range(w_out):
            for dw in range(kw):
                w = ow + dw
                m[dh, w * cin:(w + 1) * cin, ow * cout:(ow + 1) * cout] = w_eff[dh, dw]
    return m


def prepare_fused_params(raw, input_shape, n_actions, compute_dtype=jnp.bfloat16):
    """One-time repack of PyTorch-layout params into kernel-ready (bf16) arrays."""
    c0, h0, w0 = input_shape
    convs = raw["conv"]
    s = int(convs[0][2])                     # first conv's stride -> space-to-depth
    if s > 1:
        assert h0 % s == 0 and w0 % s == 0, \
            "space-to-depth requires H and W divisible by the first conv stride"
        cur_c, cur_h, cur_w = c0 * s * s, h0 // s, w0 // s
    else:
        cur_c, cur_h, cur_w = c0, h0, w0
    in_h, in_wc = cur_h, cur_w * cur_c       # post-s2d input layout fed to the kernel

    arrays = []
    for li, (wgt, bias, stride) in enumerate(convs):
        wgt = np.asarray(wgt, np.float32)
        bias = np.asarray(bias, np.float32)
        kh, kw, cin, cout = wgt.shape
        if li == 0 and s > 1:
            kh_e, kw_e = -(-kh // s), -(-kw // s)
            w_eff = np.zeros((kh_e, kw_e, s, s, cin, cout), np.float32)
            for ih in range(kh):
                for iw in range(kw):
                    dh, p = divmod(ih, s)
                    dw, q = divmod(iw, s)
                    w_eff[dh, dw, p, q] = wgt[ih, iw]
            w_eff = w_eff.reshape(kh_e, kw_e, s * s * cin, cout)
        else:
            # TODO(synk): stride > 1 on non-first conv layers would need in-kernel
            # strided row selection; not required for this architecture.
            assert li == 0 or stride == 1, "only the first conv layer may be strided"
            w_eff = wgt
        ho = cur_h - w_eff.shape[0] + 1
        wo = cur_w - w_eff.shape[1] + 1
        arrays.append(jnp.asarray(_banded_width_matrices(w_eff, cur_w), compute_dtype))
        arrays.append(jnp.asarray(np.tile(bias, wo).reshape(1, wo * cout), jnp.float32))
        cur_h, cur_w, cur_c = ho, wo, cout

    # FC: permute rows from PyTorch (c, h, w) flatten order to the kernel's (h, w, c).
    wfc, bfc = raw["fc"]
    fc_dim = int(np.asarray(wfc).shape[1])
    wfc = np.asarray(wfc, np.float32).reshape(cur_c, cur_h, cur_w, fc_dim)
    wfc = np.transpose(wfc, (1, 2, 0, 3)).reshape(cur_h, cur_w * cur_c, fc_dim)
    arrays.append(jnp.asarray(wfc, compute_dtype))
    arrays.append(jnp.asarray(np.asarray(bfc, np.float32).reshape(1, fc_dim), jnp.float32))

    # Fused policy|value head, zero-padded to a lane-dense 128-wide slab.
    assert n_actions + 1 <= _HEAD_PAD
    wp, bp = raw["policy"]
    wv, bv = raw["value"]
    wh = np.zeros((fc_dim, _HEAD_PAD), np.float32)
    bh = np.zeros((1, _HEAD_PAD), np.float32)
    wh[:, :n_actions] = np.asarray(wp, np.float32)
    wh[:, n_actions:n_actions + 1] = np.asarray(wv, np.float32)
    bh[0, :n_actions] = np.asarray(bp, np.float32)
    bh[0, n_actions] = float(np.asarray(bv, np.float32)[0])
    arrays.append(jnp.asarray(wh, compute_dtype))
    arrays.append(jnp.asarray(bh, jnp.float32))

    meta = dict(n_conv=len(convs), n_actions=n_actions, s2d=s,
                h0=in_h, wc0=in_wc, fc_dim=fc_dim, compute_dtype=compute_dtype)
    return {"arrays": tuple(arrays), "meta": meta}


# ------------------------------- A2C forward ------------------------------- #

def _const_index_map(ndim):
    return lambda i: (0,) * ndim


def _weight_spec(a, single_buffer):
    idx_map = _const_index_map(a.ndim)
    if single_buffer:
        # Constant-index weight blocks: single-buffer them (halves their VMEM and
        # drops per-step DMA bookkeeping on this latency-bound kernel).
        return pl.BlockSpec(a.shape, idx_map, pipeline_mode=pl.Buffered(1))
    return pl.BlockSpec(a.shape, idx_map)


def _pick_row_tile(n):
    """Fat tiles amortize the ~0.35 us/step overhead (v5e/v6e), but keep >=2 grid
    steps whenever the batch allows it so v7x megacore sharding has work."""
    half = -(-n // 2)
    tb = -(-half // 8) * 8
    return max(8, min(_MAX_ROW_TILE, tb))


def preprocess_input(x_nchw, meta):
    """NCHW -> space-to-depth -> tall (N*H', W'*C') layout in f32.

    Pure layout plumbing (no FLOPs).  Latency-critical callers should produce this
    layout directly / hoist it out of the per-step path so the fused pallas_call has
    no XLA layout round trips in front of it.
    """
    s = meta["s2d"]
    x = jnp.transpose(x_nchw, (0, 2, 3, 1))              # NCHW -> NHWC
    n, hh, ww, cc = x.shape
    if s > 1:                                            # fold first conv's stride
        x = x.reshape(n, hh // s, s, ww // s, s, cc)
        x = jnp.transpose(x, (0, 1, 3, 2, 4, 5))
        hh, ww, cc = hh // s, ww // s, s * s * cc
    assert hh == meta["h0"] and ww * cc == meta["wc0"]
    return x.reshape(n * hh, ww * cc)


def a2c_forward_from_tall(fused, x_tall, n, single_buffer_weights=True):
    """Fused Pallas forward on an already-preprocessed tall input."""
    arrays, meta = fused["arrays"], fused["meta"]
    n_conv, n_actions = meta["n_conv"], meta["n_actions"]
    h0, wc0 = meta["h0"], meta["wc0"]
    compute_dtype = meta["compute_dtype"]

    tb = _pick_row_tile(n)
    n_pad = -(-n // tb) * tb
    if n_pad * h0 != x_tall.shape[0]:
        x_tall = jnp.pad(x_tall, ((0, n_pad * h0 - x_tall.shape[0]), (0, 0)))

    in_specs = [pl.BlockSpec((tb * h0, wc0), lambda i: (i, 0))]
    for a in arrays:
        in_specs.append(_weight_spec(a, single_buffer_weights))

    # Advisory cost estimate.
    rows, flops, idx = tb * h0, 0, 0
    for _ in range(n_conv):
        kh, kdim, ncols = arrays[idx].shape
        rows_out = rows - kh + 1
        flops += 2 * kh * rows_out * kdim * ncols
        rows, idx = rows_out, idx + 2
    hl, kf, fc_dim = arrays[idx].shape
    rows_fc = rows - hl + 1
    flops += 2 * hl * rows_fc * kf * fc_dim
    flops += 2 * tb * rows_fc * fc_dim                 # selection matmul
    flops += 2 * tb * fc_dim * _HEAD_PAD               # fused head
    flops *= n_pad // tb
    bytes_accessed = (int(x_tall.size) * x_tall.dtype.itemsize
                      + sum(int(a.size) * a.dtype.itemsize for a in arrays)
                      + n_pad * _HEAD_PAD * 4)

    out = pl.pallas_call(
        functools.partial(_fused_kernel, n_conv=n_conv, tb=tb, h0=h0,
                          compute_dtype=compute_dtype),
        out_shape=jax.ShapeDtypeStruct((n_pad, _HEAD_PAD), jnp.float32),
        grid=(n_pad // tb,),
        in_specs=in_specs,
        out_specs=pl.BlockSpec((tb, _HEAD_PAD), lambda i: (i, 0)),
        compiler_params=pltpu.CompilerParams(
            dimension_semantics=("parallel",)),
        cost_estimate=pl.CostEstimate(flops=int(flops), transcendentals=0,
                                      bytes_accessed=int(bytes_accessed)),
    )(x_tall, *arrays)

    policy = out[:n, :n_actions]
    value = out[:n, n_actions:n_actions + 1]
    return policy, value


def a2c_fused_forward(fused, x_nchw, single_buffer_weights=True):
    """Full A2C forward (NCHW input) -> (policy, value)."""
    n = x_nchw.shape[0]
    x_tall = preprocess_input(x_nchw.astype(jnp.float32), fused["meta"])
    return a2c_forward_from_tall(fused, x_tall, n, single_buffer_weights)


# ----------------------- deterministic parameter init ---------------------- #

def _linear_init(key, fin, fout):
    k1, k2 = jax.random.split(key)
    bound = 1.0 / float(fin) ** 0.5
    w = jax.random.uniform(k1, (fin, fout), jnp.float32, -bound, bound)
    b = jax.random.uniform(k2, (fout,), jnp.float32, -bound, bound)
    return (w, b)


def init_params(key, input_shape, n_actions, conv_layers, fc_layer):
    c_in, h, w = input_shape
    params = {"conv": []}
    prev_c, sh, sw = c_in, h, w
    for layer in conv_layers:
        k, s, out_c = layer["k"], layer["s"], layer["out_c"]
        key, k1, k2 = jax.random.split(key, 3)
        fan_in = prev_c * k * k
        bound = 1.0 / float(fan_in) ** 0.5
        wgt = jax.random.uniform(k1, (k, k, prev_c, out_c), jnp.float32, -bound, bound)
        bias = jax.random.uniform(k2, (out_c,), jnp.float32, -bound, bound)
        params["conv"].append((wgt, bias, s))
        sh, sw = (sh - k) // s + 1, (sw - k) // s + 1
        prev_c = out_c
    conv_out_size = prev_c * sh * sw
    key, kf, kp, kv = jax.random.split(key, 4)
    params["fc"] = _linear_init(kf, conv_out_size, fc_layer)
    params["policy"] = _linear_init(kp, fc_layer, n_actions)   # policy_layer == fc_layer
    params["value"] = _linear_init(kv, fc_layer, 1)            # value_layer  == fc_layer
    return params, conv_out_size


# ------------------------------ pure-JAX reference ------------------------- #

def reference_forward(params, x_nchw):
    fx = x_nchw.astype(jnp.float32)
    h = fx
    for (wgt, bias, stride) in params["conv"]:
        h = lax.conv_general_dilated(h, wgt, (stride, stride), "VALID",
                                     dimension_numbers=("NCHW", "HWIO", "NCHW"))
        h = jnp.maximum(h + bias[None, :, None, None], 0.0)
    flat = h.reshape(fx.shape[0], -1)
    fc = jnp.maximum(flat @ params["fc"][0] + params["fc"][1], 0.0)
    pol = fc @ params["policy"][0] + params["policy"][1]
    val = fc @ params["value"][0] + params["value"][1]
    return pol, val


if __name__ == "__main__":
    key = jax.random.PRNGKey(0)
    input_shape = (4, 16, 16)                         # (C, H, W), PyTorch NCHW input
    n_actions = 6
    conv_layers = [
        {"in_c": 4, "out_c": 8, "k": 4, "s": 2},      # 16 -> 7
        {"in_c": 8, "out_c": 16, "k": 3, "s": 1},     # 7  -> 5
    ]
    fc_layer = 32                                     # policy_layer = value_layer = 32

    key, pkey, xkey = jax.random.split(key, 3)
    raw_params, conv_out_size = init_params(pkey, input_shape, n_actions,
                                            conv_layers, fc_layer)
    assert conv_out_size == 16 * 5 * 5

    fused = prepare_fused_params(raw_params, input_shape, n_actions,
                                 compute_dtype=jnp.bfloat16)

    x = jax.random.normal(xkey, (2,) + input_shape, jnp.float32)

    def build_forward(single_buffer):
        return jax.jit(functools.partial(a2c_fused_forward, fused,
                                         single_buffer_weights=single_buffer))

    forward = build_forward(True)
    try:
        policy, value = jax.block_until_ready(forward(x))
    except Exception:
        # pl.Buffered(1) single-buffering of the resident weight blocks is not
        # available on every JAX/Mosaic build; fall back to default pipelining.
        forward = build_forward(False)
        policy, value = jax.block_until_ready(forward(x))

    pol_ref, val_ref = reference_forward(raw_params, x)

    assert policy.shape == (2, n_actions) and value.shape == (2, 1)
    # bf16 MXU operands with f32 accumulation -> relaxed tolerance vs the f32 reference.
    assert jnp.allclose(policy, pol_ref, atol=1e-2, rtol=1e-2)
    assert jnp.allclose(value, val_ref, atol=1e-2, rtol=1e-2)
    print("KERNEL_OK")
</pallas_src>

<mosaic_0001>
module attributes {stable_mosaic.version = 11 : i64} {
  func.func @_fused_kernel(%arg0: i32, %arg1: memref<64x128xf32, #tpu.memory_space<vmem>>, %arg2: memref<2x128x56xbf16, #tpu.memory_space<vmem>>, %arg3: memref<1x56xf32, #tpu.memory_space<vmem>>, %arg4: memref<3x56x80xbf16, #tpu.memory_space<vmem>>, %arg5: memref<1x80xf32, #tpu.memory_space<vmem>>, %arg6: memref<5x80x32xbf16, #tpu.memory_space<vmem>>, %arg7: memref<1x32xf32, #tpu.memory_space<vmem>>, %arg8: memref<32x128xbf16, #tpu.memory_space<vmem>>, %arg9: memref<1x128xf32, #tpu.memory_space<vmem>>, %arg10: memref<8x128xf32, #tpu.memory_space<vmem>>) attributes {dimension_semantics = [#tpu.dimension_semantics<parallel>], iteration_bounds = array<i64: 1>, scalar_prefetch = 0 : i64, scratch_operands = 0 : i64, tpu.core_type = #tpu.core_type<tc>, window_params = [{transform_indices = @transform_0, window_bounds = array<i64: 64, 128>}, {pipeline_mode = #tpu.pipeline_mode<synchronous>, transform_indices = @transform_1, window_bounds = array<i64: 2, 128, 56>}, {pipeline_mode = #tpu.pipeline_mode<synchronous>, transform_indices = @transform_2, window_bounds = array<i64: 1, 56>}, {pipeline_mode = #tpu.pipeline_mode<synchronous>, transform_indices = @transform_3, window_bounds = array<i64: 3, 56, 80>}, {pipeline_mode = #tpu.pipeline_mode<synchronous>, transform_indices = @transform_4, window_bounds = array<i64: 1, 80>}, {pipeline_mode = #tpu.pipeline_mode<synchronous>, transform_indices = @transform_5, window_bounds = array<i64: 5, 80, 32>}, {pipeline_mode = #tpu.pipeline_mode<synchronous>, transform_indices = @transform_6, window_bounds = array<i64: 1, 32>}, {pipeline_mode = #tpu.pipeline_mode<synchronous>, transform_indices = @transform_7, window_bounds = array<i64: 32, 128>}, {pipeline_mode = #tpu.pipeline_mode<synchronous>, transform_indices = @transform_8, window_bounds = array<i64: 1, 128>}, {transform_indices = @transform_9, window_bounds = array<i64: 8, 128>}]} {
    %c0 = arith.constant 0 : index
    %c0_0 = arith.constant 0 : index
    %0 = vector.load %arg1[%c0, %c0_0] : memref<64x128xf32, #tpu.memory_space<vmem>>, vector<64x128xf32>
    %1 = vector.extract_strided_slice %0 {offsets = [0, 0], sizes = [63, 128], strides = [1, 1]} : vector<64x128xf32> to vector<63x128xf32>
    %2 = arith.truncf %1 : vector<63x128xf32> to vector<63x128xbf16>
    %c0_1 = arith.constant 0 : index
    %c0_2 = arith.constant 0 : index
    %c0_3 = arith.constant 0 : index
    %3 = vector.load %arg2[%c0_1, %c0_2, %c0_3] : memref<2x128x56xbf16, #tpu.memory_space<vmem>>, vector<1x128x56xbf16>
    %4 = vector.shape_cast %3 : vector<1x128x56xbf16> to vector<128x56xbf16>
    %cst = arith.constant dense<0.000000e+00> : vector<63x56xf32>
    %5 = tpu.matmul %2, %4, %cst {dimension_numbers = #tpu.dot_dimension_numbers<[1], [0], [0], [1], [0, 0, 1, 1], [], []>} : vector<63x128xbf16>, vector<128x56xbf16>, vector<63x56xf32> -> vector<63x56xf32>
    %6 = vector.extract_strided_slice %0 {offsets = [1, 0], sizes = [63, 128], strides = [1, 1]} : vector<64x128xf32> to vector<63x128xf32>
    %7 = arith.truncf %6 : vector<63x128xf32> to vector<63x128xbf16>
    %c1 = arith.constant 1 : index
    %c0_4 = arith.constant 0 : index
    %c0_5 = arith.constant 0 : index
    %8 = vector.load %arg2[%c1, %c0_4, %c0_5] : memref<2x128x56xbf16, #tpu.memory_space<vmem>>, vector<1x128x56xbf16>
    %9 = vector.shape_cast %8 : vector<1x128x56xbf16> to vector<128x56xbf16>
    %cst_6 = arith.constant dense<0.000000e+00> : vector<63x56xf32>
    %10 = tpu.matmul %7, %9, %cst_6 {dimension_numbers = #tpu.dot_dimension_numbers<[1], [0], [0], [1], [0, 0, 1, 1], [], []>} : vector<63x128xbf16>, vector<128x56xbf16>, vector<63x56xf32> -> vector<63x56xf32>
    %11 = arith.addf %5, %10 : vector<63x56xf32>
    %c0_7 = arith.constant 0 : index
    %c0_8 = arith.constant 0 : index
    %12 = vector.load %arg3[%c0_7, %c0_8] : memref<1x56xf32, #tpu.memory_space<vmem>>, vector<1x56xf32>
    %13 = vector.broadcast %12 : vector<1x56xf32> to vector<63x56xf32>
    %14 = arith.addf %11, %13 : vector<63x56xf32>
    %cst_9 = arith.constant 0.000000e+00 : f32
    %15 = vector.broadcast %cst_9 : f32 to vector<63x56xf32>
    %16 = arith.maximumf %14, %15 : vector<63x56xf32>
    %17 = vector.extract_strided_slice %16 {offsets = [0, 0], sizes = [61, 56], strides = [1, 1]} : vector<63x56xf32> to vector<61x56xf32>
    %18 = arith.truncf %17 : vector<61x56xf32> to vector<61x56xbf16>
    %c0_10 = arith.constant 0 : index
    %c0_11 = arith.constant 0 : index
    %c0_12 = arith.constant 0 : index
    %19 = vector.load %arg4[%c0_10, %c0_11, %c0_12] : memref<3x56x80xbf16, #tpu.memory_space<vmem>>, vector<1x56x80xbf16>
    %20 = vector.shape_cast %19 : vector<1x56x80xbf16> to vector<56x80xbf16>
    %cst_13 = arith.constant dense<0.000000e+00> : vector<61x80xf32>
    %21 = tpu.matmul %18, %20, %cst_13 {dimension_numbers = #tpu.dot_dimension_numbers<[1], [0], [0], [1], [0, 0, 1, 1], [], []>} : vector<61x56xbf16>, vector<56x80xbf16>, vector<61x80xf32> -> vector<61x80xf32>
    %22 = vector.extract_strided_slice %16 {offsets = [1, 0], sizes = [61, 56], strides = [1, 1]} : vector<63x56xf32> to vector<61x56xf32>
    %23 = arith.truncf %22 : vector<61x56xf32> to vector<61x56xbf16>
    %c1_14 = arith.constant 1 : index
    %c0_15 = arith.constant 0 : index
    %c0_16 = arith.constant 0 : index
    %24 = vector.load %arg4[%c1_14, %c0_15, %c0_16] : memref<3x56x80xbf16, #tpu.memory_space<vmem>>, vector<1x56x80xbf16>
    %25 = vector.shape_cast %24 : vector<1x56x80xbf16> to vector<56x80xbf16>
    %cst_17 = arith.constant dense<0.000000e+00> : vector<61x80xf32>
    %26 = tpu.matmul %23, %25, %cst_17 {dimension_numbers = #tpu.dot_dimension_numbers<[1], [0], [0], [1], [0, 0, 1, 1], [], []>} : vector<61x56xbf16>, vector<56x80xbf16>, vector<61x80xf32> -> vector<61x80xf32>
    %27 = arith.addf %21, %26 : vector<61x80xf32>
    %28 = vector.extract_strided_slice %16 {offsets = [2, 0], sizes = [61, 56], strides = [1, 1]} : vector<63x56xf32> to vector<61x56xf32>
    %29 = arith.truncf %28 : vector<61x56xf32> to vector<61x56xbf16>
    %c2 = arith.constant 2 : index
    %c0_18 = arith.constant 0 : index
    %c0_19 = arith.constant 0 : index
    %30 = vector.load %arg4[%c2, %c0_18, %c0_19] : memref<3x56x80xbf16, #tpu.memory_space<vmem>>, vector<1x56x80xbf16>
    %31 = vector.shape_cast %30 : vector<1x56x80xbf16> to vector<56x80xbf16>
    %cst_20 = arith.constant dense<0.000000e+00> : vector<61x80xf32>
    %32 = tpu.matmul %29, %31, %cst_20 {dimension_numbers = #tpu.dot_dimension_numbers<[1], [0], [0], [1], [0, 0, 1, 1], [], []>} : vector<61x56xbf16>, vector<56x80xbf16>, vector<61x80xf32> -> vector<61x80xf32>
    %33 = arith.addf %27, %32 : vector<61x80xf32>
    %c0_21 = arith.constant 0 : index
    %c0_22 = arith.constant 0 : index
    %34 = vector.load %arg5[%c0_21, %c0_22] : memref<1x80xf32, #tpu.memory_space<vmem>>, vector<1x80xf32>
    %35 = vector.broadcast %34 : vector<1x80xf32> to vector<61x80xf32>
    %36 = arith.addf %33, %35 : vector<61x80xf32>
    %cst_23 = arith.constant 0.000000e+00 : f32
    %37 = vector.broadcast %cst_23 : f32 to vector<61x80xf32>
    %38 = arith.maximumf %36, %37 : vector<61x80xf32>
    %39 = vector.extract_strided_slice %38 {offsets = [0, 0], sizes = [57, 80], strides = [1, 1]} : vector<61x80xf32> to vector<57x80xf32>
    %40 = arith.truncf %39 : vector<57x80xf32> to vector<57x80xbf16>
    %c0_24 = arith.constant 0 : index
    %c0_25 = arith.constant 0 : index
    %c0_26 = arith.constant 0 : index
    %41 = vector.load %arg6[%c0_24, %c0_25, %c0_26] : memref<5x80x32xbf16, #tpu.memory_space<vmem>>, vector<1x80x32xbf16>
    %42 = vector.shape_cast %41 : vector<1x80x32xbf16> to vector<80x32xbf16>
    %cst_27 = arith.constant dense<0.000000e+00> : vector<57x32xf32>
    %43 = tpu.matmul %40, %42, %cst_27 {dimension_numbers = #tpu.dot_dimension_numbers<[1], [0], [0], [1], [0, 0, 1, 1], [], []>} : vector<57x80xbf16>, vector<80x32xbf16>, vector<57x32xf32> -> vector<57x32xf32>
    %44 = vector.extract_strided_slice %38 {offsets = [1, 0], sizes = [57, 80], strides = [1, 1]} : vector<61x80xf32> to vector<57x80xf32>
    %45 = arith.truncf %44 : vector<57x80xf32> to vector<57x80xbf16>
    %c1_28 = arith.constant 1 : index
    %c0_29 = arith.constant 0 : index
    %c0_30 = arith.constant 0 : index
    %46 = vector.load %arg6[%c1_28, %c0_29, %c0_30] : memref<5x80x32xbf16, #tpu.memory_space<vmem>>, vector<1x80x32xbf16>
    %47 = vector.shape_cast %46 : vector<1x80x32xbf16> to vector<80x32xbf16>
    %cst_31 = arith.constant dense<0.000000e+00> : vector<57x32xf32>
    %48 = tpu.matmul %45, %47, %cst_31 {dimension_numbers = #tpu.dot_dimension_numbers<[1], [0], [0], [1], [0, 0, 1, 1], [], []>} : vector<57x80xbf16>, vector<80x32xbf16>, vector<57x32xf32> -> vector<57x32xf32>
    %49 = arith.addf %43, %48 : vector<57x32xf32>
    %50 = vector.extract_strided_slice %38 {offsets = [2, 0], sizes = [57, 80], strides = [1, 1]} : vector<61x80xf32> to vector<57x80xf32>
    %51 = arith.truncf %50 : vector<57x80xf32> to vector<57x80xbf16>
    %c2_32 = arith.constant 2 : index
    %c0_33 = arith.constant 0 : index
    %c0_34 = arith.constant 0 : index
    %52 = vector.load %arg6[%c2_32, %c0_33, %c0_34] : memref<5x80x32xbf16, #tpu.memory_space<vmem>>, vector<1x80x32xbf16>
    %53 = vector.shape_cast %52 : vector<1x80x32xbf16> to vector<80x32xbf16>
    %cst_35 = arith.constant dense<0.000000e+00> : vector<57x32xf32>
    %54 = tpu.matmul %51, %53, %cst_35 {dimension_numbers = #tpu.dot_dimension_numbers<[1], [0], [0], [1], [0, 0, 1, 1], [], []>} : vector<57x80xbf16>, vector<80x32xbf16>, vector<57x32xf32> -> vector<57x32xf32>
    %55 = arith.addf %49, %54 : vector<57x32xf32>
    %56 = vector.extract_strided_slice %38 {offsets = [3, 0], sizes = [57, 80], strides = [1, 1]} : vector<61x80xf32> to vector<57x80xf32>
    %57 = arith.truncf %56 : vector<57x80xf32> to vector<57x80xbf16>
    %c3 = arith.constant 3 : index
    %c0_36 = arith.constant 0 : index
    %c0_37 = arith.constant 0 : index
    %58 = vector.load %arg6[%c3, %c0_36, %c0_37] : memref<5x80x32xbf16, #tpu.memory_space<vmem>>, vector<1x80x32xbf16>
    %59 = vector.shape_cast %58 : vector<1x80x32xbf16> to vector<80x32xbf16>
    %cst_38 = arith.constant dense<0.000000e+00> : vector<57x32xf32>
    %60 = tpu.matmul %57, %59, %cst_38 {dimension_numbers = #tpu.dot_dimension_numbers<[1], [0], [0], [1], [0, 0, 1, 1], [], []>} : vector<57x80xbf16>, vector<80x32xbf16>, vector<57x32xf32> -> vector<57x32xf32>
    %61 = arith.addf %55, %60 : vector<57x32xf32>
    %62 = vector.extract_strided_slice %38 {offsets = [4, 0], sizes = [57, 80], strides = [1, 1]} : vector<61x80xf32> to vector<57x80xf32>
    %63 = arith.truncf %62 : vector<57x80xf32> to vector<57x80xbf16>
    %c4 = arith.constant 4 : index
    %c0_39 = arith.constant 0 : index
    %c0_40 = arith.constant 0 : index
    %64 = vector.load %arg6[%c4, %c0_39, %c0_40] : memref<5x80x32xbf16, #tpu.memory_space<vmem>>, vector<1x80x32xbf16>
    %65 = vector.shape_cast %64 : vector<1x80x32xbf16> to vector<80x32xbf16>
    %cst_41 = arith.constant dense<0.000000e+00> : vector<57x32xf32>
    %66 = tpu.matmul %63, %65, %cst_41 {dimension_numbers = #tpu.dot_dimension_numbers<[1], [0], [0], [1], [0, 0, 1, 1], [], []>} : vector<57x80xbf16>, vector<80x32xbf16>, vector<57x32xf32> -> vector<57x32xf32>
    %67 = arith.addf %61, %66 : vector<57x32xf32>
    %68 = tpu.iota {dimensions = array<i32: 0>} : vector<8x57xi32>
    %69 = tpu.iota {dimensions = array<i32: 1>} : vector<8x57xi32>
    %c8_i32 = arith.constant 8 : i32
    %70 = vector.broadcast %c8_i32 : i32 to vector<8x57xi32>
    %71 = arith.muli %68, %70 : vector<8x57xi32>
    %72 = arith.cmpi eq, %69, %71 : vector<8x57xi32>
    %73 = arith.extui %72 : vector<8x57xi1> to vector<8x57xi32>
    %74 = arith.sitofp %73 : vector<8x57xi32> to vector<8x57xf32>
    %cst_42 = arith.constant dense<0.000000e+00> : vector<8x32xf32>
    %75 = tpu.matmul %74, %67, %cst_42 {dimension_numbers = #tpu.dot_dimension_numbers<[1], [0], [0], [1], [0, 0, 1, 1], [], []>} : vector<8x57xf32>, vector<57x32xf32>, vector<8x32xf32> -> vector<8x32xf32>
    %c0_43 = arith.constant 0 : index
    %c0_44 = arith.constant 0 : index
    %76 = vector.load %arg7[%c0_43, %c0_44] : memref<1x32xf32, #tpu.memory_space<vmem>>, vector<1x32xf32>
    %77 = vector.broadcast %76 : vector<1x32xf32> to vector<8x32xf32>
    %78 = arith.addf %75, %77 : vector<8x32xf32>
    %cst_45 = arith.constant 0.000000e+00 : f32
    %79 = vector.broadcast %cst_45 : f32 to vector<8x32xf32>
    %80 = arith.maximumf %78, %79 : vector<8x32xf32>
    %81 = arith.truncf %80 : vector<8x32xf32> to vector<8x32xbf16>
    %c0_46 = arith.constant 0 : index
    %c0_47 = arith.constant 0 : index
    %82 = vector.load %arg8[%c0_46, %c0_47] : memref<32x128xbf16, #tpu.memory_space<vmem>>, vector<32x128xbf16>
    %cst_48 = arith.constant dense<0.000000e+00> : vector<8x128xf32>
    %83 = tpu.matmul %81, %82, %cst_48 {dimension_numbers = #tpu.dot_dimension_numbers<[1], [0], [0], [1], [0, 0, 1, 1], [], []>} : vector<8x32xbf16>, vector<32x128xbf16>, vector<8x128xf32> -> vector<8x128xf32>
    %c0_49 = arith.constant 0 : index
    %c0_50 = arith.constant 0 : index
    %84 = vector.load %arg9[%c0_49, %c0_50] : memref<1x128xf32, #tpu.memory_space<vmem>>, vector<1x128xf32>
    %85 = vector.broadcast %84 : vector<1x128xf32> to vector<8x128xf32>
    %86 = arith.addf %83, %85 : vector<8x128xf32>
    %c0_51 = arith.constant 0 : index
    %c0_52 = arith.constant 0 : index
    %87 = vector.load %arg10[%c0_51, %c0_52] : memref<8x128xf32, #tpu.memory_space<vmem>>, vector<8x128xf32>
    tpu.vector_store %arg10[%c0_51, %c0_52], %86 {strides = array<i32>} : memref<8x128xf32, #tpu.memory_space<vmem>>, vector<8x128xf32>,
    return
  }
  func.func @transform_0(%arg0: i32) -> (i32, i32) {
    %c0_i32 = arith.constant 0 : i32
    %c0_i32_0 = arith.constant 0 : i32
    return %arg0, %c0_i32 : i32, i32
  }
  func.func @transform_1(%arg0: i32) -> (i32, i32, i32) {
    %c0_i32 = arith.constant 0 : i32
    %c0_i32_0 = arith.constant 0 : i32
    %c0_i32_1 = arith.constant 0 : i32
    %c0_i32_2 = arith.constant 0 : i32
    return %c0_i32, %c0_i32_0, %c0_i32_1 : i32, i32, i32
  }
  func.func @transform_2(%arg0: i32) -> (i32, i32) {
    %c0_i32 = arith.constant 0 : i32
    %c0_i32_0 = arith.constant 0 : i32
    %c0_i32_1 = arith.constant 0 : i32
    return %c0_i32, %c0_i32_0 : i32, i32
  }
  func.func @transform_3(%arg0: i32) -> (i32, i32, i32) {
    %c0_i32 = arith.constant 0 : i32
    %c0_i32_0 = arith.constant 0 : i32
    %c0_i32_1 = arith.constant 0 : i32
    %c0_i32_2 = arith.constant 0 : i32
    return %c0_i32, %c0_i32_0, %c0_i32_1 : i32, i32, i32
  }
  func.func @transform_4(%arg0: i32) -> (i32, i32) {
    %c0_i32 = arith.constant 0 : i32
    %c0_i32_0 = arith.constant 0 : i32
    %c0_i32_1 = arith.constant 0 : i32
    return %c0_i32, %c0_i32_0 : i32, i32
  }
  func.func @transform_5(%arg0: i32) -> (i32, i32, i32) {
    %c0_i32 = arith.constant 0 : i32
    %c0_i32_0 = arith.constant 0 : i32
    %c0_i32_1 = arith.constant 0 : i32
    %c0_i32_2 = arith.constant 0 : i32
    return %c0_i32, %c0_i32_0, %c0_i32_1 : i32, i32, i32
  }
  func.func @transform_6(%arg0: i32) -> (i32, i32) {
    %c0_i32 = arith.constant 0 : i32
    %c0_i32_0 = arith.constant 0 : i32
    %c0_i32_1 = arith.constant 0 : i32
    return %c0_i32, %c0_i32_0 : i32, i32
  }
  func.func @transform_7(%arg0: i32) -> (i32, i32) {
    %c0_i32 = arith.constant 0 : i32
    %c0_i32_0 = arith.constant 0 : i32
    %c0_i32_1 = arith.constant 0 : i32
    return %c0_i32, %c0_i32_0 : i32, i32
  }
  func.func @transform_8(%arg0: i32) -> (i32, i32) {
    %c0_i32 = arith.constant 0 : i32
    %c0_i32_0 = arith.constant 0 : i32
    %c0_i32_1 = arith.constant 0 : i32
    return %c0_i32, %c0_i32_0 : i32, i32
  }
  func.func @transform_9(%arg0: i32) -> (i32, i32) {
    %c0_i32 = arith.constant 0 : i32
    %c0_i32_0 = arith.constant 0 : i32
    return %arg0, %c0_i32 : i32, i32
  }
}

module attributes {stable_mosaic.version = 11 : i64} {
  func.func @_fused_kernel(%arg0: i32, %arg1: memref<64x128xf32, #tpu.memory_space<vmem>>, %arg2: memref<2x128x56xbf16, #tpu.memory_space<vmem>>, %arg3: memref<1x56xf32, #tpu.memory_space<vmem>>, %arg4: memref<3x56x80xbf16, #tpu.memory_space<vmem>>, %arg5: memref<1x80xf32, #tpu.memory_space<vmem>>, %arg6: memref<5x80x32xbf16, #tpu.memory_space<vmem>>, %arg7: memref<1x32xf32, #tpu.memory_space<vmem>>, %arg8: memref<32x128xbf16, #tpu.memory_space<vmem>>, %arg9: memref<1x128xf32, #tpu.memory_space<vmem>>, %arg10: memref<8x128xf32, #tpu.memory_space<vmem>>) attributes {dimension_semantics = [#tpu.dimension_semantics<parallel>], iteration_bounds = array<i64: 1>, scalar_prefetch = 0 : i64, scratch_operands = 0 : i64, tpu.core_type = #tpu.core_type<tc>, window_params = [{transform_indices = @transform_0, window_bounds = array<i64: 64, 128>}, {pipeline_mode = #tpu.pipeline_mode<synchronous>, transform_indices = @transform_1, window_bounds = array<i64: 2, 128, 56>}, {pipeline_mode = #tpu.pipeline_mode<synchronous>, transform_indices = @transform_2, window_bounds = array<i64: 1, 56>}, {pipeline_mode = #tpu.pipeline_mode<synchronous>, transform_indices = @transform_3, window_bounds = array<i64: 3, 56, 80>}, {pipeline_mode = #tpu.pipeline_mode<synchronous>, transform_indices = @transform_4, window_bounds = array<i64: 1, 80>}, {pipeline_mode = #tpu.pipeline_mode<synchronous>, transform_indices = @transform_5, window_bounds = array<i64: 5, 80, 32>}, {pipeline_mode = #tpu.pipeline_mode<synchronous>, transform_indices = @transform_6, window_bounds = array<i64: 1, 32>}, {pipeline_mode = #tpu.pipeline_mode<synchronous>, transform_indices = @transform_7, window_bounds = array<i64: 32, 128>}, {pipeline_mode = #tpu.pipeline_mode<synchronous>, transform_indices = @transform_8, window_bounds = array<i64: 1, 128>}, {transform_indices = @transform_9, window_bounds = array<i64: 8, 128>}]} {
    %c0 = arith.constant 0 : index
    %c0_0 = arith.constant 0 : index
    %0 = vector.load %arg1[%c0, %c0_0] : memref<64x128xf32, #tpu.memory_space<vmem>>, vector<64x128xf32>
    %1 = vector.extract_strided_slice %0 {offsets = [0, 0], sizes = [63, 128], strides = [1, 1]} : vector<64x128xf32> to vector<63x128xf32>
    %2 = arith.truncf %1 : vector<63x128xf32> to vector<63x128xbf16>
    %c0_1 = arith.constant 0 : index
    %c0_2 = arith.constant 0 : index
    %c0_3 = arith.constant 0 : index
    %3 = vector.load %arg2[%c0_1, %c0_2, %c0_3] : memref<2x128x56xbf16, #tpu.memory_space<vmem>>, vector<1x128x56xbf16>
    %4 = vector.shape_cast %3 : vector<1x128x56xbf16> to vector<128x56xbf16>
    %cst = arith.constant dense<0.000000e+00> : vector<63x56xf32>
    %5 = tpu.matmul %2, %4, %cst {dimension_numbers = #tpu.dot_dimension_numbers<[1], [0], [0], [1], [0, 0, 1, 1], [], []>} : vector<63x128xbf16>, vector<128x56xbf16>, vector<63x56xf32> -> vector<63x56xf32>
    %6 = vector.extract_strided_slice %0 {offsets = [1, 0], sizes = [63, 128], strides = [1, 1]} : vector<64x128xf32> to vector<63x128xf32>
    %7 = arith.truncf %6 : vector<63x128xf32> to vector<63x128xbf16>
    %c1 = arith.constant 1 : index
    %c0_4 = arith.constant 0 : index
    %c0_5 = arith.constant 0 : index
    %8 = vector.load %arg2[%c1, %c0_4, %c0_5] : memref<2x128x56xbf16, #tpu.memory_space<vmem>>, vector<1x128x56xbf16>
    %9 = vector.shape_cast %8 : vector<1x128x56xbf16> to vector<128x56xbf16>
    %cst_6 = arith.constant dense<0.000000e+00> : vector<63x56xf32>
    %10 = tpu.matmul %7, %9, %cst_6 {dimension_numbers = #tpu.dot_dimension_numbers<[1], [0], [0], [1], [0, 0, 1, 1], [], []>} : vector<63x128xbf16>, vector<128x56xbf16>, vector<63x56xf32> -> vector<63x56xf32>
    %11 = arith.addf %5, %10 : vector<63x56xf32>
    %c0_7 = arith.constant 0 : index
    %c0_8 = arith.constant 0 : index
    %12 = vector.load %arg3[%c0_7, %c0_8] : memref<1x56xf32, #tpu.memory_space<vmem>>, vector<1x56xf32>
    %13 = vector.broadcast %12 : vector<1x56xf32> to vector<63x56xf32>
    %14 = arith.addf %11, %13 : vector<63x56xf32>
    %cst_9 = arith.constant 0.000000e+00 : f32
    %15 = vector.broadcast %cst_9 : f32 to vector<63x56xf32>
    %16 = arith.maximumf %14, %15 : vector<63x56xf32>
    %17 = vector.extract_strided_slice %16 {offsets = [0, 0], sizes = [61, 56], strides = [1, 1]} : vector<63x56xf32> to vector<61x56xf32>
    %18 = arith.truncf %17 : vector<61x56xf32> to vector<61x56xbf16>
    %c0_10 = arith.constant 0 : index
    %c0_11 = arith.constant 0 : index
    %c0_12 = arith.constant 0 : index
    %19 = vector.load %arg4[%c0_10, %c0_11, %c0_12] : memref<3x56x80xbf16, #tpu.memory_space<vmem>>, vector<1x56x80xbf16>
    %20 = vector.shape_cast %19 : vector<1x56x80xbf16> to vector<56x80xbf16>
    %cst_13 = arith.constant dense<0.000000e+00> : vector<61x80xf32>
    %21 = tpu.matmul %18, %20, %cst_13 {dimension_numbers = #tpu.dot_dimension_numbers<[1], [0], [0], [1], [0, 0, 1, 1], [], []>} : vector<61x56xbf16>, vector<56x80xbf16>, vector<61x80xf32> -> vector<61x80xf32>
    %22 = vector.extract_strided_slice %16 {offsets = [1, 0], sizes = [61, 56], strides = [1, 1]} : vector<63x56xf32> to vector<61x56xf32>
    %23 = arith.truncf %22 : vector<61x56xf32> to vector<61x56xbf16>
    %c1_14 = arith.constant 1 : index
    %c0_15 = arith.constant 0 : index
    %c0_16 = arith.constant 0 : index
    %24 = vector.load %arg4[%c1_14, %c0_15, %c0_16] : memref<3x56x80xbf16, #tpu.memory_space<vmem>>, vector<1x56x80xbf16>
    %25 = vector.shape_cast %24 : vector<1x56x80xbf16> to vector<56x80xbf16>
    %cst_17 = arith.constant dense<0.000000e+00> : vector<61x80xf32>
    %26 = tpu.matmul %23, %25, %cst_17 {dimension_numbers = #tpu.dot_dimension_numbers<[1], [0], [0], [1], [0, 0, 1, 1], [], []>} : vector<61x56xbf16>, vector<56x80xbf16>, vector<61x80xf32> -> vector<61x80xf32>
    %27 = arith.addf %21, %26 : vector<61x80xf32>
    %28 = vector.extract_strided_slice %16 {offsets = [2, 0], sizes = [61, 56], strides = [1, 1]} : vector<63x56xf32> to vector<61x56xf32>
    %29 = arith.truncf %28 : vector<61x56xf32> to vector<61x56xbf16>
    %c2 = arith.constant 2 : index
    %c0_18 = arith.constant 0 : index
    %c0_19 = arith.constant 0 : index
    %30 = vector.load %arg4[%c2, %c0_18, %c0_19] : memref<3x56x80xbf16, #tpu.memory_space<vmem>>, vector<1x56x80xbf16>
    %31 = vector.shape_cast %30 : vector<1x56x80xbf16> to vector<56x80xbf16>
    %cst_20 = arith.constant dense<0.000000e+00> : vector<61x80xf32>
    %32 = tpu.matmul %29, %31, %cst_20 {dimension_numbers = #tpu.dot_dimension_numbers<[1], [0], [0], [1], [0, 0, 1, 1], [], []>} : vector<61x56xbf16>, vector<56x80xbf16>, vector<61x80xf32> -> vector<61x80xf32>
    %33 = arith.addf %27, %32 : vector<61x80xf32>
    %c0_21 = arith.constant 0 : index
    %c0_22 = arith.constant 0 : index
    %34 = vector.load %arg5[%c0_21, %c0_22] : memref<1x80xf32, #tpu.memory_space<vmem>>, vector<1x80xf32>
    %35 = vector.broadcast %34 : vector<1x80xf32> to vector<61x80xf32>
    %36 = arith.addf %33, %35 : vector<61x80xf32>
    %cst_23 = arith.constant 0.000000e+00 : f32
    %37 = vector.broadcast %cst_23 : f32 to vector<61x80xf32>
    %38 = arith.maximumf %36, %37 : vector<61x80xf32>
    %39 = vector.extract_strided_slice %38 {offsets = [0, 0], sizes = [57, 80], strides = [1, 1]} : vector<61x80xf32> to vector<57x80xf32>
    %40 = arith.truncf %39 : vector<57x80xf32> to vector<57x80xbf16>
    %c0_24 = arith.constant 0 : index
    %c0_25 = arith.constant 0 : index
    %c0_26 = arith.constant 0 : index
    %41 = vector.load %arg6[%c0_24, %c0_25, %c0_26] : memref<5x80x32xbf16, #tpu.memory_space<vmem>>, vector<1x80x32xbf16>
    %42 = vector.shape_cast %41 : vector<1x80x32xbf16> to vector<80x32xbf16>
    %cst_27 = arith.constant dense<0.000000e+00> : vector<57x32xf32>
    %43 = tpu.matmul %40, %42, %cst_27 {dimension_numbers = #tpu.dot_dimension_numbers<[1], [0], [0], [1], [0, 0, 1, 1], [], []>} : vector<57x80xbf16>, vector<80x32xbf16>, vector<57x32xf32> -> vector<57x32xf32>
    %44 = vector.extract_strided_slice %38 {offsets = [1, 0], sizes = [57, 80], strides = [1, 1]} : vector<61x80xf32> to vector<57x80xf32>
    %45 = arith.truncf %44 : vector<57x80xf32> to vector<57x80xbf16>
    %c1_28 = arith.constant 1 : index
    %c0_29 = arith.constant 0 : index
    %c0_30 = arith.constant 0 : index
    %46 = vector.load %arg6[%c1_28, %c0_29, %c0_30] : memref<5x80x32xbf16, #tpu.memory_space<vmem>>, vector<1x80x32xbf16>
    %47 = vector.shape_cast %46 : vector<1x80x32xbf16> to vector<80x32xbf16>
    %cst_31 = arith.constant dense<0.000000e+00> : vector<57x32xf32>
    %48 = tpu.matmul %45, %47, %cst_31 {dimension_numbers = #tpu.dot_dimension_numbers<[1], [0], [0], [1], [0, 0, 1, 1], [], []>} : vector<57x80xbf16>, vector<80x32xbf16>, vector<57x32xf32> -> vector<57x32xf32>
    %49 = arith.addf %43, %48 : vector<57x32xf32>
    %50 = vector.extract_strided_slice %38 {offsets = [2, 0], sizes = [57, 80], strides = [1, 1]} : vector<61x80xf32> to vector<57x80xf32>
    %51 = arith.truncf %50 : vector<57x80xf32> to vector<57x80xbf16>
    %c2_32 = arith.constant 2 : index
    %c0_33 = arith.constant 0 : index
    %c0_34 = arith.constant 0 : index
    %52 = vector.load %arg6[%c2_32, %c0_33, %c0_34] : memref<5x80x32xbf16, #tpu.memory_space<vmem>>, vector<1x80x32xbf16>
    %53 = vector.shape_cast %52 : vector<1x80x32xbf16> to vector<80x32xbf16>
    %cst_35 = arith.constant dense<0.000000e+00> : vector<57x32xf32>
    %54 = tpu.matmul %51, %53, %cst_35 {dimension_numbers = #tpu.dot_dimension_numbers<[1], [0], [0], [1], [0, 0, 1, 1], [], []>} : vector<57x80xbf16>, vector<80x32xbf16>, vector<57x32xf32> -> vector<57x32xf32>
    %55 = arith.addf %49, %54 : vector<57x32xf32>
    %56 = vector.extract_strided_slice %38 {offsets = [3, 0], sizes = [57, 80], strides = [1, 1]} : vector<61x80xf32> to vector<57x80xf32>
    %57 = arith.truncf %56 : vector<57x80xf32> to vector<57x80xbf16>
    %c3 = arith.constant 3 : index
    %c0_36 = arith.constant 0 : index
    %c0_37 = arith.constant 0 : index
    %58 = vector.load %arg6[%c3, %c0_36, %c0_37] : memref<5x80x32xbf16, #tpu.memory_space<vmem>>, vector<1x80x32xbf16>
    %59 = vector.shape_cast %58 : vector<1x80x32xbf16> to vector<80x32xbf16>
    %cst_38 = arith.constant dense<0.000000e+00> : vector<57x32xf32>
    %60 = tpu.matmul %57, %59, %cst_38 {dimension_numbers = #tpu.dot_dimension_numbers<[1], [0], [0], [1], [0, 0, 1, 1], [], []>} : vector<57x80xbf16>, vector<80x32xbf16>, vector<57x32xf32> -> vector<57x32xf32>
    %61 = arith.addf %55, %60 : vector<57x32xf32>
    %62 = vector.extract_strided_slice %38 {offsets = [4, 0], sizes = [57, 80], strides = [1, 1]} : vector<61x80xf32> to vector<57x80xf32>
    %63 = arith.truncf %62 : vector<57x80xf32> to vector<57x80xbf16>
    %c4 = arith.constant 4 : index
    %c0_39 = arith.constant 0 : index
    %c0_40 = arith.constant 0 : index
    %64 = vector.load %arg6[%c4, %c0_39, %c0_40] : memref<5x80x32xbf16, #tpu.memory_space<vmem>>, vector<1x80x32xbf16>
    %65 = vector.shape_cast %64 : vector<1x80x32xbf16> to vector<80x32xbf16>
    %cst_41 = arith.constant dense<0.000000e+00> : vector<57x32xf32>
    %66 = tpu.matmul %63, %65, %cst_41 {dimension_numbers = #tpu.dot_dimension_numbers<[1], [0], [0], [1], [0, 0, 1, 1], [], []>} : vector<57x80xbf16>, vector<80x32xbf16>, vector<57x32xf32> -> vector<57x32xf32>
    %67 = arith.addf %61, %66 : vector<57x32xf32>
    %68 = tpu.iota {dimensions = array<i32: 0>} : vector<8x57xi32>
    %69 = tpu.iota {dimensions = array<i32: 1>} : vector<8x57xi32>
    %c8_i32 = arith.constant 8 : i32
    %70 = vector.broadcast %c8_i32 : i32 to vector<8x57xi32>
    %71 = arith.muli %68, %70 : vector<8x57xi32>
    %72 = arith.cmpi eq, %69, %71 : vector<8x57xi32>
    %73 = arith.extui %72 : vector<8x57xi1> to vector<8x57xi32>
    %74 = arith.sitofp %73 : vector<8x57xi32> to vector<8x57xf32>
    %cst_42 = arith.constant dense<0.000000e+00> : vector<8x32xf32>
    %75 = tpu.matmul %74, %67, %cst_42 {dimension_numbers = #tpu.dot_dimension_numbers<[1], [0], [0], [1], [0, 0, 1, 1], [], []>} : vector<8x57xf32>, vector<57x32xf32>, vector<8x32xf32> -> vector<8x32xf32>
    %c0_43 = arith.constant 0 : index
    %c0_44 = arith.constant 0 : index
    %76 = vector.load %arg7[%c0_43, %c0_44] : memref<1x32xf32, #tpu.memory_space<vmem>>, vector<1x32xf32>
    %77 = vector.broadcast %76 : vector<1x32xf32> to vector<8x32xf32>
    %78 = arith.addf %75, %77 : vector<8x32xf32>
    %cst_45 = arith.constant 0.000000e+00 : f32
    %79 = vector.broadcast %cst_45 : f32 to vector<8x32xf32>
    %80 = arith.maximumf %78, %79 : vector<8x32xf32>
    %81 = arith.truncf %80 : vector<8x32xf32> to vector<8x32xbf16>
    %c0_46 = arith.constant 0 : index
    %c0_47 = arith.constant 0 : index
    %82 = vector.load %arg8[%c0_46, %c0_47] : memref<32x128xbf16, #tpu.memory_space<vmem>>, vector<32x128xbf16>
    %cst_48 = arith.constant dense<0.000000e+00> : vector<8x128xf32>
    %83 = tpu.matmul %81, %82, %cst_48 {dimension_numbers = #tpu.dot_dimension_numbers<[1], [0], [0], [1], [0, 0, 1, 1], [], []>} : vector<8x32xbf16>, vector<32x128xbf16>, vector<8x128xf32> -> vector<8x128xf32>
    %c0_49 = arith.constant 0 : index
    %c0_50 = arith.constant 0 : index
    %84 = vector.load %arg9[%c0_49, %c0_50] : memref<1x128xf32, #tpu.memory_space<vmem>>, vector<1x128xf32>
    %85 = vector.broadcast %84 : vector<1x128xf32> to vector<8x128xf32>
    %86 = arith.addf %83, %85 : vector<8x128xf32>
    %c0_51 = arith.constant 0 : index
    %c0_52 = arith.constant 0 : index
    %87 = vector.load %arg10[%c0_51, %c0_52] : memref<8x128xf32, #tpu.memory_space<vmem>>, vector<8x128xf32>
    tpu.vector_store %arg10[%c0_51, %c0_52], %86 {strides = array<i32>} : memref<8x128xf32, #tpu.memory_space<vmem>>, vector<8x128xf32>,
    return
  }
  func.func @transform_0(%arg0: i32) -> (i32, i32) {
    %c0_i32 = arith.constant 0 : i32
    %c0_i32_0 = arith.constant 0 : i32
    return %arg0, %c0_i32 : i32, i32
  }
  func.func @transform_1(%arg0: i32) -> (i32, i32, i32) {
    %c0_i32 = arith.constant 0 : i32
    %c0_i32_0 = arith.constant 0 : i32
    %c0_i32_1 = arith.constant 0 : i32
    %c0_i32_2 = arith.constant 0 : i32
    return %c0_i32, %c0_i32_0, %c0_i32_1 : i32, i32, i32
  }
  func.func @transform_2(%arg0: i32) -> (i32, i32) {
    %c0_i32 = arith.constant 0 : i32
    %c0_i32_0 = arith.constant 0 : i32
    %c0_i32_1 = arith.constant 0 : i32
    return %c0_i32, %c0_i32_0 : i32, i32
  }
  func.func @transform_3(%arg0: i32) -> (i32, i32, i32) {
    %c0_i32 = arith.constant 0 : i32
    %c0_i32_0 = arith.constant 0 : i32
    %c0_i32_1 = arith.constant 0 : i32
    %c0_i32_2 = arith.constant 0 : i32
    return %c0_i32, %c0_i32_0, %c0_i32_1 : i32, i32, i32
  }
  func.func @transform_4(%arg0: i32) -> (i32, i32) {
    %c0_i32 = arith.constant 0 : i32
    %c0_i32_0 = arith.constant 0 : i32
    %c0_i32_1 = arith.constant 0 : i32
    return %c0_i32, %c0_i32_0 : i32, i32
  }
  func.func @transform_5(%arg0: i32) -> (i32, i32, i32) {
    %c0_i32 = arith.constant 0 : i32
    %c0_i32_0 = arith.constant 0 : i32
    %c0_i32_1 = arith.constant 0 : i32
    %c0_i32_2 = arith.constant 0 : i32
    return %c0_i32, %c0_i32_0, %c0_i32_1 : i32, i32, i32
  }
  func.func @transform_6(%arg0: i32) -> (i32, i32) {
    %c0_i32 = arith.constant 0 : i32
    %c0_i32_0 = arith.constant 0 : i32
    %c0_i32_1 = arith.constant 0 : i32
    return %c0_i32, %c0_i32_0 : i32, i32
  }
  func.func @transform_7(%arg0: i32) -> (i32, i32) {
    %c0_i32 = arith.constant 0 : i32
    %c0_i32_0 = arith.constant 0 : i32
    %c0_i32_1 = arith.constant 0 : i32
    return %c0_i32, %c0_i32_0 : i32, i32
  }
  func.func @transform_8(%arg0: i32) -> (i32, i32) {
    %c0_i32 = arith.constant 0 : i32
    %c0_i32_0 = arith.constant 0 : i32
    %c0_i32_1 = arith.constant 0 : i32
    return %c0_i32, %c0_i32_0 : i32, i32
  }
  func.func @transform_9(%arg0: i32) -> (i32, i32) {
    %c0_i32 = arith.constant 0 : i32
    %c0_i32_0 = arith.constant 0 : i32
    return %arg0, %c0_i32 : i32, i32
  }
}

</mosaic_0001>

<llo_original>
// kernel: a2c_fused_forward.1
$region0: #{a2c_fused_forward.1}
  #allocation0 [shape = 'u32[]', space=smem, size = 0x4, offset = 0x4, fixed_abs, tag = 'smem constant byte address 0x4 - core index']
  #allocation1 [shape = 'u32[144,128]{1,0:T(1,128)}', space=vmem, size = 0x12000, scoped, tag = 'internal scratch']
  %s0 = inlined_call_operand.vmem [shape: f32[64,128], index: 0, kind: input, shape index: {}]
  %s1 = inlined_call_operand.vmem [shape: bf16[2,128,56], index: 1, kind: input, shape index: {}]
  %s2 = inlined_call_operand.vmem [shape: f32[1,56], index: 2, kind: input, shape index: {}]
  %s3 = inlined_call_operand.vmem [shape: bf16[3,56,80], index: 3, kind: input, shape index: {}]
  %s4 = inlined_call_operand.vmem [shape: f32[1,80], index: 4, kind: input, shape index: {}]
  %s5 = inlined_call_operand.vmem [shape: bf16[5,80,32], index: 5, kind: input, shape index: {}]
  %s6 = inlined_call_operand.vmem [shape: f32[1,32], index: 6, kind: input, shape index: {}]
  %s7 = inlined_call_operand.vmem [shape: bf16[32,128], index: 7, kind: input, shape index: {}]
  %s8 = inlined_call_operand.vmem [shape: f32[1,128], index: 8, kind: input, shape index: {}]
  %s9 = inlined_call_operand.vmem [shape: f32[8,128], index: 9, kind: output, shape index: {}]
  %s10 = sld [smem:[#allocation0]]
  $region46: #{a2c_fused_forward.1} parent=0
    _
  %s12 = ssub.s32 1, %s10
  %s13 = scalar_select 0, %s12, %s10
  // Predicated region
  $region2: #{a2c_fused_forward.1} parent=0 // pred_check
    _
  $region3: #{a2c_fused_forward.1} parent=0 // pred_check_branch
    %15 = sbr.rel (0) target = $region5
  $region4: #{a2c_fused_forward.1} parent=0 // pred_region
    _
  $region5: #{a2c_fused_forward.1} parent=0 // pred_fallthru
    _
  // Predicated region
  $region6: #{a2c_fused_forward.1} parent=0 // pred_check
    _
  $region7: #{a2c_fused_forward.1} parent=0 // pred_check_branch
    %17 = sbr.rel (0) target = $region9
  $region8: #{a2c_fused_forward.1} parent=0 // pred_region
    _
  $region9: #{a2c_fused_forward.1} parent=0 // pred_fallthru
    _
  // Predicated region
  $region10: #{a2c_fused_forward.1} parent=0 // pred_check
    _
  $region11: #{a2c_fused_forward.1} parent=0 // pred_check_branch
    %19 = sbr.rel (0) target = $region13
  $region12: #{a2c_fused_forward.1} parent=0 // pred_region
    _
  $region13: #{a2c_fused_forward.1} parent=0 // pred_fallthru
    _
  // Predicated region
  $region14: #{a2c_fused_forward.1} parent=0 // pred_check
    _
  $region15: #{a2c_fused_forward.1} parent=0 // pred_check_branch
    %21 = sbr.rel (0) target = $region17
  $region16: #{a2c_fused_forward.1} parent=0 // pred_region
    _
  $region17: #{a2c_fused_forward.1} parent=0 // pred_fallthru
    _
  // Predicated region
  $region18: #{a2c_fused_forward.1} parent=0 // pred_check
    _
  $region19: #{a2c_fused_forward.1} parent=0 // pred_check_branch
    %23 = sbr.rel (0) target = $region21
  $region20: #{a2c_fused_forward.1} parent=0 // pred_region
    _
  $region21: #{a2c_fused_forward.1} parent=0 // pred_fallthru
    _
  // Predicated region
  $region22: #{a2c_fused_forward.1} parent=0 // pred_check
    _
  $region23: #{a2c_fused_forward.1} parent=0 // pred_check_branch
    %25 = sbr.rel (0) target = $region25
  $region24: #{a2c_fused_forward.1} parent=0 // pred_region
    _
  $region25: #{a2c_fused_forward.1} parent=0 // pred_fallthru
    _
  // Predicated region
  $region26: #{a2c_fused_forward.1} parent=0 // pred_check
    _
  $region27: #{a2c_fused_forward.1} parent=0 // pred_check_branch
    %27 = sbr.rel (0) target = $region29
  $region28: #{a2c_fused_forward.1} parent=0 // pred_region
    _
  $region29: #{a2c_fused_forward.1} parent=0 // pred_fallthru
    _
  // Predicated region
  $region30: #{a2c_fused_forward.1} parent=0 // pred_check
    _
  $region31: #{a2c_fused_forward.1} parent=0 // pred_check_branch
    %29 = sbr.rel (0) target = $region33
  $region32: #{a2c_fused_forward.1} parent=0 // pred_region
    _
  $region33: #{a2c_fused_forward.1} parent=0 // pred_fallthru
    _
  // Predicated region
  $region34: #{a2c_fused_forward.1} parent=0 // pred_check
    _
  $region35: #{a2c_fused_forward.1} parent=0 // pred_check_branch
    %31 = sbr.rel (0) target = $region37
  $region36: #{a2c_fused_forward.1} parent=0 // pred_region
    _
  $region37: #{a2c_fused_forward.1} parent=0 // pred_fallthru
    _
  %v33 = vld [vmem:[%s0] sm:$0xff]
  %v34 = vld [vmem:[%s0 + $0x8] sm:$0xff]
  %v35 = vld [vmem:[%s0 + $0x10] sm:$0xff]
  %v36 = vld [vmem:[%s0 + $0x18] sm:$0xff]
  %v37 = vld [vmem:[%s0 + $0x20] sm:$0xff]
  %v38 = vld [vmem:[%s0 + $0x28] sm:$0xff]
  %v39 = vld [vmem:[%s0 + $0x30] sm:$0xff]
  %v40 = vld [vmem:[%s0 + $0x38] sm:$0xff]
  %v41 = vpack.c.bf16 %v34, %v33
  %v42 = vpack.c.bf16 %v36, %v35
  %v43 = vpack.c.bf16 %v38, %v37
  %v44 = vpack.c.bf16 %v40, %v39
  %v45 = vld [vmem:[%s1] sm:$0xf]
  %v46 = vld [vmem:[%s1 + $0x4] sm:$0xf]
  %v47 = vld [vmem:[%s1 + $0x8] sm:$0xf]
  %v48 = vld [vmem:[%s1 + $0xc] sm:$0xf]
  %v49 = vld [vmem:[%s1 + $0x10] sm:$0xf]
  %v50 = vld [vmem:[%s1 + $0x14] sm:$0xf]
  %v51 = vld [vmem:[%s1 + $0x18] sm:$0xf]
  %v52 = vld [vmem:[%s1 + $0x1c] sm:$0xf]
  %v53 = vld [vmem:[%s1 + $0x20] sm:$0xf]
  %v54 = vld [vmem:[%s1 + $0x24] sm:$0xf]
  %v55 = vld [vmem:[%s1 + $0x28] sm:$0xf]
  %v56 = vld [vmem:[%s1 + $0x2c] sm:$0xf]
  %v57 = vld [vmem:[%s1 + $0x30] sm:$0xf]
  %v58 = vld [vmem:[%s1 + $0x34] sm:$0xf]
  %v59 = vld [vmem:[%s1 + $0x38] sm:$0xf]
  %v60 = vld [vmem:[%s1 + $0x3c] sm:$0xf]
  %s61 = scalar_lea.vmem %s1, 64
  %v62 = vld [vmem:[%s61] sm:$0xf]
  %v63 = vld [vmem:[%s61 + $0x4] sm:$0xf]
  %v64 = vld [vmem:[%s61 + $0x8] sm:$0xf]
  %v65 = vld [vmem:[%s61 + $0xc] sm:$0xf]
  %v66 = vld [vmem:[%s61 + $0x10] sm:$0xf]
  %v67 = vld [vmem:[%s61 + $0x14] sm:$0xf]
  %v68 = vld [vmem:[%s61 + $0x18] sm:$0xf]
  %v69 = vld [vmem:[%s61 + $0x1c] sm:$0xf]
  %v70 = vld [vmem:[%s61 + $0x20] sm:$0xf]
  %v71 = vld [vmem:[%s61 + $0x24] sm:$0xf]
  %v72 = vld [vmem:[%s61 + $0x28] sm:$0xf]
  %v73 = vld [vmem:[%s61 + $0x2c] sm:$0xf]
  %v74 = vld [vmem:[%s61 + $0x30] sm:$0xf]
  %v75 = vld [vmem:[%s61 + $0x34] sm:$0xf]
  %v76 = vld [vmem:[%s61 + $0x38] sm:$0xf]
  %v77 = vld [vmem:[%s61 + $0x3c] sm:$0xf]
  %vm78 = vsmask.f32 7424
  %v80 = vshrl.u32 %v41, 16
  %v82 = vshll.u32 %v41, 16
  %v84 = vrot.slane %v82, 1
  %v85 = vor.u32 %v80, %v84
  %v87 = vshll.u32 %v42, 16
  %v89 = vrot.slane %v87, 1
  %v90 = vsel %vm78, %v85, %v89
  %v91 = vshrl.u32 %v42, 16
  %v93 = vor.u32 %v91, %v89
  %v95 = vshll.u32 %v43, 16
  %v97 = vrot.slane %v95, 1
  %v98 = vsel %vm78, %v93, %v97
  %v99 = vshrl.u32 %v43, 16
  %v101 = vor.u32 %v99, %v97
  %v103 = vshll.u32 %v44, 16
  %v105 = vrot.slane %v103, 1
  %v106 = vsel %vm78, %v101, %v105
  %v107 = vshrl.u32 %v44, 16
  %v109 = vor.u32 %v107, %v105
  %v130 = vunpack.c.l.b16 %v62
  %v131 = vunpack.c.l.b16 %v63
  %v132 = vunpack.c.l.b16 %v64
  %v133 = vunpack.c.l.b16 %v65
  %v134 = vunpack.c.l.b16 %v66
  %v135 = vunpack.c.l.b16 %v67
  %v136 = vunpack.c.l.b16 %v68
  %v137 = vunpack.c.l.b16 %v69
  %v138 = vunpack.c.l.b16 %v70
  %v139 = vunpack.c.l.b16 %v71
  %v140 = vunpack.c.l.b16 %v72
  %v141 = vunpack.c.l.b16 %v73
  %v142 = vunpack.c.l.b16 %v74
  %v143 = vunpack.c.l.b16 %v75
  %v144 = vunpack.c.l.b16 %v76
  %v145 = vunpack.c.l.b16 %v77
  %v146 = vpack.c.b16 %v131, %v130
  %v147 = vpack.c.b16 %v133, %v132
  %v148 = vpack.c.b16 %v135, %v134
  %v149 = vpack.c.b16 %v137, %v136
  %v150 = vpack.c.b16 %v139, %v138
  %v151 = vpack.c.b16 %v141, %v140
  %v152 = vpack.c.b16 %v143, %v142
  %v153 = vpack.c.b16 %v145, %v144
  %162 = vmatprep.subr.bf16.mxu0 0
  %163 = vmatpush1.bf16.msra.mxu0 %v146
  %164 = vmatprep.subr.bf16.mxu0 0
  %165 = vmatpush1.bf16.msra.mxu0 %v147
  %166 = vmatprep.subr.bf16.mxu0 0
  %167 = vmatpush1.bf16.msra.mxu0 %v148
  %168 = vmatprep.subr.bf16.mxu0 0
  %169 = vmatpush1.bf16.msra.mxu0 %v149
  %170 = vmatprep.subr.bf16.mxu0 0
  %171 = vmatpush1.bf16.msra.mxu0 %v150
  %172 = vmatprep.subr.bf16.mxu0 0
  %173 = vmatpush1.bf16.msra.mxu0 %v151
  %174 = vmatprep.subr.bf16.mxu0 0
  %175 = vmatpush1.bf16.msra.mxu0 %v152
  %176 = vmatprep.subr.bf16.mxu0 0
  %177 = vmatpush1.bf16.msra.mxu0 %v153
  %178 = vmatprep.subr.bf16.mxu0 0
  %179 = vmatpush1.bf16.msra.mxu0 0
  %180 = vmatprep.subr.bf16.mxu0 0
  %181 = vmatpush1.bf16.msra.mxu0 0
  %182 = vmatprep.subr.bf16.mxu0 0
  %183 = vmatpush1.bf16.msra.mxu0 0
  %184 = vmatprep.subr.bf16.mxu0 0
  %185 = vmatpush1.bf16.msra.mxu0 0
  %186 = vmatprep.subr.bf16.mxu0 0
  %187 = vmatpush1.bf16.msra.mxu0 0
  %188 = vmatprep.subr.bf16.mxu0 0
  %189 = vmatpush1.bf16.msra.mxu0 0
  %190 = vmatprep.subr.bf16.mxu0 0
  %191 = vmatpush1.bf16.msra.mxu0 0
  %192 = vmatprep.subr.bf16.mxu0 0
  %193 = vmatpush1.bf16.msra.mxu0 0
  %194 = vmatprep.mubr.bf16.mxu0 0
  %195 = vmatmul.mubr.bf16.gmra.mrb[0].mxu0 %v90
  %v196 = vpop.f32.mrb[0].mxu0
  %v197 = vadd.f32 0.0, %v196
  %v198 = vpop.f32.mrb[0].mxu0
  %v199 = vpop.f32.mrb[0].mxu0
  %v200 = vadd.f32 0.0, %v199
  %v201 = vpop.f32.mrb[0].mxu0
  %202 = vmatprep.mubr.bf16.mxu0 0
  %203 = vmatmul.mubr.bf16.gmra.mrb[0].mxu0 %v98
  %v204 = vpop.f32.mrb[0].mxu0
  %v205 = vadd.f32 0.0, %v204
  %v206 = vpop.f32.mrb[0].mxu0
  %v207 = vpop.f32.mrb[0].mxu0
  %v208 = vadd.f32 0.0, %v207
  %v209 = vpop.f32.mrb[0].mxu0
  %210 = vmatprep.mubr.bf16.mxu0 0
  %211 = vmatmul.mubr.bf16.gmra.mrb[0].mxu0 %v106
  %v212 = vpop.f32.mrb[0].mxu0
  %v213 = vadd.f32 0.0, %v212
  %v214 = vpop.f32.mrb[0].mxu0
  %v215 = vpop.f32.mrb[0].mxu0
  %v216 = vadd.f32 0.0, %v215
  %v217 = vpop.f32.mrb[0].mxu0
  %218 = vmatprep.mubr.bf16.mxu0 0
  %219 = vmatmul.mubr.bf16.gmra.mrb[0].mxu0 %v109
  %v220 = vpop.f32.mrb[0].mxu0
  %v221 = vadd.f32 0.0, %v220
  %v222 = vpop.f32.mrb[0].mxu0
  %v223 = vpop.f32.mrb[0].mxu0
  %v224 = vadd.f32 0.0, %v223
  %v225 = vpop.f32.mrb[0].mxu0
  %226 = vdwg.mxu0
  %v243 = vunpack.c.l.b16 %v45
  %v244 = vunpack.c.l.b16 %v46
  %v245 = vunpack.c.l.b16 %v47
  %v246 = vunpack.c.l.b16 %v48
  %v247 = vunpack.c.l.b16 %v49
  %v248 = vunpack.c.l.b16 %v50
  %v249 = vunpack.c.l.b16 %v51
  %v250 = vunpack.c.l.b16 %v52
  %v251 = vunpack.c.l.b16 %v53
  %v252 = vunpack.c.l.b16 %v54
  %v253 = vunpack.c.l.b16 %v55
  %v254 = vunpack.c.l.b16 %v56
  %v255 = vunpack.c.l.b16 %v57
  %v256 = vunpack.c.l.b16 %v58
  %v257 = vunpack.c.l.b16 %v59
  %v258 = vunpack.c.l.b16 %v60
  %v259 = vpack.c.b16 %v244, %v243
  %v260 = vpack.c.b16 %v246, %v245
  %v261 = vpack.c.b16 %v248, %v247
  %v262 = vpack.c.b16 %v250, %v249
  %v263 = vpack.c.b16 %v252, %v251
  %v264 = vpack.c.b16 %v254, %v253
  %v265 = vpack.c.b16 %v256, %v255
  %v266 = vpack.c.b16 %v258, %v257
  %275 = vmatprep.subr.bf16.mxu0 0
  %276 = vmatpush1.bf16.msra.mxu0 %v259
  %277 = vmatprep.subr.bf16.mxu0 0
  %278 = vmatpush1.bf16.msra.mxu0 %v260
  %279 = vmatprep.subr.bf16.mxu0 0
  %280 = vmatpush1.bf16.msra.mxu0 %v261
  %281 = vmatprep.subr.bf16.mxu0 0
  %282 = vmatpush1.bf16.msra.mxu0 %v262
  %283 = vmatprep.subr.bf16.mxu0 0
  %284 = vmatpush1.bf16.msra.mxu0 %v263
  %285 = vmatprep.subr.bf16.mxu0 0
  %286 = vmatpush1.bf16.msra.mxu0 %v264
  %287 = vmatprep.subr.bf16.mxu0 0
  %288 = vmatpush1.bf16.msra.mxu0 %v265
  %289 = vmatprep.subr.bf16.mxu0 0
  %290 = vmatpush1.bf16.msra.mxu0 %v266
  %291 = vmatprep.subr.bf16.mxu0 0
  %292 = vmatpush1.bf16.msra.mxu0 0
  %293 = vmatprep.subr.bf16.mxu0 0
  %294 = vmatpush1.bf16.msra.mxu0 0
  %295 = vmatprep.subr.bf16.mxu0 0
  %296 = vmatpush1.bf16.msra.mxu0 0
  %297 = vmatprep.subr.bf16.mxu0 0
  %298 = vmatpush1.bf16.msra.mxu0 0
  %299 = vmatprep.subr.bf16.mxu0 0
  %300 = vmatpush1.bf16.msra.mxu0 0
  %301 = vmatprep.subr.bf16.mxu0 0
  %302 = vmatpush1.bf16.msra.mxu0 0
  %303 = vmatprep.subr.bf16.mxu0 0
  %304 = vmatpush1.bf16.msra.mxu0 0
  %305 = vmatprep.subr.bf16.mxu0 0
  %306 = vmatpush1.bf16.msra.mxu0 0
  %307 = vmatprep.mubr.bf16.mxu0 0
  %308 = vmatmul.mubr.bf16.gmra.mrb[0].mxu0 %v41
  %v309 = vpop.f32.mrb[0].mxu0
  %v310 = vadd.f32 %v197, %v309
  %v311 = vpop.f32.mrb[0].mxu0
  %v312 = vpop.f32.mrb[0].mxu0
  %v313 = vadd.f32 %v200, %v312
  %v314 = vpop.f32.mrb[0].mxu0
  %315 = vmatprep.mubr.bf16.mxu0 0
  %316 = vmatmul.mubr.bf16.gmra.mrb[0].mxu0 %v42
  %v317 = vpop.f32.mrb[0].mxu0
  %v318 = vadd.f32 %v205, %v317
  %v319 = vpop.f32.mrb[0].mxu0
  %v320 = vpop.f32.mrb[0].mxu0
  %v321 = vadd.f32 %v208, %v320
  %v322 = vpop.f32.mrb[0].mxu0
  %323 = vmatprep.mubr.bf16.mxu0 0
  %324 = vmatmul.mubr.bf16.gmra.mrb[0].mxu0 %v43
  %v325 = vpop.f32.mrb[0].mxu0
  %v326 = vadd.f32 %v213, %v325
  %v327 = vpop.f32.mrb[0].mxu0
  %v328 = vpop.f32.mrb[0].mxu0
  %v329 = vadd.f32 %v216, %v328
  %v330 = vpop.f32.mrb[0].mxu0
  %331 = vmatprep.mubr.bf16.mxu0 0
  %332 = vmatmul.mubr.bf16.gmra.mrb[0].mxu0 %v44
  %v333 = vpop.f32.mrb[0].mxu0
  %v334 = vadd.f32 %v221, %v333
  %v335 = vpop.f32.mrb[0].mxu0
  %v336 = vpop.f32.mrb[0].mxu0
  %v337 = vadd.f32 %v224, %v336
  %v338 = vpop.f32.mrb[0].mxu0
  %339 = vdwg.mxu0
  %v340 = vld [vmem:[%s2] sm:$0x1]
  %v342 = vlaneseq
  %v343 = vshrl.u32 %v342, 7
  %v344 = vsub.s32 0, %v343
  %v345 = vrot.slane %v340, %v344
  %v347 = vadd.f32 %v310, %v345
  %v348 = vadd.f32 %v313, %v345
  %v349 = vadd.f32 %v318, %v345
  %v350 = vadd.f32 %v321, %v345
  %v351 = vadd.f32 %v326, %v345
  %v352 = vadd.f32 %v329, %v345
  %v353 = vadd.f32 %v334, %v345
  %v354 = vadd.f32 %v337, %v345
  %v355 = vmax.f32 %v347, 0.0
  %v356 = vmax.f32 %v348, 0.0
  %v357 = vmax.f32 %v349, 0.0
  %v358 = vmax.f32 %v350, 0.0
  %v359 = vmax.f32 %v351, 0.0
  %v360 = vmax.f32 %v352, 0.0
  %v361 = vmax.f32 %v353, 0.0
  %v362 = vmax.f32 %v354, 0.0
  %v363 = vpack.c.bf16 %v356, %v355
  %v364 = vpack.c.bf16 %v358, %v357
  %v365 = vpack.c.bf16 %v360, %v359
  %v366 = vpack.c.bf16 %v362, %v361
  %v367 = vld [vmem:[%s3] sm:$0xf]
  %v368 = vld [vmem:[%s3 + $0x4] sm:$0xf]
  %v369 = vld [vmem:[%s3 + $0x8] sm:$0xf]
  %v370 = vld [vmem:[%s3 + $0xc] sm:$0xf]
  %v371 = vld [vmem:[%s3 + $0x10] sm:$0xf]
  %v372 = vld [vmem:[%s3 + $0x14] sm:$0xf]
  %v373 = vld [vmem:[%s3 + $0x18] sm:$0xf]
  %s374 = scalar_lea.vmem %s3, 28
  %v375 = vld [vmem:[%s374] sm:$0xf]
  %v376 = vld [vmem:[%s374 + $0x4] sm:$0xf]
  %v377 = vld [vmem:[%s374 + $0x8] sm:$0xf]
  %v378 = vld [vmem:[%s374 + $0xc] sm:$0xf]
  %v379 = vld [vmem:[%s374 + $0x10] sm:$0xf]
  %v380 = vld [vmem:[%s374 + $0x14] sm:$0xf]
  %v381 = vld [vmem:[%s374 + $0x18] sm:$0xf]
  %v383 = vshrl.u32 %v363, 16
  %v385 = vshll.u32 %v363, 16
  %v387 = vrot.slane %v385, 1
  %v388 = vor.u32 %v383, %v387
  %v390 = vshll.u32 %v364, 16
  %v392 = vrot.slane %v390, 1
  %v393 = vsel %vm78, %v388, %v392
  %v394 = vshrl.u32 %v364, 16
  %v396 = vor.u32 %v394, %v392
  %v398 = vshll.u32 %v365, 16
  %v400 = vrot.slane %v398, 1
  %v401 = vsel %vm78, %v396, %v400
  %v402 = vshrl.u32 %v365, 16
  %v404 = vor.u32 %v402, %v400
  %v406 = vshll.u32 %v366, 16
  %v408 = vrot.slane %v406, 1
  %v409 = vsel %vm78, %v404, %v408
  %v410 = vshrl.u32 %v366, 16
  %v412 = vor.u32 %v410, %v408
  %v420 = vunpack.c.l.b16 %v375
  %v421 = vunpack.c.l.b16 %v376
  %v422 = vunpack.c.l.b16 %v377
  %v423 = vunpack.c.l.b16 %v378
  %v424 = vunpack.c.l.b16 %v379
  %v425 = vunpack.c.l.b16 %v380
  %v426 = vunpack.c.l.b16 %v381
  %v427 = vpack.c.b16 %v421, %v420
  %v428 = vpack.c.b16 %v423, %v422
  %v429 = vpack.c.b16 %v425, %v424
  %v430 = vpack.c.b16 %v426, %v426
  %vm434 = vcmask 457728
  %v436 = vsel %vm434, %v393, 0
  %v439 = vsel %vm434, %v401, 0
  %v442 = vsel %vm434, %v409, 0
  %v445 = vsel %vm434, %v412, 0
  %vm447 = vcmask 1043456
  %v449 = vsel %vm447, %v430, 0
  %451 = vmatprep.subr.bf16.mxu0 0
  %452 = vmatpush1.bf16.msra.mxu0 %v427
  %453 = vmatprep.subr.bf16.mxu0 0
  %454 = vmatpush1.bf16.msra.mxu0 %v428
  %455 = vmatprep.subr.bf16.mxu0 0
  %456 = vmatpush1.bf16.msra.mxu0 %v429
  %457 = vmatprep.subr.bf16.mxu0 0
  %458 = vmatpush1.bf16.msra.mxu0 %v449
  %459 = vmatprep.subr.bf16.mxu0 0
  %460 = vmatpush1.bf16.msra.mxu0 0
  %461 = vmatprep.subr.bf16.mxu0 0
  %462 = vmatpush1.bf16.msra.mxu0 0
  %463 = vmatprep.subr.bf16.mxu0 0
  %464 = vmatpush1.bf16.msra.mxu0 0
  %465 = vmatprep.subr.bf16.mxu0 0
  %466 = vmatpush1.bf16.msra.mxu0 0
  %467 = vmatprep.subr.bf16.mxu0 0
  %468 = vmatpush1.bf16.msra.mxu0 0
  %469 = vmatprep.subr.bf16.mxu0 0
  %470 = vmatpush1.bf16.msra.mxu0 0
  %471 = vmatprep.subr.bf16.mxu0 0
  %472 = vmatpush1.bf16.msra.mxu0 0
  %473 = vmatprep.subr.bf16.mxu0 0
  %474 = vmatpush1.bf16.msra.mxu0 0
  %475 = vmatprep.subr.bf16.mxu0 0
  %476 = vmatpush1.bf16.msra.mxu0 0
  %477 = vmatprep.subr.bf16.mxu0 0
  %478 = vmatpush1.bf16.msra.mxu0 0
  %479 = vmatprep.subr.bf16.mxu0 0
  %480 = vmatpush1.bf16.msra.mxu0 0
  %481 = vmatprep.subr.bf16.mxu0 0
  %482 = vmatpush1.bf16.msra.mxu0 0
  %483 = vmatprep.mubr.bf16.mxu0 0
  %484 = vmatmul.mubr.bf16.gmra.mrb[0].mxu0 %v436
  %v485 = vpop.f32.mrb[0].mxu0
  %v486 = vadd.f32 0.0, %v485
  %v487 = vpop.f32.mrb[0].mxu0
  %v488 = vpop.f32.mrb[0].mxu0
  %v489 = vadd.f32 0.0, %v488
  %v490 = vpop.f32.mrb[0].mxu0
  %491 = vmatprep.mubr.bf16.mxu0 0
  %492 = vmatmul.mubr.bf16.gmra.mrb[0].mxu0 %v439
  %v493 = vpop.f32.mrb[0].mxu0
  %v494 = vadd.f32 0.0, %v493
  %v495 = vpop.f32.mrb[0].mxu0
  %v496 = vpop.f32.mrb[0].mxu0
  %v497 = vadd.f32 0.0, %v496
  %v498 = vpop.f32.mrb[0].mxu0
  %499 = vmatprep.mubr.bf16.mxu0 0
  %500 = vmatmul.mubr.bf16.gmra.mrb[0].mxu0 %v442
  %v501 = vpop.f32.mrb[0].mxu0
  %v502 = vadd.f32 0.0, %v501
  %v503 = vpop.f32.mrb[0].mxu0
  %v504 = vpop.f32.mrb[0].mxu0
  %v505 = vadd.f32 0.0, %v504
  %v506 = vpop.f32.mrb[0].mxu0
  %507 = vmatprep.mubr.bf16.mxu0 0
  %508 = vmatmul.mubr.bf16.gmra.mrb[0].mxu0 %v445
  %v509 = vpop.f32.mrb[0].mxu0
  %v510 = vadd.f32 0.0, %v509
  %v511 = vpop.f32.mrb[0].mxu0
  %v512 = vpop.f32.mrb[0].mxu0
  %v513 = vadd.f32 0.0, %v512
  %v514 = vpop.f32.mrb[0].mxu0
  %515 = vdwg.mxu0
  %v523 = vunpack.c.l.b16 %v367
  %v524 = vunpack.c.l.b16 %v368
  %v525 = vunpack.c.l.b16 %v369
  %v526 = vunpack.c.l.b16 %v370
  %v527 = vunpack.c.l.b16 %v371
  %v528 = vunpack.c.l.b16 %v372
  %v529 = vunpack.c.l.b16 %v373
  %v530 = vpack.c.b16 %v524, %v523
  %v531 = vpack.c.b16 %v526, %v525
  %v532 = vpack.c.b16 %v528, %v527
  %v533 = vpack.c.b16 %v529, %v529
  %v537 = vsel %vm434, %v363, 0
  %v539 = vsel %vm434, %v364, 0
  %v541 = vsel %vm434, %v365, 0
  %v543 = vsel %vm434, %v366, 0
  %v546 = vsel %vm447, %v533, 0
  %548 = vmatprep.subr.bf16.mxu0 0
  %549 = vmatpush1.bf16.msra.mxu0 %v530
  %550 = vmatprep.subr.bf16.mxu0 0
  %551 = vmatpush1.bf16.msra.mxu0 %v531
  %552 = vmatprep.subr.bf16.mxu0 0
  %553 = vmatpush1.bf16.msra.mxu0 %v532
  %554 = vmatprep.subr.bf16.mxu0 0
  %555 = vmatpush1.bf16.msra.mxu0 %v546
  %556 = vmatprep.subr.bf16.mxu0 0
  %557 = vmatpush1.bf16.msra.mxu0 0
  %558 = vmatprep.subr.bf16.mxu0 0
  %559 = vmatpush1.bf16.msra.mxu0 0
  %560 = vmatprep.subr.bf16.mxu0 0
  %561 = vmatpush1.bf16.msra.mxu0 0
  %562 = vmatprep.subr.bf16.mxu0 0
  %563 = vmatpush1.bf16.msra.mxu0 0
  %564 = vmatprep.subr.bf16.mxu0 0
  %565 = vmatpush1.bf16.msra.mxu0 0
  %566 = vmatprep.subr.bf16.mxu0 0
  %567 = vmatpush1.bf16.msra.mxu0 0
  %568 = vmatprep.subr.bf16.mxu0 0
  %569 = vmatpush1.bf16.msra.mxu0 0
  %570 = vmatprep.subr.bf16.mxu0 0
  %571 = vmatpush1.bf16.msra.mxu0 0
  %572 = vmatprep.subr.bf16.mxu0 0
  %573 = vmatpush1.bf16.msra.mxu0 0
  %574 = vmatprep.subr.bf16.mxu0 0
  %575 = vmatpush1.bf16.msra.mxu0 0
  %576 = vmatprep.subr.bf16.mxu0 0
  %577 = vmatpush1.bf16.msra.mxu0 0
  %578 = vmatprep.subr.bf16.mxu0 0
  %579 = vmatpush1.bf16.msra.mxu0 0
  %580 = vmatprep.mubr.bf16.mxu0 0
  %581 = vmatmul.mubr.bf16.gmra.mrb[0].mxu0 %v537
  %v582 = vpop.f32.mrb[0].mxu0
  %v583 = vadd.f32 %v486, %v582
  %v584 = vpop.f32.mrb[0].mxu0
  %v585 = vpop.f32.mrb[0].mxu0
  %v586 = vadd.f32 %v489, %v585
  %v587 = vpop.f32.mrb[0].mxu0
  %588 = vmatprep.mubr.bf16.mxu0 0
  %589 = vmatmul.mubr.bf16.gmra.mrb[0].mxu0 %v539
  %v590 = vpop.f32.mrb[0].mxu0
  %v591 = vadd.f32 %v494, %v590
  %v592 = vpop.f32.mrb[0].mxu0
  %v593 = vpop.f32.mrb[0].mxu0
  %v594 = vadd.f32 %v497, %v593
  %v595 = vpop.f32.mrb[0].mxu0
  %596 = vmatprep.mubr.bf16.mxu0 0
  %597 = vmatmul.mubr.bf16.gmra.mrb[0].mxu0 %v541
  %v598 = vpop.f32.mrb[0].mxu0
  %v599 = vadd.f32 %v502, %v598
  %v600 = vpop.f32.mrb[0].mxu0
  %v601 = vpop.f32.mrb[0].mxu0
  %v602 = vadd.f32 %v505, %v601
  %v603 = vpop.f32.mrb[0].mxu0
  %604 = vmatprep.mubr.bf16.mxu0 0
  %605 = vmatmul.mubr.bf16.gmra.mrb[0].mxu0 %v543
  %v606 = vpop.f32.mrb[0].mxu0
  %v607 = vadd.f32 %v510, %v606
  %v608 = vpop.f32.mrb[0].mxu0
  %v609 = vpop.f32.mrb[0].mxu0
  %v610 = vadd.f32 %v513, %v609
  %v611 = vpop.f32.mrb[0].mxu0
  %612 = vdwg.mxu0
  %s613 = scalar_lea.vmem %s3, 56
  %v614 = vld [vmem:[%s613] sm:$0xf]
  %v615 = vld [vmem:[%s613 + $0x4] sm:$0xf]
  %v616 = vld [vmem:[%s613 + $0x8] sm:$0xf]
  %v617 = vld [vmem:[%s613 + $0xc] sm:$0xf]
  %v618 = vld [vmem:[%s613 + $0x10] sm:$0xf]
  %v619 = vld [vmem:[%s613 + $0x14] sm:$0xf]
  %v620 = vld [vmem:[%s613 + $0x18] sm:$0xf]
  %vm625 = vcmask 1046528
  %v626 = vrot.slane %v363, 1
  %v627 = vrot.slane %v364, 1
  %v628 = vsel %vm625, %v626, %v627
  %v629 = vrot.slane %v365, 1
  %v630 = vsel %vm625, %v627, %v629
  %v631 = vrot.slane %v366, 1
  %v632 = vsel %vm625, %v629, %v631
  %v640 = vunpack.c.l.b16 %v614
  %v641 = vunpack.c.l.b16 %v615
  %v642 = vunpack.c.l.b16 %v616
  %v643 = vunpack.c.l.b16 %v617
  %v644 = vunpack.c.l.b16 %v618
  %v645 = vunpack.c.l.b16 %v619
  %v646 = vunpack.c.l.b16 %v620
  %v647 = vpack.c.b16 %v641, %v640
  %v648 = vpack.c.b16 %v643, %v642
  %v649 = vpack.c.b16 %v645, %v644
  %v650 = vpack.c.b16 %v646, %v646
  %v655 = vsel %vm434, %v628, 0
  %v658 = vsel %vm434, %v630, 0
  %v661 = vsel %vm434, %v632, 0
  %v664 = vsel %vm434, %v631, 0
  %v667 = vsel %vm447, %v650, 0
  %669 = vmatprep.subr.bf16.mxu0 0
  %670 = vmatpush1.bf16.msra.mxu0 %v647
  %671 = vmatprep.subr.bf16.mxu0 0
  %672 = vmatpush1.bf16.msra.mxu0 %v648
  %673 = vmatprep.subr.bf16.mxu0 0
  %674 = vmatpush1.bf16.msra.mxu0 %v649
  %675 = vmatprep.subr.bf16.mxu0 0
  %676 = vmatpush1.bf16.msra.mxu0 %v667
  %677 = vmatprep.subr.bf16.mxu0 0
  %678 = vmatpush1.bf16.msra.mxu0 0
  %679 = vmatprep.subr.bf16.mxu0 0
  %680 = vmatpush1.bf16.msra.mxu0 0
  %681 = vmatprep.subr.bf16.mxu0 0
  %682 = vmatpush1.bf16.msra.mxu0 0
  %683 = vmatprep.subr.bf16.mxu0 0
  %684 = vmatpush1.bf16.msra.mxu0 0
  %685 = vmatprep.subr.bf16.mxu0 0
  %686 = vmatpush1.bf16.msra.mxu0 0
  %687 = vmatprep.subr.bf16.mxu0 0
  %688 = vmatpush1.bf16.msra.mxu0 0
  %689 = vmatprep.subr.bf16.mxu0 0
  %690 = vmatpush1.bf16.msra.mxu0 0
  %691 = vmatprep.subr.bf16.mxu0 0
  %692 = vmatpush1.bf16.msra.mxu0 0
  %693 = vmatprep.subr.bf16.mxu0 0
  %694 = vmatpush1.bf16.msra.mxu0 0
  %695 = vmatprep.subr.bf16.mxu0 0
  %696 = vmatpush1.bf16.msra.mxu0 0
  %697 = vmatprep.subr.bf16.mxu0 0
  %698 = vmatpush1.bf16.msra.mxu0 0
  %699 = vmatprep.subr.bf16.mxu0 0
  %700 = vmatpush1.bf16.msra.mxu0 0
  %701 = vmatprep.mubr.bf16.mxu0 0
  %702 = vmatmul.mubr.bf16.gmra.mrb[0].mxu0 %v655
  %v703 = vpop.f32.mrb[0].mxu0
  %v704 = vadd.f32 0.0, %v703
  %v705 = vpop.f32.mrb[0].mxu0
  %v706 = vpop.f32.mrb[0].mxu0
  %v707 = vadd.f32 0.0, %v706
  %v708 = vpop.f32.mrb[0].mxu0
  %709 = vmatprep.mubr.bf16.mxu0 0
  %710 = vmatmul.mubr.bf16.gmra.mrb[0].mxu0 %v658
  %v711 = vpop.f32.mrb[0].mxu0
  %v712 = vadd.f32 0.0, %v711
  %v713 = vpop.f32.mrb[0].mxu0
  %v714 = vpop.f32.mrb[0].mxu0
  %v715 = vadd.f32 0.0, %v714
  %v716 = vpop.f32.mrb[0].mxu0
  %717 = vmatprep.mubr.bf16.mxu0 0
  %718 = vmatmul.mubr.bf16.gmra.mrb[0].mxu0 %v661
  %v719 = vpop.f32.mrb[0].mxu0
  %v720 = vadd.f32 0.0, %v719
  %v721 = vpop.f32.mrb[0].mxu0
  %v722 = vpop.f32.mrb[0].mxu0
  %v723 = vadd.f32 0.0, %v722
  %v724 = vpop.f32.mrb[0].mxu0
  %725 = vmatprep.mubr.bf16.mxu0 0
  %726 = vmatmul.mubr.bf16.gmra.mrb[0].mxu0 %v664
  %v727 = vpop.f32.mrb[0].mxu0
  %v728 = vadd.f32 0.0, %v727
  %v729 = vpop.f32.mrb[0].mxu0
  %v730 = vpop.f32.mrb[0].mxu0
  %v731 = vadd.f32 0.0, %v730
  %v732 = vpop.f32.mrb[0].mxu0
  %733 = vdwg.mxu0
  %v734 = vadd.f32 %v583, %v704
  %v735 = vadd.f32 %v586, %v707
  %v736 = vadd.f32 %v591, %v712
  %v737 = vadd.f32 %v594, %v715
  %v738 = vadd.f32 %v599, %v720
  %v739 = vadd.f32 %v602, %v723
  %v740 = vadd.f32 %v607, %v728
  %v741 = vadd.f32 %v610, %v731
  %v742 = vld [vmem:[%s4] sm:$0x1]
  %v744 = vlaneseq
  %v745 = vshrl.u32 %v744, 7
  %v746 = vsub.s32 0, %v745
  %v747 = vrot.slane %v742, %v746
  %v749 = vadd.f32 %v734, %v747
  %v750 = vadd.f32 %v735, %v747
  %v751 = vadd.f32 %v736, %v747
  %v752 = vadd.f32 %v737, %v747
  %v753 = vadd.f32 %v738, %v747
  %v754 = vadd.f32 %v739, %v747
  %v755 = vadd.f32 %v740, %v747
  %v756 = vadd.f32 %v741, %v747
  %v757 = vmax.f32 %v749, 0.0
  %v758 = vmax.f32 %v750, 0.0
  %v759 = vmax.f32 %v751, 0.0
  %v760 = vmax.f32 %v752, 0.0
  %v761 = vmax.f32 %v753, 0.0
  %v762 = vmax.f32 %v754, 0.0
  %v763 = vmax.f32 %v755, 0.0
  %v764 = vmax.f32 %v756, 0.0
  %v765 = vpack.c.bf16 %v758, %v757
  %v766 = vpack.c.bf16 %v760, %v759
  %v767 = vpack.c.bf16 %v762, %v761
  %v768 = vpack.c.bf16 %v764, %v763
  %v769 = vld [vmem:[%s5] sm:$0xf]
  %v770 = vld [vmem:[%s5 + $0x4] sm:$0xf]
  %v771 = vld [vmem:[%s5 + $0x8] sm:$0xf]
  %v772 = vld [vmem:[%s5 + $0xc] sm:$0xf]
  %v773 = vld [vmem:[%s5 + $0x10] sm:$0xf]
  %v774 = vld [vmem:[%s5 + $0x14] sm:$0xf]
  %v775 = vld [vmem:[%s5 + $0x18] sm:$0xf]
  %v776 = vld [vmem:[%s5 + $0x1c] sm:$0xf]
  %v777 = vld [vmem:[%s5 + $0x20] sm:$0xf]
  %v778 = vld [vmem:[%s5 + $0x24] sm:$0xf]
  %s779 = scalar_lea.vmem %s5, 40
  %v780 = vld [vmem:[%s779] sm:$0xf]
  %v781 = vld [vmem:[%s779 + $0x4] sm:$0xf]
  %v782 = vld [vmem:[%s779 + $0x8] sm:$0xf]
  %v783 = vld [vmem:[%s779 + $0xc] sm:$0xf]
  %v784 = vld [vmem:[%s779 + $0x10] sm:$0xf]
  %v785 = vld [vmem:[%s779 + $0x14] sm:$0xf]
  %v786 = vld [vmem:[%s779 + $0x18] sm:$0xf]
  %v787 = vld [vmem:[%s779 + $0x1c] sm:$0xf]
  %v788 = vld [vmem:[%s779 + $0x20] sm:$0xf]
  %v789 = vld [vmem:[%s779 + $0x24] sm:$0xf]
  %v791 = vshrl.u32 %v765, 16
  %v793 = vshll.u32 %v765, 16
  %v795 = vrot.slane %v793, 1
  %v796 = vor.u32 %v791, %v795
  %v798 = vshll.u32 %v766, 16
  %v800 = vrot.slane %v798, 1
  %v801 = vsel %vm78, %v796, %v800
  %v802 = vshrl.u32 %v766, 16
  %v804 = vor.u32 %v802, %v800
  %v806 = vshll.u32 %v767, 16
  %v808 = vrot.slane %v806, 1
  %v809 = vsel %vm78, %v804, %v808
  %v810 = vshrl.u32 %v767, 16
  %v812 = vor.u32 %v810, %v808
  %v814 = vshll.u32 %v768, 16
  %v816 = vrot.slane %v814, 1
  %v817 = vsel %vm78, %v812, %v816
  %v818 = vshrl.u32 %v768, 16
  %v820 = vor.u32 %v818, %v816
  %v831 = vunpack.c.l.b16 %v780
  %v832 = vunpack.c.l.b16 %v781
  %v833 = vunpack.c.l.b16 %v782
  %v834 = vunpack.c.l.b16 %v783
  %v835 = vunpack.c.l.b16 %v784
  %v836 = vunpack.c.l.b16 %v785
  %v837 = vunpack.c.l.b16 %v786
  %v838 = vunpack.c.l.b16 %v787
  %v839 = vunpack.c.l.b16 %v788
  %v840 = vunpack.c.l.b16 %v789
  %v841 = vpack.c.b16 %v832, %v831
  %v842 = vpack.c.b16 %v834, %v833
  %v843 = vpack.c.b16 %v836, %v835
  %v844 = vpack.c.b16 %v838, %v837
  %v845 = vpack.c.b16 %v840, %v839
  %vm851 = vcmask 654336
  %v853 = vsel %vm851, %v801, 0
  %v856 = vsel %vm851, %v809, 0
  %v859 = vsel %vm851, %v817, 0
  %v862 = vsel %vm851, %v820, 0
  %864 = vmatprep.subr.bf16.mxu0 0
  %865 = vmatpush1.bf16.msra.mxu0 %v841
  %866 = vmatprep.subr.bf16.mxu0 0
  %867 = vmatpush1.bf16.msra.mxu0 %v842
  %868 = vmatprep.subr.bf16.mxu0 0
  %869 = vmatpush1.bf16.msra.mxu0 %v843
  %870 = vmatprep.subr.bf16.mxu0 0
  %871 = vmatpush1.bf16.msra.mxu0 %v844
  %872 = vmatprep.subr.bf16.mxu0 0
  %873 = vmatpush1.bf16.msra.mxu0 %v845
  %874 = vmatprep.subr.bf16.mxu0 0
  %875 = vmatpush1.bf16.msra.mxu0 0
  %876 = vmatprep.subr.bf16.mxu0 0
  %877 = vmatpush1.bf16.msra.mxu0 0
  %878 = vmatprep.subr.bf16.mxu0 0
  %879 = vmatpush1.bf16.msra.mxu0 0
  %880 = vmatprep.subr.bf16.mxu0 0
  %881 = vmatpush1.bf16.msra.mxu0 0
  %882 = vmatprep.subr.bf16.mxu0 0
  %883 = vmatpush1.bf16.msra.mxu0 0
  %884 = vmatprep.subr.bf16.mxu0 0
  %885 = vmatpush1.bf16.msra.mxu0 0
  %886 = vmatprep.subr.bf16.mxu0 0
  %887 = vmatpush1.bf16.msra.mxu0 0
  %888 = vmatprep.subr.bf16.mxu0 0
  %889 = vmatpush1.bf16.msra.mxu0 0
  %890 = vmatprep.subr.bf16.mxu0 0
  %891 = vmatpush1.bf16.msra.mxu0 0
  %892 = vmatprep.subr.bf16.mxu0 0
  %893 = vmatpush1.bf16.msra.mxu0 0
  %894 = vmatprep.subr.bf16.mxu0 0
  %895 = vmatpush1.bf16.msra.mxu0 0
  %896 = vmatprep.mubr.bf16.mxu0 0
  %897 = vmatmul.mubr.bf16.gmra.mrb[0].mxu0 %v853
  %v898 = vpop.f32.mrb[0].mxu0
  %v899 = vadd.f32 0.0, %v898
  %v900 = vpop.f32.mrb[0].mxu0
  %v901 = vpop.f32.mrb[0].mxu0
  %v902 = vadd.f32 0.0, %v901
  %v903 = vpop.f32.mrb[0].mxu0
  %904 = vmatprep.mubr.bf16.mxu0 0
  %905 = vmatmul.mubr.bf16.gmra.mrb[0].mxu0 %v856
  %v906 = vpop.f32.mrb[0].mxu0
  %v907 = vadd.f32 0.0, %v906
  %v908 = vpop.f32.mrb[0].mxu0
  %v909 = vpop.f32.mrb[0].mxu0
  %v910 = vadd.f32 0.0, %v909
  %v911 = vpop.f32.mrb[0].mxu0
  %912 = vmatprep.mubr.bf16.mxu0 0
  %913 = vmatmul.mubr.bf16.gmra.mrb[0].mxu0 %v859
  %v914 = vpop.f32.mrb[0].mxu0
  %v915 = vadd.f32 0.0, %v914
  %v916 = vpop.f32.mrb[0].mxu0
  %v917 = vpop.f32.mrb[0].mxu0
  %v918 = vadd.f32 0.0, %v917
  %v919 = vpop.f32.mrb[0].mxu0
  %920 = vmatprep.mubr.bf16.mxu0 0
  %921 = vmatmul.mubr.bf16.gmra.mrb[0].mxu0 %v862
  %v922 = vpop.f32.mrb[0].mxu0
  %v923 = vadd.f32 0.0, %v922
  %v924 = vpop.f32.mrb[0].mxu0
  %v925 = vpop.f32.mrb[0].mxu0
  %v926 = vadd.f32 0.0, %v925
  %v927 = vpop.f32.mrb[0].mxu0
  %928 = vdwg.mxu0
  %v939 = vunpack.c.l.b16 %v769
  %v940 = vunpack.c.l.b16 %v770
  %v941 = vunpack.c.l.b16 %v771
  %v942 = vunpack.c.l.b16 %v772
  %v943 = vunpack.c.l.b16 %v773
  %v944 = vunpack.c.l.b16 %v774
  %v945 = vunpack.c.l.b16 %v775
  %v946 = vunpack.c.l.b16 %v776
  %v947 = vunpack.c.l.b16 %v777
  %v948 = vunpack.c.l.b16 %v778
  %v949 = vpack.c.b16 %v940, %v939
  %v950 = vpack.c.b16 %v942, %v941
  %v951 = vpack.c.b16 %v944, %v943
  %v952 = vpack.c.b16 %v946, %v945
  %v953 = vpack.c.b16 %v948, %v947
  %v959 = vsel %vm851, %v765, 0
  %v961 = vsel %vm851, %v766, 0
  %v963 = vsel %vm851, %v767, 0
  %v965 = vsel %vm851, %v768, 0
  %967 = vmatprep.subr.bf16.mxu0 0
  %968 = vmatpush1.bf16.msra.mxu0 %v949
  %969 = vmatprep.subr.bf16.mxu0 0
  %970 = vmatpush1.bf16.msra.mxu0 %v950
  %971 = vmatprep.subr.bf16.mxu0 0
  %972 = vmatpush1.bf16.msra.mxu0 %v951
  %973 = vmatprep.subr.bf16.mxu0 0
  %974 = vmatpush1.bf16.msra.mxu0 %v952
  %975 = vmatprep.subr.bf16.mxu0 0
  %976 = vmatpush1.bf16.msra.mxu0 %v953
  %977 = vmatprep.subr.bf16.mxu0 0
  %978 = vmatpush1.bf16.msra.mxu0 0
  %979 = vmatprep.subr.bf16.mxu0 0
  %980 = vmatpush1.bf16.msra.mxu0 0
  %981 = vmatprep.subr.bf16.mxu0 0
  %982 = vmatpush1.bf16.msra.mxu0 0
  %983 = vmatprep.subr.bf16.mxu0 0
  %984 = vmatpush1.bf16.msra.mxu0 0
  %985 = vmatprep.subr.bf16.mxu0 0
  %986 = vmatpush1.bf16.msra.mxu0 0
  %987 = vmatprep.subr.bf16.mxu0 0
  %988 = vmatpush1.bf16.msra.mxu0 0
  %989 = vmatprep.subr.bf16.mxu0 0
  %990 = vmatpush1.bf16.msra.mxu0 0
  %991 = vmatprep.subr.bf16.mxu0 0
  %992 = vmatpush1.bf16.msra.mxu0 0
  %993 = vmatprep.subr.bf16.mxu0 0
  %994 = vmatpush1.bf16.msra.mxu0 0
  %995 = vmatprep.subr.bf16.mxu0 0
  %996 = vmatpush1.bf16.msra.mxu0 0
  %997 = vmatprep.subr.bf16.mxu0 0
  %998 = vmatpush1.bf16.msra.mxu0 0
  %999 = vmatprep.mubr.bf16.mxu0 0
  %1000 = vmatmul.mubr.bf16.gmra.mrb[0].mxu0 %v959
  %v1001 = vpop.f32.mrb[0].mxu0
  %v1002 = vadd.f32 %v899, %v1001
  %v1003 = vpop.f32.mrb[0].mxu0
  %v1004 = vpop.f32.mrb[0].mxu0
  %v1005 = vadd.f32 %v902, %v1004
  %v1006 = vpop.f32.mrb[0].mxu0
  %1007 = vmatprep.mubr.bf16.mxu0 0
  %1008 = vmatmul.mubr.bf16.gmra.mrb[0].mxu0 %v961
  %v1009 = vpop.f32.mrb[0].mxu0
  %v1010 = vadd.f32 %v907, %v1009
  %v1011 = vpop.f32.mrb[0].mxu0
  %v1012 = vpop.f32.mrb[0].mxu0
  %v1013 = vadd.f32 %v910, %v1012
  %v1014 = vpop.f32.mrb[0].mxu0
  %1015 = vmatprep.mubr.bf16.mxu0 0
  %1016 = vmatmul.mubr.bf16.gmra.mrb[0].mxu0 %v963
  %v1017 = vpop.f32.mrb[0].mxu0
  %v1018 = vadd.f32 %v915, %v1017
  %v1019 = vpop.f32.mrb[0].mxu0
  %v1020 = vpop.f32.mrb[0].mxu0
  %v1021 = vadd.f32 %v918, %v1020
  %v1022 = vpop.f32.mrb[0].mxu0
  %1023 = vmatprep.mubr.bf16.mxu0 0
  %1024 = vmatmul.mubr.bf16.gmra.mrb[0].mxu0 %v965
  %v1025 = vpop.f32.mrb[0].mxu0
  %v1026 = vadd.f32 %v923, %v1025
  %v1027 = vpop.f32.mrb[0].mxu0
  %v1028 = vpop.f32.mrb[0].mxu0
  %v1029 = vadd.f32 %v926, %v1028
  %v1030 = vpop.f32.mrb[0].mxu0
  %1031 = vdwg.mxu0
  %s1032 = scalar_lea.vmem %s5, 80
  %v1033 = vld [vmem:[%s1032] sm:$0xf]
  %v1034 = vld [vmem:[%s1032 + $0x4] sm:$0xf]
  %v1035 = vld [vmem:[%s1032 + $0x8] sm:$0xf]
  %v1036 = vld [vmem:[%s1032 + $0xc] sm:$0xf]
  %v1037 = vld [vmem:[%s1032 + $0x10] sm:$0xf]
  %v1038 = vld [vmem:[%s1032 + $0x14] sm:$0xf]
  %v1039 = vld [vmem:[%s1032 + $0x18] sm:$0xf]
  %v1040 = vld [vmem:[%s1032 + $0x1c] sm:$0xf]
  %v1041 = vld [vmem:[%s1032 + $0x20] sm:$0xf]
  %v1042 = vld [vmem:[%s1032 + $0x24] sm:$0xf]
  %v1047 = vrot.slane %v765, 1
  %v1048 = vrot.slane %v766, 1
  %v1049 = vsel %vm625, %v1047, %v1048
  %v1050 = vrot.slane %v767, 1
  %v1051 = vsel %vm625, %v1048, %v1050
  %v1052 = vrot.slane %v768, 1
  %v1053 = vsel %vm625, %v1050, %v1052
  %v1064 = vunpack.c.l.b16 %v1033
  %v1065 = vunpack.c.l.b16 %v1034
  %v1066 = vunpack.c.l.b16 %v1035
  %v1067 = vunpack.c.l.b16 %v1036
  %v1068 = vunpack.c.l.b16 %v1037
  %v1069 = vunpack.c.l.b16 %v1038
  %v1070 = vunpack.c.l.b16 %v1039
  %v1071 = vunpack.c.l.b16 %v1040
  %v1072 = vunpack.c.l.b16 %v1041
  %v1073 = vunpack.c.l.b16 %v1042
  %v1074 = vpack.c.b16 %v1065, %v1064
  %v1075 = vpack.c.b16 %v1067, %v1066
  %v1076 = vpack.c.b16 %v1069, %v1068
  %v1077 = vpack.c.b16 %v1071, %v1070
  %v1078 = vpack.c.b16 %v1073, %v1072
  %v1085 = vsel %vm851, %v1049, 0
  %v1088 = vsel %vm851, %v1051, 0
  %v1091 = vsel %vm851, %v1053, 0
  %v1094 = vsel %vm851, %v1052, 0
  %1096 = vmatprep.subr.bf16.mxu0 0
  %1097 = vmatpush1.bf16.msra.mxu0 %v1074
  %1098 = vmatprep.subr.bf16.mxu0 0
  %1099 = vmatpush1.bf16.msra.mxu0 %v1075
  %1100 = vmatprep.subr.bf16.mxu0 0
  %1101 = vmatpush1.bf16.msra.mxu0 %v1076
  %1102 = vmatprep.subr.bf16.mxu0 0
  %1103 = vmatpush1.bf16.msra.mxu0 %v1077
  %1104 = vmatprep.subr.bf16.mxu0 0
  %1105 = vmatpush1.bf16.msra.mxu0 %v1078
  %1106 = vmatprep.subr.bf16.mxu0 0
  %1107 = vmatpush1.bf16.msra.mxu0 0
  %1108 = vmatprep.subr.bf16.mxu0 0
  %1109 = vmatpush1.bf16.msra.mxu0 0
  %1110 = vmatprep.subr.bf16.mxu0 0
  %1111 = vmatpush1.bf16.msra.mxu0 0
  %1112 = vmatprep.subr.bf16.mxu0 0
  %1113 = vmatpush1.bf16.msra.mxu0 0
  %1114 = vmatprep.subr.bf16.mxu0 0
  %1115 = vmatpush1.bf16.msra.mxu0 0
  %1116 = vmatprep.subr.bf16.mxu0 0
  %1117 = vmatpush1.bf16.msra.mxu0 0
  %1118 = vmatprep.subr.bf16.mxu0 0
  %1119 = vmatpush1.bf16.msra.mxu0 0
  %1120 = vmatprep.subr.bf16.mxu0 0
  %1121 = vmatpush1.bf16.msra.mxu0 0
  %1122 = vmatprep.subr.bf16.mxu0 0
  %1123 = vmatpush1.bf16.msra.mxu0 0
  %1124 = vmatprep.subr.bf16.mxu0 0
  %1125 = vmatpush1.bf16.msra.mxu0 0
  %1126 = vmatprep.subr.bf16.mxu0 0
  %1127 = vmatpush1.bf16.msra.mxu0 0
  %1128 = vmatprep.mubr.bf16.mxu0 0
  %1129 = vmatmul.mubr.bf16.gmra.mrb[0].mxu0 %v1085
  %v1130 = vpop.f32.mrb[0].mxu0
  %v1131 = vadd.f32 0.0, %v1130
  %v1132 = vpop.f32.mrb[0].mxu0
  %v1133 = vpop.f32.mrb[0].mxu0
  %v1134 = vadd.f32 0.0, %v1133
  %v1135 = vpop.f32.mrb[0].mxu0
  %1136 = vmatprep.mubr.bf16.mxu0 0
  %1137 = vmatmul.mubr.bf16.gmra.mrb[0].mxu0 %v1088
  %v1138 = vpop.f32.mrb[0].mxu0
  %v1139 = vadd.f32 0.0, %v1138
  %v1140 = vpop.f32.mrb[0].mxu0
  %v1141 = vpop.f32.mrb[0].mxu0
  %v1142 = vadd.f32 0.0, %v1141
  %v1143 = vpop.f32.mrb[0].mxu0
  %1144 = vmatprep.mubr.bf16.mxu0 0
  %1145 = vmatmul.mubr.bf16.gmra.mrb[0].mxu0 %v1091
  %v1146 = vpop.f32.mrb[0].mxu0
  %v1147 = vadd.f32 0.0, %v1146
  %v1148 = vpop.f32.mrb[0].mxu0
  %v1149 = vpop.f32.mrb[0].mxu0
  %v1150 = vadd.f32 0.0, %v1149
  %v1151 = vpop.f32.mrb[0].mxu0
  %1152 = vmatprep.mubr.bf16.mxu0 0
  %1153 = vmatmul.mubr.bf16.gmra.mrb[0].mxu0 %v1094
  %v1154 = vpop.f32.mrb[0].mxu0
  %v1155 = vadd.f32 0.0, %v1154
  %v1156 = vpop.f32.mrb[0].mxu0
  %v1157 = vpop.f32.mrb[0].mxu0
  %v1158 = vadd.f32 0.0, %v1157
  %v1159 = vpop.f32.mrb[0].mxu0
  %1160 = vdwg.mxu0
  %v1161 = vadd.f32 %v1002, %v1131
  %v1162 = vadd.f32 %v1005, %v1134
  %v1163 = vadd.f32 %v1010, %v1139
  %v1164 = vadd.f32 %v1013, %v1142
  %v1165 = vadd.f32 %v1018, %v1147
  %v1166 = vadd.f32 %v1021, %v1150
  %v1167 = vadd.f32 %v1026, %v1155
  %v1168 = vadd.f32 %v1029, %v1158
  %s1169 = scalar_lea.vmem %s5, 120
  %v1170 = vld [vmem:[%s1169] sm:$0xf]
  %v1171 = vld [vmem:[%s1169 + $0x4] sm:$0xf]
  %v1172 = vld [vmem:[%s1169 + $0x8] sm:$0xf]
  %v1173 = vld [vmem:[%s1169 + $0xc] sm:$0xf]
  %v1174 = vld [vmem:[%s1169 + $0x10] sm:$0xf]
  %v1175 = vld [vmem:[%s1169 + $0x14] sm:$0xf]
  %v1176 = vld [vmem:[%s1169 + $0x18] sm:$0xf]
  %v1177 = vld [vmem:[%s1169 + $0x1c] sm:$0xf]
  %v1178 = vld [vmem:[%s1169 + $0x20] sm:$0xf]
  %v1179 = vld [vmem:[%s1169 + $0x24] sm:$0xf]
  %vm1180 = vsmask.f32 6400
  %v1181 = vrot.slane %v791, 1
  %v1182 = vrot.slane %v793, 2
  %v1183 = vor.u32 %v1181, %v1182
  %v1184 = vrot.slane %v802, 1
  %v1185 = vrot.slane %v798, 2
  %v1186 = vor.u32 %v1184, %v1185
  %v1187 = vsel %vm1180, %v1183, %v1186
  %v1188 = vrot.slane %v810, 1
  %v1189 = vrot.slane %v806, 2
  %v1190 = vor.u32 %v1188, %v1189
  %v1191 = vsel %vm1180, %v1186, %v1190
  %v1192 = vrot.slane %v818, 1
  %v1193 = vrot.slane %v814, 2
  %v1194 = vor.u32 %v1192, %v1193
  %v1195 = vsel %vm1180, %v1190, %v1194
  %v1206 = vunpack.c.l.b16 %v1170
  %v1207 = vunpack.c.l.b16 %v1171
  %v1208 = vunpack.c.l.b16 %v1172
  %v1209 = vunpack.c.l.b16 %v1173
  %v1210 = vunpack.c.l.b16 %v1174
  %v1211 = vunpack.c.l.b16 %v1175
  %v1212 = vunpack.c.l.b16 %v1176
  %v1213 = vunpack.c.l.b16 %v1177
  %v1214 = vunpack.c.l.b16 %v1178
  %v1215 = vunpack.c.l.b16 %v1179
  %v1216 = vpack.c.b16 %v1207, %v1206
  %v1217 = vpack.c.b16 %v1209, %v1208
  %v1218 = vpack.c.b16 %v1211, %v1210
  %v1219 = vpack.c.b16 %v1213, %v1212
  %v1220 = vpack.c.b16 %v1215, %v1214
  %v1227 = vsel %vm851, %v1187, 0
  %v1230 = vsel %vm851, %v1191, 0
  %v1233 = vsel %vm851, %v1195, 0
  %v1236 = vsel %vm851, %v1194, 0
  %1238 = vmatprep.subr.bf16.mxu0 0
  %1239 = vmatpush1.bf16.msra.mxu0 %v1216
  %1240 = vmatprep.subr.bf16.mxu0 0
  %1241 = vmatpush1.bf16.msra.mxu0 %v1217
  %1242 = vmatprep.subr.bf16.mxu0 0
  %1243 = vmatpush1.bf16.msra.mxu0 %v1218
  %1244 = vmatprep.subr.bf16.mxu0 0
  %1245 = vmatpush1.bf16.msra.mxu0 %v1219
  %1246 = vmatprep.subr.bf16.mxu0 0
  %1247 = vmatpush1.bf16.msra.mxu0 %v1220
  %1248 = vmatprep.subr.bf16.mxu0 0
  %1249 = vmatpush1.bf16.msra.mxu0 0
  %1250 = vmatprep.subr.bf16.mxu0 0
  %1251 = vmatpush1.bf16.msra.mxu0 0
  %1252 = vmatprep.subr.bf16.mxu0 0
  %1253 = vmatpush1.bf16.msra.mxu0 0
  %1254 = vmatprep.subr.bf16.mxu0 0
  %1255 = vmatpush1.bf16.msra.mxu0 0
  %1256 = vmatprep.subr.bf16.mxu0 0
  %1257 = vmatpush1.bf16.msra.mxu0 0
  %1258 = vmatprep.subr.bf16.mxu0 0
  %1259 = vmatpush1.bf16.msra.mxu0 0
  %1260 = vmatprep.subr.bf16.mxu0 0
  %1261 = vmatpush1.bf16.msra.mxu0 0
  %1262 = vmatprep.subr.bf16.mxu0 0
  %1263 = vmatpush1.bf16.msra.mxu0 0
  %1264 = vmatprep.subr.bf16.mxu0 0
  %1265 = vmatpush1.bf16.msra.mxu0 0
  %1266 = vmatprep.subr.bf16.mxu0 0
  %1267 = vmatpush1.bf16.msra.mxu0 0
  %1268 = vmatprep.subr.bf16.mxu0 0
  %1269 = vmatpush1.bf16.msra.mxu0 0
  %1270 = vmatprep.mubr.bf16.mxu0 0
  %1271 = vmatmul.mubr.bf16.gmra.mrb[0].mxu0 %v1227
  %v1272 = vpop.f32.mrb[0].mxu0
  %v1273 = vadd.f32 0.0, %v1272
  %v1274 = vpop.f32.mrb[0].mxu0
  %v1275 = vpop.f32.mrb[0].mxu0
  %v1276 = vadd.f32 0.0, %v1275
  %v1277 = vpop.f32.mrb[0].mxu0
  %1278 = vmatprep.mubr.bf16.mxu0 0
  %1279 = vmatmul.mubr.bf16.gmra.mrb[0].mxu0 %v1230
  %v1280 = vpop.f32.mrb[0].mxu0
  %v1281 = vadd.f32 0.0, %v1280
  %v1282 = vpop.f32.mrb[0].mxu0
  %v1283 = vpop.f32.mrb[0].mxu0
  %v1284 = vadd.f32 0.0, %v1283
  %v1285 = vpop.f32.mrb[0].mxu0
  %1286 = vmatprep.mubr.bf16.mxu0 0
  %1287 = vmatmul.mubr.bf16.gmra.mrb[0].mxu0 %v1233
  %v1288 = vpop.f32.mrb[0].mxu0
  %v1289 = vadd.f32 0.0, %v1288
  %v1290 = vpop.f32.mrb[0].mxu0
  %v1291 = vpop.f32.mrb[0].mxu0
  %v1292 = vadd.f32 0.0, %v1291
  %v1293 = vpop.f32.mrb[0].mxu0
  %1294 = vmatprep.mubr.bf16.mxu0 0
  %1295 = vmatmul.mubr.bf16.gmra.mrb[0].mxu0 %v1236
  %v1296 = vpop.f32.mrb[0].mxu0
  %v1297 = vadd.f32 0.0, %v1296
  %v1298 = vpop.f32.mrb[0].mxu0
  %v1299 = vpop.f32.mrb[0].mxu0
  %v1300 = vadd.f32 0.0, %v1299
  %v1301 = vpop.f32.mrb[0].mxu0
  %1302 = vdwg.mxu0
  %v1303 = vadd.f32 %v1161, %v1273
  %v1304 = vadd.f32 %v1162, %v1276
  %v1305 = vadd.f32 %v1163, %v1281
  %v1306 = vadd.f32 %v1164, %v1284
  %v1307 = vadd.f32 %v1165, %v1289
  %v1308 = vadd.f32 %v1166, %v1292
  %v1309 = vadd.f32 %v1167, %v1297
  %v1310 = vadd.f32 %v1168, %v1300
  %s1311 = scalar_lea.vmem %s5, 160
  %v1312 = vld [vmem:[%s1311] sm:$0xf]
  %v1313 = vld [vmem:[%s1311 + $0x4] sm:$0xf]
  %v1314 = vld [vmem:[%s1311 + $0x8] sm:$0xf]
  %v1315 = vld [vmem:[%s1311 + $0xc] sm:$0xf]
  %v1316 = vld [vmem:[%s1311 + $0x10] sm:$0xf]
  %v1317 = vld [vmem:[%s1311 + $0x14] sm:$0xf]
  %v1318 = vld [vmem:[%s1311 + $0x18] sm:$0xf]
  %v1319 = vld [vmem:[%s1311 + $0x1c] sm:$0xf]
  %v1320 = vld [vmem:[%s1311 + $0x20] sm:$0xf]
  %v1321 = vld [vmem:[%s1311 + $0x24] sm:$0xf]
  %vm1322 = vcmask 1045504
  %v1323 = vrot.slane %v765, 2
  %v1324 = vrot.slane %v766, 2
  %v1325 = vsel %vm1322, %v1323, %v1324
  %v1326 = vrot.slane %v767, 2
  %v1327 = vsel %vm1322, %v1324, %v1326
  %v1328 = vrot.slane %v768, 2
  %v1329 = vsel %vm1322, %v1326, %v1328
  %v1340 = vunpack.c.l.b16 %v1312
  %v1341 = vunpack.c.l.b16 %v1313
  %v1342 = vunpack.c.l.b16 %v1314
  %v1343 = vunpack.c.l.b16 %v1315
  %v1344 = vunpack.c.l.b16 %v1316
  %v1345 = vunpack.c.l.b16 %v1317
  %v1346 = vunpack.c.l.b16 %v1318
  %v1347 = vunpack.c.l.b16 %v1319
  %v1348 = vunpack.c.l.b16 %v1320
  %v1349 = vunpack.c.l.b16 %v1321
  %v1350 = vpack.c.b16 %v1341, %v1340
  %v1351 = vpack.c.b16 %v1343, %v1342
  %v1352 = vpack.c.b16 %v1345, %v1344
  %v1353 = vpack.c.b16 %v1347, %v1346
  %v1354 = vpack.c.b16 %v1349, %v1348
  %v1361 = vsel %vm851, %v1325, 0
  %v1364 = vsel %vm851, %v1327, 0
  %v1367 = vsel %vm851, %v1329, 0
  %v1370 = vsel %vm851, %v1328, 0
  %1372 = vmatprep.subr.bf16.mxu0 0
  %1373 = vmatpush1.bf16.msra.mxu0 %v1350
  %1374 = vmatprep.subr.bf16.mxu0 0
  %1375 = vmatpush1.bf16.msra.mxu0 %v1351
  %1376 = vmatprep.subr.bf16.mxu0 0
  %1377 = vmatpush1.bf16.msra.mxu0 %v1352
  %1378 = vmatprep.subr.bf16.mxu0 0
  %1379 = vmatpush1.bf16.msra.mxu0 %v1353
  %1380 = vmatprep.subr.bf16.mxu0 0
  %1381 = vmatpush1.bf16.msra.mxu0 %v1354
  %1382 = vmatprep.subr.bf16.mxu0 0
  %1383 = vmatpush1.bf16.msra.mxu0 0
  %1384 = vmatprep.subr.bf16.mxu0 0
  %1385 = vmatpush1.bf16.msra.mxu0 0
  %1386 = vmatprep.subr.bf16.mxu0 0
  %1387 = vmatpush1.bf16.msra.mxu0 0
  %1388 = vmatprep.subr.bf16.mxu0 0
  %1389 = vmatpush1.bf16.msra.mxu0 0
  %1390 = vmatprep.subr.bf16.mxu0 0
  %1391 = vmatpush1.bf16.msra.mxu0 0
  %1392 = vmatprep.subr.bf16.mxu0 0
  %1393 = vmatpush1.bf16.msra.mxu0 0
  %1394 = vmatprep.subr.bf16.mxu0 0
  %1395 = vmatpush1.bf16.msra.mxu0 0
  %1396 = vmatprep.subr.bf16.mxu0 0
  %1397 = vmatpush1.bf16.msra.mxu0 0
  %1398 = vmatprep.subr.bf16.mxu0 0
  %1399 = vmatpush1.bf16.msra.mxu0 0
  %1400 = vmatprep.subr.bf16.mxu0 0
  %1401 = vmatpush1.bf16.msra.mxu0 0
  %1402 = vmatprep.subr.bf16.mxu0 0
  %1403 = vmatpush1.bf16.msra.mxu0 0
  %1404 = vmatprep.mubr.bf16.mxu0 0
  %1405 = vmatmul.mubr.bf16.gmra.mrb[0].mxu0 %v1361
  %v1406 = vpop.f32.mrb[0].mxu0
  %v1407 = vadd.f32 0.0, %v1406
  %v1408 = vpop.f32.mrb[0].mxu0
  %v1409 = vpop.f32.mrb[0].mxu0
  %v1410 = vadd.f32 0.0, %v1409
  %v1411 = vpop.f32.mrb[0].mxu0
  %1412 = vmatprep.mubr.bf16.mxu0 0
  %1413 = vmatmul.mubr.bf16.gmra.mrb[0].mxu0 %v1364
  %v1414 = vpop.f32.mrb[0].mxu0
  %v1415 = vadd.f32 0.0, %v1414
  %v1416 = vpop.f32.mrb[0].mxu0
  %v1417 = vpop.f32.mrb[0].mxu0
  %v1418 = vadd.f32 0.0, %v1417
  %v1419 = vpop.f32.mrb[0].mxu0
  %1420 = vmatprep.mubr.bf16.mxu0 0
  %1421 = vmatmul.mubr.bf16.gmra.mrb[0].mxu0 %v1367
  %v1422 = vpop.f32.mrb[0].mxu0
  %v1423 = vadd.f32 0.0, %v1422
  %v1424 = vpop.f32.mrb[0].mxu0
  %v1425 = vpop.f32.mrb[0].mxu0
  %v1426 = vadd.f32 0.0, %v1425
  %v1427 = vpop.f32.mrb[0].mxu0
  %1428 = vmatprep.mubr.bf16.mxu0 0
  %1429 = vmatmul.mubr.bf16.gmra.mrb[0].mxu0 %v1370
  %v1430 = vpop.f32.mrb[0].mxu0
  %v1431 = vadd.f32 0.0, %v1430
  %v1432 = vpop.f32.mrb[0].mxu0
  %v1433 = vpop.f32.mrb[0].mxu0
  %v1434 = vadd.f32 0.0, %v1433
  %v1435 = vpop.f32.mrb[0].mxu0
  %1436 = vdwg.mxu0
  %v1437 = vadd.f32 %v1303, %v1407
  %v1438 = vadd.f32 %v1304, %v1410
  %v1439 = vadd.f32 %v1305, %v1415
  %v1440 = vadd.f32 %v1306, %v1418
  %v1441 = vadd.f32 %v1307, %v1423
  %v1442 = vadd.f32 %v1308, %v1426
  %v1443 = vadd.f32 %v1309, %v1431
  %v1444 = vadd.f32 %v1310, %v1434
  %v1445 = vlaneseq
  %v1446 = vshrl.u32 %v1445, 7
  %v1447 = vlaneseq
  %v1448 = vand.u32 %v1447, 127
  %v1449 = vmul.u32 %v1446, 8
  %vm1450 = vcmp.eq.s32.totalorder %v1448, %v1449
  %v1451 = vsel %vm1450, 1, 0
  %v1452 = vcvt.s32.f32 %v1451
  %v1453 = vld [vmem:[%s6] sm:$0x1]
  %v1455 = vlaneseq
  %v1456 = vshrl.u32 %v1455, 7
  %v1457 = vsub.s32 0, %v1456
  %v1458 = vrot.slane %v1453, %v1457
  %vm1460 = vcmask 465920
  %v1462 = vsel %vm1460, %v1452, 0
  %vm1464 = vcmask 1040384
  %v1466 = vsel %vm1464, %v1444, 0
  %1468 = vmatprep.subr.mxu0 0.0
  %1469 = vmatpush1.msra.mxu0 %v1437
  %1470 = vmatprep.subr.mxu0 0.0
  %1471 = vmatpush1.msra.mxu0 %v1438
  %1472 = vmatprep.subr.mxu0 0.0
  %1473 = vmatpush1.msra.mxu0 %v1439
  %1474 = vmatprep.subr.mxu0 0.0
  %1475 = vmatpush1.msra.mxu0 %v1440
  %1476 = vmatprep.subr.mxu0 0.0
  %1477 = vmatpush1.msra.mxu0 %v1441
  %1478 = vmatprep.subr.mxu0 0.0
  %1479 = vmatpush1.msra.mxu0 %v1442
  %1480 = vmatprep.subr.mxu0 0.0
  %1481 = vmatpush1.msra.mxu0 %v1443
  %1482 = vmatprep.subr.mxu0 0.0
  %1483 = vmatpush1.msra.mxu0 %v1466
  %1484 = vmatprep.subr.mxu0 0.0
  %1485 = vmatpush1.msra.mxu0 0.0
  %1486 = vmatprep.subr.mxu0 0.0
  %1487 = vmatpush1.msra.mxu0 0.0
  %1488 = vmatprep.subr.mxu0 0.0
  %1489 = vmatpush1.msra.mxu0 0.0
  %1490 = vmatprep.subr.mxu0 0.0
  %1491 = vmatpush1.msra.mxu0 0.0
  %1492 = vmatprep.subr.mxu0 0.0
  %1493 = vmatpush1.msra.mxu0 0.0
  %1494 = vmatprep.subr.mxu0 0.0
  %1495 = vmatpush1.msra.mxu0 0.0
  %1496 = vmatprep.subr.mxu0 0.0
  %1497 = vmatpush1.msra.mxu0 0.0
  %1498 = vmatprep.subr.mxu0 0.0
  %1499 = vmatpush1.msra.mxu0 0.0
  %1500 = vmatprep.subr.mxu0 0.0
  %1501 = vmatpush1.msra.mxu0 0.0
  %1502 = vmatprep.subr.mxu0 0.0
  %1503 = vmatpush1.msra.mxu0 0.0
  %1504 = vmatprep.subr.mxu0 0.0
  %1505 = vmatpush1.msra.mxu0 0.0
  %1506 = vmatprep.subr.mxu0 0.0
  %1507 = vmatpush1.msra.mxu0 0.0
  %1508 = vmatprep.subr.mxu0 0.0
  %1509 = vmatpush1.msra.mxu0 0.0
  %1510 = vmatprep.subr.mxu0 0.0
  %1511 = vmatpush1.msra.mxu0 0.0
  %1512 = vmatprep.subr.mxu0 0.0
  %1513 = vmatpush1.msra.mxu0 0.0
  %1514 = vmatprep.subr.mxu0 0.0
  %1515 = vmatpush1.msra.mxu0 0.0
  %1516 = vmatprep.subr.mxu0 0.0
  %1517 = vmatpush1.msra.mxu0 0.0
  %1518 = vmatprep.subr.mxu0 0.0
  %1519 = vmatpush1.msra.mxu0 0.0
  %1520 = vmatprep.subr.mxu0 0.0
  %1521 = vmatpush1.msra.mxu0 0.0
  %1522 = vmatprep.subr.mxu0 0.0
  %1523 = vmatpush1.msra.mxu0 0.0
  %1524 = vmatprep.subr.mxu0 0.0
  %1525 = vmatpush1.msra.mxu0 0.0
  %1526 = vmatprep.subr.mxu0 0.0
  %1527 = vmatpush1.msra.mxu0 0.0
  %1528 = vmatprep.subr.mxu0 0.0
  %1529 = vmatpush1.msra.mxu0 0.0
  %1530 = vmatprep.subr.mxu0 0.0
  %1531 = vmatpush1.msra.mxu0 0.0
  %1532 = vmatprep.mubr.f32.mxu0 0.0
  %1533 = vmatmul.mubr.f32.gmra.mrb[0].mxu0 %v1462
  %v1534 = vpop.f32.mrb[0].mxu0
  %v1535 = vadd.f32 %v1458, %v1534
  %v1536 = vpop.f32.mrb[0].mxu0
  %1537 = vdwg.mxu0
  %v1538 = vmax.f32 %v1535, 0.0
  %v1539 = vpack.c.bf16 %v1538, %v1538
  %v1540 = vld [vmem:[%s7] sm:$0xf]
  %v1541 = vld [vmem:[%s7 + $0x4] sm:$0xf]
  %v1542 = vld [vmem:[%s7 + $0x8] sm:$0xf]
  %v1543 = vld [vmem:[%s7 + $0xc] sm:$0xf]
  %v1544 = vld [vmem:[%s8] sm:$0x1]
  %v1546 = vlaneseq
  %v1547 = vshrl.u32 %v1546, 7
  %v1548 = vsub.s32 0, %v1547
  %v1549 = vrot.slane %v1544, %v1548
  %v1555 = vunpack.c.l.b16 %v1540
  %v1556 = vunpack.c.l.b16 %v1541
  %v1557 = vunpack.c.l.b16 %v1542
  %v1558 = vunpack.c.l.b16 %v1543
  %v1559 = vpack.c.b16 %v1556, %v1555
  %v1560 = vpack.c.b16 %v1558, %v1557
  %vm1563 = vcmask 261120
  %v1565 = vsel %vm1563, %v1539, 0
  %1567 = vmatprep.subr.bf16.mxu0 0
  %1568 = vmatpush1.bf16.msra.mxu0 %v1559
  %1569 = vmatprep.subr.bf16.mxu0 0
  %1570 = vmatpush1.bf16.msra.mxu0 %v1560
  %1571 = vmatprep.subr.bf16.mxu0 0
  %1572 = vmatpush1.bf16.msra.mxu0 0
  %1573 = vmatprep.subr.bf16.mxu0 0
  %1574 = vmatpush1.bf16.msra.mxu0 0
  %1575 = vmatprep.subr.bf16.mxu0 0
  %1576 = vmatpush1.bf16.msra.mxu0 0
  %1577 = vmatprep.subr.bf16.mxu0 0
  %1578 = vmatpush1.bf16.msra.mxu0 0
  %1579 = vmatprep.subr.bf16.mxu0 0
  %1580 = vmatpush1.bf16.msra.mxu0 0
  %1581 = vmatprep.subr.bf16.mxu0 0
  %1582 = vmatpush1.bf16.msra.mxu0 0
  %1583 = vmatprep.subr.bf16.mxu0 0
  %1584 = vmatpush1.bf16.msra.mxu0 0
  %1585 = vmatprep.subr.bf16.mxu0 0
  %1586 = vmatpush1.bf16.msra.mxu0 0
  %1587 = vmatprep.subr.bf16.mxu0 0
  %1588 = vmatpush1.bf16.msra.mxu0 0
  %1589 = vmatprep.subr.bf16.mxu0 0
  %1590 = vmatpush1.bf16.msra.mxu0 0
  %1591 = vmatprep.subr.bf16.mxu0 0
  %1592 = vmatpush1.bf16.msra.mxu0 0
  %1593 = vmatprep.subr.bf16.mxu0 0
  %1594 = vmatpush1.bf16.msra.mxu0 0
  %1595 = vmatprep.subr.bf16.mxu0 0
  %1596 = vmatpush1.bf16.msra.mxu0 0
  %1597 = vmatprep.subr.bf16.mxu0 0
  %1598 = vmatpush1.bf16.msra.mxu0 0
  %1599 = vmatprep.mubr.bf16.mxu0 0
  %1600 = vmatmul.mubr.bf16.gmra.mrb[0].mxu0 %v1565
  %v1601 = vpop.f32.mrb[0].mxu0
  %v1602 = vadd.f32 %v1549, %v1601
  %v1603 = vpop.f32.mrb[0].mxu0
  %v1604 = vpop.f32.mrb[0].mxu0
  %v1605 = vpop.f32.mrb[0].mxu0
  %1606 = vdwg.mxu0
  %1607 = vst [vmem:[%s9] sm:$0xff] %v1602
  // Predicated region
  $region38: #{a2c_fused_forward.1} parent=0 // pred_check
    _
  $region39: #{a2c_fused_forward.1} parent=0 // pred_check_branch
    %1609 = sbr.rel (0) target = $region41
  $region40: #{a2c_fused_forward.1} parent=0 // pred_region
    _
  $region41: #{a2c_fused_forward.1} parent=0 // pred_fallthru
    _
  // Predicated region
  $region42: #{a2c_fused_forward.1} parent=0 // pred_check
    _
  $region43: #{a2c_fused_forward.1} parent=0 // pred_check_branch
    %1611 = sbr.rel (0) target = $region45
  $region44: #{a2c_fused_forward.1} parent=0 // pred_region
    _
  $region45: #{a2c_fused_forward.1} parent=0 // pred_fallthru
    _

// kernel: a2c_fused_forward.1
$region0: #{a2c_fused_forward.1}
  #allocation0 [shape = 'u32[]', space=smem, size = 0x4, offset = 0x4, fixed_abs, tag = 'smem constant byte address 0x4 - core index']
  #allocation1 [shape = 'u32[144,128]{1,0:T(1,128)}', space=vmem, size = 0x12000, scoped, tag = 'internal scratch']
  %s0 = inlined_call_operand.vmem [shape: f32[64,128], index: 0, kind: input, shape index: {}]
  %s1 = inlined_call_operand.vmem [shape: bf16[2,128,56], index: 1, kind: input, shape index: {}]
  %s2 = inlined_call_operand.vmem [shape: f32[1,56], index: 2, kind: input, shape index: {}]
  %s3 = inlined_call_operand.vmem [shape: bf16[3,56,80], index: 3, kind: input, shape index: {}]
  %s4 = inlined_call_operand.vmem [shape: f32[1,80], index: 4, kind: input, shape index: {}]
  %s5 = inlined_call_operand.vmem [shape: bf16[5,80,32], index: 5, kind: input, shape index: {}]
  %s6 = inlined_call_operand.vmem [shape: f32[1,32], index: 6, kind: input, shape index: {}]
  %s7 = inlined_call_operand.vmem [shape: bf16[32,128], index: 7, kind: input, shape index: {}]
  %s8 = inlined_call_operand.vmem [shape: f32[1,128], index: 8, kind: input, shape index: {}]
  %s9 = inlined_call_operand.vmem [shape: f32[8,128], index: 9, kind: output, shape index: {}]
  %s10 = sld [smem:[#allocation0]]
  $region46: #{a2c_fused_forward.1} parent=0
    _
  %s12 = ssub.s32 1, %s10
  %s13 = scalar_select 0, %s12, %s10
  // Predicated region
  $region2: #{a2c_fused_forward.1} parent=0 // pred_check
    _
  $region3: #{a2c_fused_forward.1} parent=0 // pred_check_branch
    %15 = sbr.rel (0) target = $region5
  $region4: #{a2c_fused_forward.1} parent=0 // pred_region
    _
  $region5: #{a2c_fused_forward.1} parent=0 // pred_fallthru
    _
  // Predicated region
  $region6: #{a2c_fused_forward.1} parent=0 // pred_check
    _
  $region7: #{a2c_fused_forward.1} parent=0 // pred_check_branch
    %17 = sbr.rel (0) target = $region9
  $region8: #{a2c_fused_forward.1} parent=0 // pred_region
    _
  $region9: #{a2c_fused_forward.1} parent=0 // pred_fallthru
    _
  // Predicated region
  $region10: #{a2c_fused_forward.1} parent=0 // pred_check
    _
  $region11: #{a2c_fused_forward.1} parent=0 // pred_check_branch
    %19 = sbr.rel (0) target = $region13
  $region12: #{a2c_fused_forward.1} parent=0 // pred_region
    _
  $region13: #{a2c_fused_forward.1} parent=0 // pred_fallthru
    _
  // Predicated region
  $region14: #{a2c_fused_forward.1} parent=0 // pred_check
    _
  $region15: #{a2c_fused_forward.1} parent=0 // pred_check_branch
    %21 = sbr.rel (0) target = $region17
  $region16: #{a2c_fused_forward.1} parent=0 // pred_region
    _
  $region17: #{a2c_fused_forward.1} parent=0 // pred_fallthru
    _
  // Predicated region
  $region18: #{a2c_fused_forward.1} parent=0 // pred_check
    _
  $region19: #{a2c_fused_forward.1} parent=0 // pred_check_branch
    %23 = sbr.rel (0) target = $region21
  $region20: #{a2c_fused_forward.1} parent=0 // pred_region
    _
  $region21: #{a2c_fused_forward.1} parent=0 // pred_fallthru
    _
  // Predicated region
  $region22: #{a2c_fused_forward.1} parent=0 // pred_check
    _
  $region23: #{a2c_fused_forward.1} parent=0 // pred_check_branch
    %25 = sbr.rel (0) target = $region25
  $region24: #{a2c_fused_forward.1} parent=0 // pred_region
    _
  $region25: #{a2c_fused_forward.1} parent=0 // pred_fallthru
    _
  // Predicated region
  $region26: #{a2c_fused_forward.1} parent=0 // pred_check
    _
  $region27: #{a2c_fused_forward.1} parent=0 // pred_check_branch
    %27 = sbr.rel (0) target = $region29
  $region28: #{a2c_fused_forward.1} parent=0 // pred_region
    _
  $region29: #{a2c_fused_forward.1} parent=0 // pred_fallthru
    _
  // Predicated region
  $region30: #{a2c_fused_forward.1} parent=0 // pred_check
    _
  $region31: #{a2c_fused_forward.1} parent=0 // pred_check_branch
    %29 = sbr.rel (0) target = $region33
  $region32: #{a2c_fused_forward.1} parent=0 // pred_region
    _
  $region33: #{a2c_fused_forward.1} parent=0 // pred_fallthru
    _
  // Predicated region
  $region34: #{a2c_fused_forward.1} parent=0 // pred_check
    _
  $region35: #{a2c_fused_forward.1} parent=0 // pred_check_branch
    %31 = sbr.rel (0) target = $region37
  $region36: #{a2c_fused_forward.1} parent=0 // pred_region
    _
  $region37: #{a2c_fused_forward.1} parent=0 // pred_fallthru
    _
  %v33 = vld [vmem:[%s0] sm:$0xff]
  %v34 = vld [vmem:[%s0 + $0x8] sm:$0xff]
  %v35 = vld [vmem:[%s0 + $0x10] sm:$0xff]
  %v36 = vld [vmem:[%s0 + $0x18] sm:$0xff]
  %v37 = vld [vmem:[%s0 + $0x20] sm:$0xff]
  %v38 = vld [vmem:[%s0 + $0x28] sm:$0xff]
  %v39 = vld [vmem:[%s0 + $0x30] sm:$0xff]
  %v40 = vld [vmem:[%s0 + $0x38] sm:$0xff]
  %v41 = vpack.c.bf16 %v34, %v33
  %v42 = vpack.c.bf16 %v36, %v35
  %v43 = vpack.c.bf16 %v38, %v37
  %v44 = vpack.c.bf16 %v40, %v39
  %v45 = vld [vmem:[%s1] sm:$0xf]
  %v46 = vld [vmem:[%s1 + $0x4] sm:$0xf]
  %v47 = vld [vmem:[%s1 + $0x8] sm:$0xf]
  %v48 = vld [vmem:[%s1 + $0xc] sm:$0xf]
  %v49 = vld [vmem:[%s1 + $0x10] sm:$0xf]
  %v50 = vld [vmem:[%s1 + $0x14] sm:$0xf]
  %v51 = vld [vmem:[%s1 + $0x18] sm:$0xf]
  %v52 = vld [vmem:[%s1 + $0x1c] sm:$0xf]
  %v53 = vld [vmem:[%s1 + $0x20] sm:$0xf]
  %v54 = vld [vmem:[%s1 + $0x24] sm:$0xf]
  %v55 = vld [vmem:[%s1 + $0x28] sm:$0xf]
  %v56 = vld [vmem:[%s1 + $0x2c] sm:$0xf]
  %v57 = vld [vmem:[%s1 + $0x30] sm:$0xf]
  %v58 = vld [vmem:[%s1 + $0x34] sm:$0xf]
  %v59 = vld [vmem:[%s1 + $0x38] sm:$0xf]
  %v60 = vld [vmem:[%s1 + $0x3c] sm:$0xf]
  %s61 = scalar_lea.vmem %s1, 64
  %v62 = vld [vmem:[%s61] sm:$0xf]
  %v63 = vld [vmem:[%s61 + $0x4] sm:$0xf]
  %v64 = vld [vmem:[%s61 + $0x8] sm:$0xf]
  %v65 = vld [vmem:[%s61 + $0xc] sm:$0xf]
  %v66 = vld [vmem:[%s61 + $0x10] sm:$0xf]
  %v67 = vld [vmem:[%s61 + $0x14] sm:$0xf]
  %v68 = vld [vmem:[%s61 + $0x18] sm:$0xf]
  %v69 = vld [vmem:[%s61 + $0x1c] sm:$0xf]
  %v70 = vld [vmem:[%s61 + $0x20] sm:$0xf]
  %v71 = vld [vmem:[%s61 + $0x24] sm:$0xf]
  %v72 = vld [vmem:[%s61 + $0x28] sm:$0xf]
  %v73 = vld [vmem:[%s61 + $0x2c] sm:$0xf]
  %v74 = vld [vmem:[%s61 + $0x30] sm:$0xf]
  %v75 = vld [vmem:[%s61 + $0x34] sm:$0xf]
  %v76 = vld [vmem:[%s61 + $0x38] sm:$0xf]
  %v77 = vld [vmem:[%s61 + $0x3c] sm:$0xf]
  %vm78 = vsmask.f32 7424
  %v80 = vshrl.u32 %v41, 16
  %v82 = vshll.u32 %v41, 16
  %v84 = vrot.slane %v82, 1
  %v85 = vor.u32 %v80, %v84
  %v87 = vshll.u32 %v42, 16
  %v89 = vrot.slane %v87, 1
  %v90 = vsel %vm78, %v85, %v89
  %v91 = vshrl.u32 %v42, 16
  %v93 = vor.u32 %v91, %v89
  %v95 = vshll.u32 %v43, 16
  %v97 = vrot.slane %v95, 1
  %v98 = vsel %vm78, %v93, %v97
  %v99 = vshrl.u32 %v43, 16
  %v101 = vor.u32 %v99, %v97
  %v103 = vshll.u32 %v44, 16
  %v105 = vrot.slane %v103, 1
  %v106 = vsel %vm78, %v101, %v105
  %v107 = vshrl.u32 %v44, 16
  %v109 = vor.u32 %v107, %v105
  %v130 = vunpack.c.l.b16 %v62
  %v131 = vunpack.c.l.b16 %v63
  %v132 = vunpack.c.l.b16 %v64
  %v133 = vunpack.c.l.b16 %v65
  %v134 = vunpack.c.l.b16 %v66
  %v135 = vunpack.c.l.b16 %v67
  %v136 = vunpack.c.l.b16 %v68
  %v137 = vunpack.c.l.b16 %v69
  %v138 = vunpack.c.l.b16 %v70
  %v139 = vunpack.c.l.b16 %v71
  %v140 = vunpack.c.l.b16 %v72
  %v141 = vunpack.c.l.b16 %v73
  %v142 = vunpack.c.l.b16 %v74
  %v143 = vunpack.c.l.b16 %v75
  %v144 = vunpack.c.l.b16 %v76
  %v145 = vunpack.c.l.b16 %v77
  %v146 = vpack.c.b16 %v131, %v130
  %v147 = vpack.c.b16 %v133, %v132
  %v148 = vpack.c.b16 %v135, %v134
  %v149 = vpack.c.b16 %v137, %v136
  %v150 = vpack.c.b16 %v139, %v138
  %v151 = vpack.c.b16 %v141, %v140
  %v152 = vpack.c.b16 %v143, %v142
  %v153 = vpack.c.b16 %v145, %v144
  %162 = vmatprep.subr.bf16.mxu0 0
  %163 = vmatpush1.bf16.msra.mxu0 %v146
  %164 = vmatprep.subr.bf16.mxu0 0
  %165 = vmatpush1.bf16.msra.mxu0 %v147
  %166 = vmatprep.subr.bf16.mxu0 0
  %167 = vmatpush1.bf16.msra.mxu0 %v148
  %168 = vmatprep.subr.bf16.mxu0 0
  %169 = vmatpush1.bf16.msra.mxu0 %v149
  %170 = vmatprep.subr.bf16.mxu0 0
  %171 = vmatpush1.bf16.msra.mxu0 %v150
  %172 = vmatprep.subr.bf16.mxu0 0
  %173 = vmatpush1.bf16.msra.mxu0 %v151
  %174 = vmatprep.subr.bf16.mxu0 0
  %175 = vmatpush1.bf16.msra.mxu0 %v152
  %176 = vmatprep.subr.bf16.mxu0 0
  %177 = vmatpush1.bf16.msra.mxu0 %v153
  %178 = vmatprep.subr.bf16.mxu0 0
  %179 = vmatpush1.bf16.msra.mxu0 0
  %180 = vmatprep.subr.bf16.mxu0 0
  %181 = vmatpush1.bf16.msra.mxu0 0
  %182 = vmatprep.subr.bf16.mxu0 0
  %183 = vmatpush1.bf16.msra.mxu0 0
  %184 = vmatprep.subr.bf16.mxu0 0
  %185 = vmatpush1.bf16.msra.mxu0 0
  %186 = vmatprep.subr.bf16.mxu0 0
  %187 = vmatpush1.bf16.msra.mxu0 0
  %188 = vmatprep.subr.bf16.mxu0 0
  %189 = vmatpush1.bf16.msra.mxu0 0
  %190 = vmatprep.subr.bf16.mxu0 0
  %191 = vmatpush1.bf16.msra.mxu0 0
  %192 = vmatprep.subr.bf16.mxu0 0
  %193 = vmatpush1.bf16.msra.mxu0 0
  %194 = vmatprep.mubr.bf16.mxu0 0
  %195 = vmatmul.mubr.bf16.gmra.mrb[0].mxu0 %v90
  %v196 = vpop.f32.mrb[0].mxu0
  %v197 = vadd.f32 0.0, %v196
  %v198 = vpop.f32.mrb[0].mxu0
  %v199 = vpop.f32.mrb[0].mxu0
  %v200 = vadd.f32 0.0, %v199
  %v201 = vpop.f32.mrb[0].mxu0
  %202 = vmatprep.mubr.bf16.mxu0 0
  %203 = vmatmul.mubr.bf16.gmra.mrb[0].mxu0 %v98
  %v204 = vpop.f32.mrb[0].mxu0
  %v205 = vadd.f32 0.0, %v204
  %v206 = vpop.f32.mrb[0].mxu0
  %v207 = vpop.f32.mrb[0].mxu0
  %v208 = vadd.f32 0.0, %v207
  %v209 = vpop.f32.mrb[0].mxu0
  %210 = vmatprep.mubr.bf16.mxu0 0
  %211 = vmatmul.mubr.bf16.gmra.mrb[0].mxu0 %v106
  %v212 = vpop.f32.mrb[0].mxu0
  %v213 = vadd.f32 0.0, %v212
  %v214 = vpop.f32.mrb[0].mxu0
  %v215 = vpop.f32.mrb[0].mxu0
  %v216 = vadd.f32 0.0, %v215
  %v217 = vpop.f32.mrb[0].mxu0
  %218 = vmatprep.mubr.bf16.mxu0 0
  %219 = vmatmul.mubr.bf16.gmra.mrb[0].mxu0 %v109
  %v220 = vpop.f32.mrb[0].mxu0
  %v221 = vadd.f32 0.0, %v220
  %v222 = vpop.f32.mrb[0].mxu0
  %v223 = vpop.f32.mrb[0].mxu0
  %v224 = vadd.f32 0.0, %v223
  %v225 = vpop.f32.mrb[0].mxu0
  %226 = vdwg.mxu0
  %v243 = vunpack.c.l.b16 %v45
  %v244 = vunpack.c.l.b16 %v46
  %v245 = vunpack.c.l.b16 %v47
  %v246 = vunpack.c.l.b16 %v48
  %v247 = vunpack.c.l.b16 %v49
  %v248 = vunpack.c.l.b16 %v50
  %v249 = vunpack.c.l.b16 %v51
  %v250 = vunpack.c.l.b16 %v52
  %v251 = vunpack.c.l.b16 %v53
  %v252 = vunpack.c.l.b16 %v54
  %v253 = vunpack.c.l.b16 %v55
  %v254 = vunpack.c.l.b16 %v56
  %v255 = vunpack.c.l.b16 %v57
  %v256 = vunpack.c.l.b16 %v58
  %v257 = vunpack.c.l.b16 %v59
  %v258 = vunpack.c.l.b16 %v60
  %v259 = vpack.c.b16 %v244, %v243
  %v260 = vpack.c.b16 %v246, %v245
  %v261 = vpack.c.b16 %v248, %v247
  %v262 = vpack.c.b16 %v250, %v249
  %v263 = vpack.c.b16 %v252, %v251
  %v264 = vpack.c.b16 %v254, %v253
  %v265 = vpack.c.b16 %v256, %v255
  %v266 = vpack.c.b16 %v258, %v257
  %275 = vmatprep.subr.bf16.mxu0 0
  %276 = vmatpush1.bf16.msra.mxu0 %v259
  %277 = vmatprep.subr.bf16.mxu0 0
  %278 = vmatpush1.bf16.msra.mxu0 %v260
  %279 = vmatprep.subr.bf16.mxu0 0
  %280 = vmatpush1.bf16.msra.mxu0 %v261
  %281 = vmatprep.subr.bf16.mxu0 0
  %282 = vmatpush1.bf16.msra.mxu0 %v262
  %283 = vmatprep.subr.bf16.mxu0 0
  %284 = vmatpush1.bf16.msra.mxu0 %v263
  %285 = vmatprep.subr.bf16.mxu0 0
  %286 = vmatpush1.bf16.msra.mxu0 %v264
  %287 = vmatprep.subr.bf16.mxu0 0
  %288 = vmatpush1.bf16.msra.mxu0 %v265
  %289 = vmatprep.subr.bf16.mxu0 0
  %290 = vmatpush1.bf16.msra.mxu0 %v266
  %291 = vmatprep.subr.bf16.mxu0 0
  %292 = vmatpush1.bf16.msra.mxu0 0
  %293 = vmatprep.subr.bf16.mxu0 0
  %294 = vmatpush1.bf16.msra.mxu0 0
  %295 = vmatprep.subr.bf16.mxu0 0
  %296 = vmatpush1.bf16.msra.mxu0 0
  %297 = vmatprep.subr.bf16.mxu0 0
  %298 = vmatpush1.bf16.msra.mxu0 0
  %299 = vmatprep.subr.bf16.mxu0 0
  %300 = vmatpush1.bf16.msra.mxu0 0
  %301 = vmatprep.subr.bf16.mxu0 0
  %302 = vmatpush1.bf16.msra.mxu0 0
  %303 = vmatprep.subr.bf16.mxu0 0
  %304 = vmatpush1.bf16.msra.mxu0 0
  %305 = vmatprep.subr.bf16.mxu0 0
  %306 = vmatpush1.bf16.msra.mxu0 0
  %307 = vmatprep.mubr.bf16.mxu0 0
  %308 = vmatmul.mubr.bf16.gmra.mrb[0].mxu0 %v41
  %v309 = vpop.f32.mrb[0].mxu0
  %v310 = vadd.f32 %v197, %v309
  %v311 = vpop.f32.mrb[0].mxu0
  %v312 = vpop.f32.mrb[0].mxu0
  %v313 = vadd.f32 %v200, %v312
  %v314 = vpop.f32.mrb[0].mxu0
  %315 = vmatprep.mubr.bf16.mxu0 0
  %316 = vmatmul.mubr.bf16.gmra.mrb[0].mxu0 %v42
  %v317 = vpop.f32.mrb[0].mxu0
  %v318 = vadd.f32 %v205, %v317
  %v319 = vpop.f32.mrb[0].mxu0
  %v320 = vpop.f32.mrb[0].mxu0
  %v321 = vadd.f32 %v208, %v320
  %v322 = vpop.f32.mrb[0].mxu0
  %323 = vmatprep.mubr.bf16.mxu0 0
  %324 = vmatmul.mubr.bf16.gmra.mrb[0].mxu0 %v43
  %v325 = vpop.f32.mrb[0].mxu0
  %v326 = vadd.f32 %v213, %v325
  %v327 = vpop.f32.mrb[0].mxu0
  %v328 = vpop.f32.mrb[0].mxu0
  %v329 = vadd.f32 %v216, %v328
  %v330 = vpop.f32.mrb[0].mxu0
  %331 = vmatprep.mubr.bf16.mxu0 0
  %332 = vmatmul.mubr.bf16.gmra.mrb[0].mxu0 %v44
  %v333 = vpop.f32.mrb[0].mxu0
  %v334 = vadd.f32 %v221, %v333
  %v335 = vpop.f32.mrb[0].mxu0
  %v336 = vpop.f32.mrb[0].mxu0
  %v337 = vadd.f32 %v224, %v336
  %v338 = vpop.f32.mrb[0].mxu0
  %339 = vdwg.mxu0
  %v340 = vld [vmem:[%s2] sm:$0x1]
  %v342 = vlaneseq
  %v343 = vshrl.u32 %v342, 7
  %v344 = vsub.s32 0, %v343
  %v345 = vrot.slane %v340, %v344
  %v347 = vadd.f32 %v310, %v345
  %v348 = vadd.f32 %v313, %v345
  %v349 = vadd.f32 %v318, %v345
  %v350 = vadd.f32 %v321, %v345
  %v351 = vadd.f32 %v326, %v345
  %v352 = vadd.f32 %v329, %v345
  %v353 = vadd.f32 %v334, %v345
  %v354 = vadd.f32 %v337, %v345
  %v355 = vmax.f32 %v347, 0.0
  %v356 = vmax.f32 %v348, 0.0
  %v357 = vmax.f32 %v349, 0.0
  %v358 = vmax.f32 %v350, 0.0
  %v359 = vmax.f32 %v351, 0.0
  %v360 = vmax.f32 %v352, 0.0
  %v361 = vmax.f32 %v353, 0.0
  %v362 = vmax.f32 %v354, 0.0
  %v363 = vpack.c.bf16 %v356, %v355
  %v364 = vpack.c.bf16 %v358, %v357
  %v365 = vpack.c.bf16 %v360, %v359
  %v366 = vpack.c.bf16 %v362, %v361
  %v367 = vld [vmem:[%s3] sm:$0xf]
  %v368 = vld [vmem:[%s3 + $0x4] sm:$0xf]
  %v369 = vld [vmem:[%s3 + $0x8] sm:$0xf]
  %v370 = vld [vmem:[%s3 + $0xc] sm:$0xf]
  %v371 = vld [vmem:[%s3 + $0x10] sm:$0xf]
  %v372 = vld [vmem:[%s3 + $0x14] sm:$0xf]
  %v373 = vld [vmem:[%s3 + $0x18] sm:$0xf]
  %s374 = scalar_lea.vmem %s3, 28
  %v375 = vld [vmem:[%s374] sm:$0xf]
  %v376 = vld [vmem:[%s374 + $0x4] sm:$0xf]
  %v377 = vld [vmem:[%s374 + $0x8] sm:$0xf]
  %v378 = vld [vmem:[%s374 + $0xc] sm:$0xf]
  %v379 = vld [vmem:[%s374 + $0x10] sm:$0xf]
  %v380 = vld [vmem:[%s374 + $0x14] sm:$0xf]
  %v381 = vld [vmem:[%s374 + $0x18] sm:$0xf]
  %v383 = vshrl.u32 %v363, 16
  %v385 = vshll.u32 %v363, 16
  %v387 = vrot.slane %v385, 1
  %v388 = vor.u32 %v383, %v387
  %v390 = vshll.u32 %v364, 16
  %v392 = vrot.slane %v390, 1
  %v393 = vsel %vm78, %v388, %v392
  %v394 = vshrl.u32 %v364, 16
  %v396 = vor.u32 %v394, %v392
  %v398 = vshll.u32 %v365, 16
  %v400 = vrot.slane %v398, 1
  %v401 = vsel %vm78, %v396, %v400
  %v402 = vshrl.u32 %v365, 16
  %v404 = vor.u32 %v402, %v400
  %v406 = vshll.u32 %v366, 16
  %v408 = vrot.slane %v406, 1
  %v409 = vsel %vm78, %v404, %v408
  %v410 = vshrl.u32 %v366, 16
  %v412 = vor.u32 %v410, %v408
  %v420 = vunpack.c.l.b16 %v375
  %v421 = vunpack.c.l.b16 %v376
  %v422 = vunpack.c.l.b16 %v377
  %v423 = vunpack.c.l.b16 %v378
  %v424 = vunpack.c.l.b16 %v379
  %v425 = vunpack.c.l.b16 %v380
  %v426 = vunpack.c.l.b16 %v381
  %v427 = vpack.c.b16 %v421, %v420
  %v428 = vpack.c.b16 %v423, %v422
  %v429 = vpack.c.b16 %v425, %v424
  %v430 = vpack.c.b16 %v426, %v426
  %vm434 = vcmask 457728
  %v436 = vsel %vm434, %v393, 0
  %v439 = vsel %vm434, %v401, 0
  %v442 = vsel %vm434, %v409, 0
  %v445 = vsel %vm434, %v412, 0
  %vm447 = vcmask 1043456
  %v449 = vsel %vm447, %v430, 0
  %451 = vmatprep.subr.bf16.mxu0 0
  %452 = vmatpush1.bf16.msra.mxu0 %v427
  %453 = vmatprep.subr.bf16.mxu0 0
  %454 = vmatpush1.bf16.msra.mxu0 %v428
  %455 = vmatprep.subr.bf16.mxu0 0
  %456 = vmatpush1.bf16.msra.mxu0 %v429
  %457 = vmatprep.subr.bf16.mxu0 0
  %458 = vmatpush1.bf16.msra.mxu0 %v449
  %459 = vmatprep.subr.bf16.mxu0 0
  %460 = vmatpush1.bf16.msra.mxu0 0
  %461 = vmatprep.subr.bf16.mxu0 0
  %462 = vmatpush1.bf16.msra.mxu0 0
  %463 = vmatprep.subr.bf16.mxu0 0
  %464 = vmatpush1.bf16.msra.mxu0 0
  %465 = vmatprep.subr.bf16.mxu0 0
  %466 = vmatpush1.bf16.msra.mxu0 0
  %467 = vmatprep.subr.bf16.mxu0 0
  %468 = vmatpush1.bf16.msra.mxu0 0
  %469 = vmatprep.subr.bf16.mxu0 0
  %470 = vmatpush1.bf16.msra.mxu0 0
  %471 = vmatprep.subr.bf16.mxu0 0
  %472 = vmatpush1.bf16.msra.mxu0 0
  %473 = vmatprep.subr.bf16.mxu0 0
  %474 = vmatpush1.bf16.msra.mxu0 0
  %475 = vmatprep.subr.bf16.mxu0 0
  %476 = vmatpush1.bf16.msra.mxu0 0
  %477 = vmatprep.subr.bf16.mxu0 0
  %478 = vmatpush1.bf16.msra.mxu0 0
  %479 = vmatprep.subr.bf16.mxu0 0
  %480 = vmatpush1.bf16.msra.mxu0 0
  %481 = vmatprep.subr.bf16.mxu0 0
  %482 = vmatpush1.bf16.msra.mxu0 0
  %483 = vmatprep.mubr.bf16.mxu0 0
  %484 = vmatmul.mubr.bf16.gmra.mrb[0].mxu0 %v436
  %v485 = vpop.f32.mrb[0].mxu0
  %v486 = vadd.f32 0.0, %v485
  %v487 = vpop.f32.mrb[0].mxu0
  %v488 = vpop.f32.mrb[0].mxu0
  %v489 = vadd.f32 0.0, %v488
  %v490 = vpop.f32.mrb[0].mxu0
  %491 = vmatprep.mubr.bf16.mxu0 0
  %492 = vmatmul.mubr.bf16.gmra.mrb[0].mxu0 %v439
  %v493 = vpop.f32.mrb[0].mxu0
  %v494 = vadd.f32 0.0, %v493
  %v495 = vpop.f32.mrb[0].mxu0
  %v496 = vpop.f32.mrb[0].mxu0
  %v497 = vadd.f32 0.0, %v496
  %v498 = vpop.f32.mrb[0].mxu0
  %499 = vmatprep.mubr.bf16.mxu0 0
  %500 = vmatmul.mubr.bf16.gmra.mrb[0].mxu0 %v442
  %v501 = vpop.f32.mrb[0].mxu0
  %v502 = vadd.f32 0.0, %v501
  %v503 = vpop.f32.mrb[0].mxu0
  %v504 = vpop.f32.mrb[0].mxu0
  %v505 = vadd.f32 0.0, %v504
  %v506 = vpop.f32.mrb[0].mxu0
  %507 = vmatprep.mubr.bf16.mxu0 0
  %508 = vmatmul.mubr.bf16.gmra.mrb[0].mxu0 %v445
  %v509 = vpop.f32.mrb[0].mxu0
  %v510 = vadd.f32 0.0, %v509
  %v511 = vpop.f32.mrb[0].mxu0
  %v512 = vpop.f32.mrb[0].mxu0
  %v513 = vadd.f32 0.0, %v512
  %v514 = vpop.f32.mrb[0].mxu0
  %515 = vdwg.mxu0
  %v523 = vunpack.c.l.b16 %v367
  %v524 = vunpack.c.l.b16 %v368
  %v525 = vunpack.c.l.b16 %v369
  %v526 = vunpack.c.l.b16 %v370
  %v527 = vunpack.c.l.b16 %v371
  %v528 = vunpack.c.l.b16 %v372
  %v529 = vunpack.c.l.b16 %v373
  %v530 = vpack.c.b16 %v524, %v523
  %v531 = vpack.c.b16 %v526, %v525
  %v532 = vpack.c.b16 %v528, %v527
  %v533 = vpack.c.b16 %v529, %v529
  %v537 = vsel %vm434, %v363, 0
  %v539 = vsel %vm434, %v364, 0
  %v541 = vsel %vm434, %v365, 0
  %v543 = vsel %vm434, %v366, 0
  %v546 = vsel %vm447, %v533, 0
  %548 = vmatprep.subr.bf16.mxu0 0
  %549 = vmatpush1.bf16.msra.mxu0 %v530
  %550 = vmatprep.subr.bf16.mxu0 0
  %551 = vmatpush1.bf16.msra.mxu0 %v531
  %552 = vmatprep.subr.bf16.mxu0 0
  %553 = vmatpush1.bf16.msra.mxu0 %v532
  %554 = vmatprep.subr.bf16.mxu0 0
  %555 = vmatpush1.bf16.msra.mxu0 %v546
  %556 = vmatprep.subr.bf16.mxu0 0
  %557 = vmatpush1.bf16.msra.mxu0 0
  %558 = vmatprep.subr.bf16.mxu0 0
  %559 = vmatpush1.bf16.msra.mxu0 0
  %560 = vmatprep.subr.bf16.mxu0 0
  %561 = vmatpush1.bf16.msra.mxu0 0
  %562 = vmatprep.subr.bf16.mxu0 0
  %563 = vmatpush1.bf16.msra.mxu0 0
  %564 = vmatprep.subr.bf16.mxu0 0
  %565 = vmatpush1.bf16.msra.mxu0 0
  %566 = vmatprep.subr.bf16.mxu0 0
  %567 = vmatpush1.bf16.msra.mxu0 0
  %568 = vmatprep.subr.bf16.mxu0 0
  %569 = vmatpush1.bf16.msra.mxu0 0
  %570 = vmatprep.subr.bf16.mxu0 0
  %571 = vmatpush1.bf16.msra.mxu0 0
  %572 = vmatprep.subr.bf16.mxu0 0
  %573 = vmatpush1.bf16.msra.mxu0 0
  %574 = vmatprep.subr.bf16.mxu0 0
  %575 = vmatpush1.bf16.msra.mxu0 0
  %576 = vmatprep.subr.bf16.mxu0 0
  %577 = vmatpush1.bf16.msra.mxu0 0
  %578 = vmatprep.subr.bf16.mxu0 0
  %579 = vmatpush1.bf16.msra.mxu0 0
  %580 = vmatprep.mubr.bf16.mxu0 0
  %581 = vmatmul.mubr.bf16.gmra.mrb[0].mxu0 %v537
  %v582 = vpop.f32.mrb[0].mxu0
  %v583 = vadd.f32 %v486, %v582
  %v584 = vpop.f32.mrb[0].mxu0
  %v585 = vpop.f32.mrb[0].mxu0
  %v586 = vadd.f32 %v489, %v585
  %v587 = vpop.f32.mrb[0].mxu0
  %588 = vmatprep.mubr.bf16.mxu0 0
  %589 = vmatmul.mubr.bf16.gmra.mrb[0].mxu0 %v539
  %v590 = vpop.f32.mrb[0].mxu0
  %v591 = vadd.f32 %v494, %v590
  %v592 = vpop.f32.mrb[0].mxu0
  %v593 = vpop.f32.mrb[0].mxu0
  %v594 = vadd.f32 %v497, %v593
  %v595 = vpop.f32.mrb[0].mxu0
  %596 = vmatprep.mubr.bf16.mxu0 0
  %597 = vmatmul.mubr.bf16.gmra.mrb[0].mxu0 %v541
  %v598 = vpop.f32.mrb[0].mxu0
  %v599 = vadd.f32 %v502, %v598
  %v600 = vpop.f32.mrb[0].mxu0
  %v601 = vpop.f32.mrb[0].mxu0
  %v602 = vadd.f32 %v505, %v601
  %v603 = vpop.f32.mrb[0].mxu0
  %604 = vmatprep.mubr.bf16.mxu0 0
  %605 = vmatmul.mubr.bf16.gmra.mrb[0].mxu0 %v543
  %v606 = vpop.f32.mrb[0].mxu0
  %v607 = vadd.f32 %v510, %v606
  %v608 = vpop.f32.mrb[0].mxu0
  %v609 = vpop.f32.mrb[0].mxu0
  %v610 = vadd.f32 %v513, %v609
  %v611 = vpop.f32.mrb[0].mxu0
  %612 = vdwg.mxu0
  %s613 = scalar_lea.vmem %s3, 56
  %v614 = vld [vmem:[%s613] sm:$0xf]
  %v615 = vld [vmem:[%s613 + $0x4] sm:$0xf]
  %v616 = vld [vmem:[%s613 + $0x8] sm:$0xf]
  %v617 = vld [vmem:[%s613 + $0xc] sm:$0xf]
  %v618 = vld [vmem:[%s613 + $0x10] sm:$0xf]
  %v619 = vld [vmem:[%s613 + $0x14] sm:$0xf]
  %v620 = vld [vmem:[%s613 + $0x18] sm:$0xf]
  %vm625 = vcmask 1046528
  %v626 = vrot.slane %v363, 1
  %v627 = vrot.slane %v364, 1
  %v628 = vsel %vm625, %v626, %v627
  %v629 = vrot.slane %v365, 1
  %v630 = vsel %vm625, %v627, %v629
  %v631 = vrot.slane %v366, 1
  %v632 = vsel %vm625, %v629, %v631
  %v640 = vunpack.c.l.b16 %v614
  %v641 = vunpack.c.l.b16 %v615
  %v642 = vunpack.c.l.b16 %v616
  %v643 = vunpack.c.l.b16 %v617
  %v644 = vunpack.c.l.b16 %v618
  %v645 = vunpack.c.l.b16 %v619
  %v646 = vunpack.c.l.b16 %v620
  %v647 = vpack.c.b16 %v641, %v640
  %v648 = vpack.c.b16 %v643, %v642
  %v649 = vpack.c.b16 %v645, %v644
  %v650 = vpack.c.b16 %v646, %v646
  %v655 = vsel %vm434, %v628, 0
  %v658 = vsel %vm434, %v630, 0
  %v661 = vsel %vm434, %v632, 0
  %v664 = vsel %vm434, %v631, 0
  %v667 = vsel %vm447, %v650, 0
  %669 = vmatprep.subr.bf16.mxu0 0
  %670 = vmatpush1.bf16.msra.mxu0 %v647
  %671 = vmatprep.subr.bf16.mxu0 0
  %672 = vmatpush1.bf16.msra.mxu0 %v648
  %673 = vmatprep.subr.bf16.mxu0 0
  %674 = vmatpush1.bf16.msra.mxu0 %v649
  %675 = vmatprep.subr.bf16.mxu0 0
  %676 = vmatpush1.bf16.msra.mxu0 %v667
  %677 = vmatprep.subr.bf16.mxu0 0
  %678 = vmatpush1.bf16.msra.mxu0 0
  %679 = vmatprep.subr.bf16.mxu0 0
  %680 = vmatpush1.bf16.msra.mxu0 0
  %681 = vmatprep.subr.bf16.mxu0 0
  %682 = vmatpush1.bf16.msra.mxu0 0
  %683 = vmatprep.subr.bf16.mxu0 0
  %684 = vmatpush1.bf16.msra.mxu0 0
  %685 = vmatprep.subr.bf16.mxu0 0
  %686 = vmatpush1.bf16.msra.mxu0 0
  %687 = vmatprep.subr.bf16.mxu0 0
  %688 = vmatpush1.bf16.msra.mxu0 0
  %689 = vmatprep.subr.bf16.mxu0 0
  %690 = vmatpush1.bf16.msra.mxu0 0
  %691 = vmatprep.subr.bf16.mxu0 0
  %692 = vmatpush1.bf16.msra.mxu0 0
  %693 = vmatprep.subr.bf16.mxu0 0
  %694 = vmatpush1.bf16.msra.mxu0 0
  %695 = vmatprep.subr.bf16.mxu0 0
  %696 = vmatpush1.bf16.msra.mxu0 0
  %697 = vmatprep.subr.bf16.mxu0 0
  %698 = vmatpush1.bf16.msra.mxu0 0
  %699 = vmatprep.subr.bf16.mxu0 0
  %700 = vmatpush1.bf16.msra.mxu0 0
  %701 = vmatprep.mubr.bf16.mxu0 0
  %702 = vmatmul.mubr.bf16.gmra.mrb[0].mxu0 %v655
  %v703 = vpop.f32.mrb[0].mxu0
  %v704 = vadd.f32 0.0, %v703
  %v705 = vpop.f32.mrb[0].mxu0
  %v706 = vpop.f32.mrb[0].mxu0
  %v707 = vadd.f32 0.0, %v706
  %v708 = vpop.f32.mrb[0].mxu0
  %709 = vmatprep.mubr.bf16.mxu0 0
  %710 = vmatmul.mubr.bf16.gmra.mrb[0].mxu0 %v658
  %v711 = vpop.f32.mrb[0].mxu0
  %v712 = vadd.f32 0.0, %v711
  %v713 = vpop.f32.mrb[0].mxu0
  %v714 = vpop.f32.mrb[0].mxu0
  %v715 = vadd.f32 0.0, %v714
  %v716 = vpop.f32.mrb[0].mxu0
  %717 = vmatprep.mubr.bf16.mxu0 0
  %718 = vmatmul.mubr.bf16.gmra.mrb[0].mxu0 %v661
  %v719 = vpop.f32.mrb[0].mxu0
  %v720 = vadd.f32 0.0, %v719
  %v721 = vpop.f32.mrb[0].mxu0
  %v722 = vpop.f32.mrb[0].mxu0
  %v723 = vadd.f32 0.0, %v722
  %v724 = vpop.f32.mrb[0].mxu0
  %725 = vmatprep.mubr.bf16.mxu0 0
  %726 = vmatmul.mubr.bf16.gmra.mrb[0].mxu0 %v664
  %v727 = vpop.f32.mrb[0].mxu0
  %v728 = vadd.f32 0.0, %v727
  %v729 = vpop.f32.mrb[0].mxu0
  %v730 = vpop.f32.mrb[0].mxu0
  %v731 = vadd.f32 0.0, %v730
  %v732 = vpop.f32.mrb[0].mxu0
  %733 = vdwg.mxu0
  %v734 = vadd.f32 %v583, %v704
  %v735 = vadd.f32 %v586, %v707
  %v736 = vadd.f32 %v591, %v712
  %v737 = vadd.f32 %v594, %v715
  %v738 = vadd.f32 %v599, %v720
  %v739 = vadd.f32 %v602, %v723
  %v740 = vadd.f32 %v607, %v728
  %v741 = vadd.f32 %v610, %v731
  %v742 = vld [vmem:[%s4] sm:$0x1]
  %v744 = vlaneseq
  %v745 = vshrl.u32 %v744, 7
  %v746 = vsub.s32 0, %v745
  %v747 = vrot.slane %v742, %v746
  %v749 = vadd.f32 %v734, %v747
  %v750 = vadd.f32 %v735, %v747
  %v751 = vadd.f32 %v736, %v747
  %v752 = vadd.f32 %v737, %v747
  %v753 = vadd.f32 %v738, %v747
  %v754 = vadd.f32 %v739, %v747
  %v755 = vadd.f32 %v740, %v747
  %v756 = vadd.f32 %v741, %v747
  %v757 = vmax.f32 %v749, 0.0
  %v758 = vmax.f32 %v750, 0.0
  %v759 = vmax.f32 %v751, 0.0
  %v760 = vmax.f32 %v752, 0.0
  %v761 = vmax.f32 %v753, 0.0
  %v762 = vmax.f32 %v754, 0.0
  %v763 = vmax.f32 %v755, 0.0
  %v764 = vmax.f32 %v756, 0.0
  %v765 = vpack.c.bf16 %v758, %v757
  %v766 = vpack.c.bf16 %v760, %v759
  %v767 = vpack.c.bf16 %v762, %v761
  %v768 = vpack.c.bf16 %v764, %v763
  %v769 = vld [vmem:[%s5] sm:$0xf]
  %v770 = vld [vmem:[%s5 + $0x4] sm:$0xf]
  %v771 = vld [vmem:[%s5 + $0x8] sm:$0xf]
  %v772 = vld [vmem:[%s5 + $0xc] sm:$0xf]
  %v773 = vld [vmem:[%s5 + $0x10] sm:$0xf]
  %v774 = vld [vmem:[%s5 + $0x14] sm:$0xf]
  %v775 = vld [vmem:[%s5 + $0x18] sm:$0xf]
  %v776 = vld [vmem:[%s5 + $0x1c] sm:$0xf]
  %v777 = vld [vmem:[%s5 + $0x20] sm:$0xf]
  %v778 = vld [vmem:[%s5 + $0x24] sm:$0xf]
  %s779 = scalar_lea.vmem %s5, 40
  %v780 = vld [vmem:[%s779] sm:$0xf]
  %v781 = vld [vmem:[%s779 + $0x4] sm:$0xf]
  %v782 = vld [vmem:[%s779 + $0x8] sm:$0xf]
  %v783 = vld [vmem:[%s779 + $0xc] sm:$0xf]
  %v784 = vld [vmem:[%s779 + $0x10] sm:$0xf]
  %v785 = vld [vmem:[%s779 + $0x14] sm:$0xf]
  %v786 = vld [vmem:[%s779 + $0x18] sm:$0xf]
  %v787 = vld [vmem:[%s779 + $0x1c] sm:$0xf]
  %v788 = vld [vmem:[%s779 + $0x20] sm:$0xf]
  %v789 = vld [vmem:[%s779 + $0x24] sm:$0xf]
  %v791 = vshrl.u32 %v765, 16
  %v793 = vshll.u32 %v765, 16
  %v795 = vrot.slane %v793, 1
  %v796 = vor.u32 %v791, %v795
  %v798 = vshll.u32 %v766, 16
  %v800 = vrot.slane %v798, 1
  %v801 = vsel %vm78, %v796, %v800
  %v802 = vshrl.u32 %v766, 16
  %v804 = vor.u32 %v802, %v800
  %v806 = vshll.u32 %v767, 16
  %v808 = vrot.slane %v806, 1
  %v809 = vsel %vm78, %v804, %v808
  %v810 = vshrl.u32 %v767, 16
  %v812 = vor.u32 %v810, %v808
  %v814 = vshll.u32 %v768, 16
  %v816 = vrot.slane %v814, 1
  %v817 = vsel %vm78, %v812, %v816
  %v818 = vshrl.u32 %v768, 16
  %v820 = vor.u32 %v818, %v816
  %v831 = vunpack.c.l.b16 %v780
  %v832 = vunpack.c.l.b16 %v781
  %v833 = vunpack.c.l.b16 %v782
  %v834 = vunpack.c.l.b16 %v783
  %v835 = vunpack.c.l.b16 %v784
  %v836 = vunpack.c.l.b16 %v785
  %v837 = vunpack.c.l.b16 %v786
  %v838 = vunpack.c.l.b16 %v787
  %v839 = vunpack.c.l.b16 %v788
  %v840 = vunpack.c.l.b16 %v789
  %v841 = vpack.c.b16 %v832, %v831
  %v842 = vpack.c.b16 %v834, %v833
  %v843 = vpack.c.b16 %v836, %v835
  %v844 = vpack.c.b16 %v838, %v837
  %v845 = vpack.c.b16 %v840, %v839
  %vm851 = vcmask 654336
  %v853 = vsel %vm851, %v801, 0
  %v856 = vsel %vm851, %v809, 0
  %v859 = vsel %vm851, %v817, 0
  %v862 = vsel %vm851, %v820, 0
  %864 = vmatprep.subr.bf16.mxu0 0
  %865 = vmatpush1.bf16.msra.mxu0 %v841
  %866 = vmatprep.subr.bf16.mxu0 0
  %867 = vmatpush1.bf16.msra.mxu0 %v842
  %868 = vmatprep.subr.bf16.mxu0 0
  %869 = vmatpush1.bf16.msra.mxu0 %v843
  %870 = vmatprep.subr.bf16.mxu0 0
  %871 = vmatpush1.bf16.msra.mxu0 %v844
  %872 = vmatprep.subr.bf16.mxu0 0
  %873 = vmatpush1.bf16.msra.mxu0 %v845
  %874 = vmatprep.subr.bf16.mxu0 0
  %875 = vmatpush1.bf16.msra.mxu0 0
  %876 = vmatprep.subr.bf16.mxu0 0
  %877 = vmatpush1.bf16.msra.mxu0 0
  %878 = vmatprep.subr.bf16.mxu0 0
  %879 = vmatpush1.bf16.msra.mxu0 0
  %880 = vmatprep.subr.bf16.mxu0 0
  %881 = vmatpush1.bf16.msra.mxu0 0
  %882 = vmatprep.subr.bf16.mxu0 0
  %883 = vmatpush1.bf16.msra.mxu0 0
  %884 = vmatprep.subr.bf16.mxu0 0
  %885 = vmatpush1.bf16.msra.mxu0 0
  %886 = vmatprep.subr.bf16.mxu0 0
  %887 = vmatpush1.bf16.msra.mxu0 0
  %888 = vmatprep.subr.bf16.mxu0 0
  %889 = vmatpush1.bf16.msra.mxu0 0
  %890 = vmatprep.subr.bf16.mxu0 0
  %891 = vmatpush1.bf16.msra.mxu0 0
  %892 = vmatprep.subr.bf16.mxu0 0
  %893 = vmatpush1.bf16.msra.mxu0 0
  %894 = vmatprep.subr.bf16.mxu0 0
  %895 = vmatpush1.bf16.msra.mxu0 0
  %896 = vmatprep.mubr.bf16.mxu0 0
  %897 = vmatmul.mubr.bf16.gmra.mrb[0].mxu0 %v853
  %v898 = vpop.f32.mrb[0].mxu0
  %v899 = vadd.f32 0.0, %v898
  %v900 = vpop.f32.mrb[0].mxu0
  %v901 = vpop.f32.mrb[0].mxu0
  %v902 = vadd.f32 0.0, %v901
  %v903 = vpop.f32.mrb[0].mxu0
  %904 = vmatprep.mubr.bf16.mxu0 0
  %905 = vmatmul.mubr.bf16.gmra.mrb[0].mxu0 %v856
  %v906 = vpop.f32.mrb[0].mxu0
  %v907 = vadd.f32 0.0, %v906
  %v908 = vpop.f32.mrb[0].mxu0
  %v909 = vpop.f32.mrb[0].mxu0
  %v910 = vadd.f32 0.0, %v909
  %v911 = vpop.f32.mrb[0].mxu0
  %912 = vmatprep.mubr.bf16.mxu0 0
  %913 = vmatmul.mubr.bf16.gmra.mrb[0].mxu0 %v859
  %v914 = vpop.f32.mrb[0].mxu0
  %v915 = vadd.f32 0.0, %v914
  %v916 = vpop.f32.mrb[0].mxu0
  %v917 = vpop.f32.mrb[0].mxu0
  %v918 = vadd.f32 0.0, %v917
  %v919 = vpop.f32.mrb[0].mxu0
  %920 = vmatprep.mubr.bf16.mxu0 0
  %921 = vmatmul.mubr.bf16.gmra.mrb[0].mxu0 %v862
  %v922 = vpop.f32.mrb[0].mxu0
  %v923 = vadd.f32 0.0, %v922
  %v924 = vpop.f32.mrb[0].mxu0
  %v925 = vpop.f32.mrb[0].mxu0
  %v926 = vadd.f32 0.0, %v925
  %v927 = vpop.f32.mrb[0].mxu0
  %928 = vdwg.mxu0
  %v939 = vunpack.c.l.b16 %v769
  %v940 = vunpack.c.l.b16 %v770
  %v941 = vunpack.c.l.b16 %v771
  %v942 = vunpack.c.l.b16 %v772
  %v943 = vunpack.c.l.b16 %v773
  %v944 = vunpack.c.l.b16 %v774
  %v945 = vunpack.c.l.b16 %v775
  %v946 = vunpack.c.l.b16 %v776
  %v947 = vunpack.c.l.b16 %v777
  %v948 = vunpack.c.l.b16 %v778
  %v949 = vpack.c.b16 %v940, %v939
  %v950 = vpack.c.b16 %v942, %v941
  %v951 = vpack.c.b16 %v944, %v943
  %v952 = vpack.c.b16 %v946, %v945
  %v953 = vpack.c.b16 %v948, %v947
  %v959 = vsel %vm851, %v765, 0
  %v961 = vsel %vm851, %v766, 0
  %v963 = vsel %vm851, %v767, 0
  %v965 = vsel %vm851, %v768, 0
  %967 = vmatprep.subr.bf16.mxu0 0
  %968 = vmatpush1.bf16.msra.mxu0 %v949
  %969 = vmatprep.subr.bf16.mxu0 0
  %970 = vmatpush1.bf16.msra.mxu0 %v950
  %971 = vmatprep.subr.bf16.mxu0 0
  %972 = vmatpush1.bf16.msra.mxu0 %v951
  %973 = vmatprep.subr.bf16.mxu0 0
  %974 = vmatpush1.bf16.msra.mxu0 %v952
  %975 = vmatprep.subr.bf16.mxu0 0
  %976 = vmatpush1.bf16.msra.mxu0 %v953
  %977 = vmatprep.subr.bf16.mxu0 0
  %978 = vmatpush1.bf16.msra.mxu0 0
  %979 = vmatprep.subr.bf16.mxu0 0
  %980 = vmatpush1.bf16.msra.mxu0 0
  %981 = vmatprep.subr.bf16.mxu0 0
  %982 = vmatpush1.bf16.msra.mxu0 0
  %983 = vmatprep.subr.bf16.mxu0 0
  %984 = vmatpush1.bf16.msra.mxu0 0
  %985 = vmatprep.subr.bf16.mxu0 0
  %986 = vmatpush1.bf16.msra.mxu0 0
  %987 = vmatprep.subr.bf16.mxu0 0
  %988 = vmatpush1.bf16.msra.mxu0 0
  %989 = vmatprep.subr.bf16.mxu0 0
  %990 = vmatpush1.bf16.msra.mxu0 0
  %991 = vmatprep.subr.bf16.mxu0 0
  %992 = vmatpush1.bf16.msra.mxu0 0
  %993 = vmatprep.subr.bf16.mxu0 0
  %994 = vmatpush1.bf16.msra.mxu0 0
  %995 = vmatprep.subr.bf16.mxu0 0
  %996 = vmatpush1.bf16.msra.mxu0 0
  %997 = vmatprep.subr.bf16.mxu0 0
  %998 = vmatpush1.bf16.msra.mxu0 0
  %999 = vmatprep.mubr.bf16.mxu0 0
  %1000 = vmatmul.mubr.bf16.gmra.mrb[0].mxu0 %v959
  %v1001 = vpop.f32.mrb[0].mxu0
  %v1002 = vadd.f32 %v899, %v1001
  %v1003 = vpop.f32.mrb[0].mxu0
  %v1004 = vpop.f32.mrb[0].mxu0
  %v1005 = vadd.f32 %v902, %v1004
  %v1006 = vpop.f32.mrb[0].mxu0
  %1007 = vmatprep.mubr.bf16.mxu0 0
  %1008 = vmatmul.mubr.bf16.gmra.mrb[0].mxu0 %v961
  %v1009 = vpop.f32.mrb[0].mxu0
  %v1010 = vadd.f32 %v907, %v1009
  %v1011 = vpop.f32.mrb[0].mxu0
  %v1012 = vpop.f32.mrb[0].mxu0
  %v1013 = vadd.f32 %v910, %v1012
  %v1014 = vpop.f32.mrb[0].mxu0
  %1015 = vmatprep.mubr.bf16.mxu0 0
  %1016 = vmatmul.mubr.bf16.gmra.mrb[0].mxu0 %v963
  %v1017 = vpop.f32.mrb[0].mxu0
  %v1018 = vadd.f32 %v915, %v1017
  %v1019 = vpop.f32.mrb[0].mxu0
  %v1020 = vpop.f32.mrb[0].mxu0
  %v1021 = vadd.f32 %v918, %v1020
  %v1022 = vpop.f32.mrb[0].mxu0
  %1023 = vmatprep.mubr.bf16.mxu0 0
  %1024 = vmatmul.mubr.bf16.gmra.mrb[0].mxu0 %v965
  %v1025 = vpop.f32.mrb[0].mxu0
  %v1026 = vadd.f32 %v923, %v1025
  %v1027 = vpop.f32.mrb[0].mxu0
  %v1028 = vpop.f32.mrb[0].mxu0
  %v1029 = vadd.f32 %v926, %v1028
  %v1030 = vpop.f32.mrb[0].mxu0
  %1031 = vdwg.mxu0
  %s1032 = scalar_lea.vmem %s5, 80
  %v1033 = vld [vmem:[%s1032] sm:$0xf]
  %v1034 = vld [vmem:[%s1032 + $0x4] sm:$0xf]
  %v1035 = vld [vmem:[%s1032 + $0x8] sm:$0xf]
  %v1036 = vld [vmem:[%s1032 + $0xc] sm:$0xf]
  %v1037 = vld [vmem:[%s1032 + $0x10] sm:$0xf]
  %v1038 = vld [vmem:[%s1032 + $0x14] sm:$0xf]
  %v1039 = vld [vmem:[%s1032 + $0x18] sm:$0xf]
  %v1040 = vld [vmem:[%s1032 + $0x1c] sm:$0xf]
  %v1041 = vld [vmem:[%s1032 + $0x20] sm:$0xf]
  %v1042 = vld [vmem:[%s1032 + $0x24] sm:$0xf]
  %v1047 = vrot.slane %v765, 1
  %v1048 = vrot.slane %v766, 1
  %v1049 = vsel %vm625, %v1047, %v1048
  %v1050 = vrot.slane %v767, 1
  %v1051 = vsel %vm625, %v1048, %v1050
  %v1052 = vrot.slane %v768, 1
  %v1053 = vsel %vm625, %v1050, %v1052
  %v1064 = vunpack.c.l.b16 %v1033
  %v1065 = vunpack.c.l.b16 %v1034
  %v1066 = vunpack.c.l.b16 %v1035
  %v1067 = vunpack.c.l.b16 %v1036
  %v1068 = vunpack.c.l.b16 %v1037
  %v1069 = vunpack.c.l.b16 %v1038
  %v1070 = vunpack.c.l.b16 %v1039
  %v1071 = vunpack.c.l.b16 %v1040
  %v1072 = vunpack.c.l.b16 %v1041
  %v1073 = vunpack.c.l.b16 %v1042
  %v1074 = vpack.c.b16 %v1065, %v1064
  %v1075 = vpack.c.b16 %v1067, %v1066
  %v1076 = vpack.c.b16 %v1069, %v1068
  %v1077 = vpack.c.b16 %v1071, %v1070
  %v1078 = vpack.c.b16 %v1073, %v1072
  %v1085 = vsel %vm851, %v1049, 0
  %v1088 = vsel %vm851, %v1051, 0
  %v1091 = vsel %vm851, %v1053, 0
  %v1094 = vsel %vm851, %v1052, 0
  %1096 = vmatprep.subr.bf16.mxu0 0
  %1097 = vmatpush1.bf16.msra.mxu0 %v1074
  %1098 = vmatprep.subr.bf16.mxu0 0
  %1099 = vmatpush1.bf16.msra.mxu0 %v1075
  %1100 = vmatprep.subr.bf16.mxu0 0
  %1101 = vmatpush1.bf16.msra.mxu0 %v1076
  %1102 = vmatprep.subr.bf16.mxu0 0
  %1103 = vmatpush1.bf16.msra.mxu0 %v1077
  %1104 = vmatprep.subr.bf16.mxu0 0
  %1105 = vmatpush1.bf16.msra.mxu0 %v1078
  %1106 = vmatprep.subr.bf16.mxu0 0
  %1107 = vmatpush1.bf16.msra.mxu0 0
  %1108 = vmatprep.subr.bf16.mxu0 0
  %1109 = vmatpush1.bf16.msra.mxu0 0
  %1110 = vmatprep.subr.bf16.mxu0 0
  %1111 = vmatpush1.bf16.msra.mxu0 0
  %1112 = vmatprep.subr.bf16.mxu0 0
  %1113 = vmatpush1.bf16.msra.mxu0 0
  %1114 = vmatprep.subr.bf16.mxu0 0
  %1115 = vmatpush1.bf16.msra.mxu0 0
  %1116 = vmatprep.subr.bf16.mxu0 0
  %1117 = vmatpush1.bf16.msra.mxu0 0
  %1118 = vmatprep.subr.bf16.mxu0 0
  %1119 = vmatpush1.bf16.msra.mxu0 0
  %1120 = vmatprep.subr.bf16.mxu0 0
  %1121 = vmatpush1.bf16.msra.mxu0 0
  %1122 = vmatprep.subr.bf16.mxu0 0
  %1123 = vmatpush1.bf16.msra.mxu0 0
  %1124 = vmatprep.subr.bf16.mxu0 0
  %1125 = vmatpush1.bf16.msra.mxu0 0
  %1126 = vmatprep.subr.bf16.mxu0 0
  %1127 = vmatpush1.bf16.msra.mxu0 0
  %1128 = vmatprep.mubr.bf16.mxu0 0
  %1129 = vmatmul.mubr.bf16.gmra.mrb[0].mxu0 %v1085
  %v1130 = vpop.f32.mrb[0].mxu0
  %v1131 = vadd.f32 0.0, %v1130
  %v1132 = vpop.f32.mrb[0].mxu0
  %v1133 = vpop.f32.mrb[0].mxu0
  %v1134 = vadd.f32 0.0, %v1133
  %v1135 = vpop.f32.mrb[0].mxu0
  %1136 = vmatprep.mubr.bf16.mxu0 0
  %1137 = vmatmul.mubr.bf16.gmra.mrb[0].mxu0 %v1088
  %v1138 = vpop.f32.mrb[0].mxu0
  %v1139 = vadd.f32 0.0, %v1138
  %v1140 = vpop.f32.mrb[0].mxu0
  %v1141 = vpop.f32.mrb[0].mxu0
  %v1142 = vadd.f32 0.0, %v1141
  %v1143 = vpop.f32.mrb[0].mxu0
  %1144 = vmatprep.mubr.bf16.mxu0 0
  %1145 = vmatmul.mubr.bf16.gmra.mrb[0].mxu0 %v1091
  %v1146 = vpop.f32.mrb[0].mxu0
  %v1147 = vadd.f32 0.0, %v1146
  %v1148 = vpop.f32.mrb[0].mxu0
  %v1149 = vpop.f32.mrb[0].mxu0
  %v1150 = vadd.f32 0.0, %v1149
  %v1151 = vpop.f32.mrb[0].mxu0
  %1152 = vmatprep.mubr.bf16.mxu0 0
  %1153 = vmatmul.mubr.bf16.gmra.mrb[0].mxu0 %v1094
  %v1154 = vpop.f32.mrb[0].mxu0
  %v1155 = vadd.f32 0.0, %v1154
  %v1156 = vpop.f32.mrb[0].mxu0
  %v1157 = vpop.f32.mrb[0].mxu0
  %v1158 = vadd.f32 0.0, %v1157
  %v1159 = vpop.f32.mrb[0].mxu0
  %1160 = vdwg.mxu0
  %v1161 = vadd.f32 %v1002, %v1131
  %v1162 = vadd.f32 %v1005, %v1134
  %v1163 = vadd.f32 %v1010, %v1139
  %v1164 = vadd.f32 %v1013, %v1142
  %v1165 = vadd.f32 %v1018, %v1147
  %v1166 = vadd.f32 %v1021, %v1150
  %v1167 = vadd.f32 %v1026, %v1155
  %v1168 = vadd.f32 %v1029, %v1158
  %s1169 = scalar_lea.vmem %s5, 120
  %v1170 = vld [vmem:[%s1169] sm:$0xf]
  %v1171 = vld [vmem:[%s1169 + $0x4] sm:$0xf]
  %v1172 = vld [vmem:[%s1169 + $0x8] sm:$0xf]
  %v1173 = vld [vmem:[%s1169 + $0xc] sm:$0xf]
  %v1174 = vld [vmem:[%s1169 + $0x10] sm:$0xf]
  %v1175 = vld [vmem:[%s1169 + $0x14] sm:$0xf]
  %v1176 = vld [vmem:[%s1169 + $0x18] sm:$0xf]
  %v1177 = vld [vmem:[%s1169 + $0x1c] sm:$0xf]
  %v1178 = vld [vmem:[%s1169 + $0x20] sm:$0xf]
  %v1179 = vld [vmem:[%s1169 + $0x24] sm:$0xf]
  %vm1180 = vsmask.f32 6400
  %v1181 = vrot.slane %v791, 1
  %v1182 = vrot.slane %v793, 2
  %v1183 = vor.u32 %v1181, %v1182
  %v1184 = vrot.slane %v802, 1
  %v1185 = vrot.slane %v798, 2
  %v1186 = vor.u32 %v1184, %v1185
  %v1187 = vsel %vm1180, %v1183, %v1186
  %v1188 = vrot.slane %v810, 1
  %v1189 = vrot.slane %v806, 2
  %v1190 = vor.u32 %v1188, %v1189
  %v1191 = vsel %vm1180, %v1186, %v1190
  %v1192 = vrot.slane %v818, 1
  %v1193 = vrot.slane %v814, 2
  %v1194 = vor.u32 %v1192, %v1193
  %v1195 = vsel %vm1180, %v1190, %v1194
  %v1206 = vunpack.c.l.b16 %v1170
  %v1207 = vunpack.c.l.b16 %v1171
  %v1208 = vunpack.c.l.b16 %v1172
  %v1209 = vunpack.c.l.b16 %v1173
  %v1210 = vunpack.c.l.b16 %v1174
  %v1211 = vunpack.c.l.b16 %v1175
  %v1212 = vunpack.c.l.b16 %v1176
  %v1213 = vunpack.c.l.b16 %v1177
  %v1214 = vunpack.c.l.b16 %v1178
  %v1215 = vunpack.c.l.b16 %v1179
  %v1216 = vpack.c.b16 %v1207, %v1206
  %v1217 = vpack.c.b16 %v1209, %v1208
  %v1218 = vpack.c.b16 %v1211, %v1210
  %v1219 = vpack.c.b16 %v1213, %v1212
  %v1220 = vpack.c.b16 %v1215, %v1214
  %v1227 = vsel %vm851, %v1187, 0
  %v1230 = vsel %vm851, %v1191, 0
  %v1233 = vsel %vm851, %v1195, 0
  %v1236 = vsel %vm851, %v1194, 0
  %1238 = vmatprep.subr.bf16.mxu0 0
  %1239 = vmatpush1.bf16.msra.mxu0 %v1216
  %1240 = vmatprep.subr.bf16.mxu0 0
  %1241 = vmatpush1.bf16.msra.mxu0 %v1217
  %1242 = vmatprep.subr.bf16.mxu0 0
  %1243 = vmatpush1.bf16.msra.mxu0 %v1218
  %1244 = vmatprep.subr.bf16.mxu0 0
  %1245 = vmatpush1.bf16.msra.mxu0 %v1219
  %1246 = vmatprep.subr.bf16.mxu0 0
  %1247 = vmatpush1.bf16.msra.mxu0 %v1220
  %1248 = vmatprep.subr.bf16.mxu0 0
  %1249 = vmatpush1.bf16.msra.mxu0 0
  %1250 = vmatprep.subr.bf16.mxu0 0
  %1251 = vmatpush1.bf16.msra.mxu0 0
  %1252 = vmatprep.subr.bf16.mxu0 0
  %1253 = vmatpush1.bf16.msra.mxu0 0
  %1254 = vmatprep.subr.bf16.mxu0 0
  %1255 = vmatpush1.bf16.msra.mxu0 0
  %1256 = vmatprep.subr.bf16.mxu0 0
  %1257 = vmatpush1.bf16.msra.mxu0 0
  %1258 = vmatprep.subr.bf16.mxu0 0
  %1259 = vmatpush1.bf16.msra.mxu0 0
  %1260 = vmatprep.subr.bf16.mxu0 0
  %1261 = vmatpush1.bf16.msra.mxu0 0
  %1262 = vmatprep.subr.bf16.mxu0 0
  %1263 = vmatpush1.bf16.msra.mxu0 0
  %1264 = vmatprep.subr.bf16.mxu0 0
  %1265 = vmatpush1.bf16.msra.mxu0 0
  %1266 = vmatprep.subr.bf16.mxu0 0
  %1267 = vmatpush1.bf16.msra.mxu0 0
  %1268 = vmatprep.subr.bf16.mxu0 0
  %1269 = vmatpush1.bf16.msra.mxu0 0
  %1270 = vmatprep.mubr.bf16.mxu0 0
  %1271 = vmatmul.mubr.bf16.gmra.mrb[0].mxu0 %v1227
  %v1272 = vpop.f32.mrb[0].mxu0
  %v1273 = vadd.f32 0.0, %v1272
  %v1274 = vpop.f32.mrb[0].mxu0
  %v1275 = vpop.f32.mrb[0].mxu0
  %v1276 = vadd.f32 0.0, %v1275
  %v1277 = vpop.f32.mrb[0].mxu0
  %1278 = vmatprep.mubr.bf16.mxu0 0
  %1279 = vmatmul.mubr.bf16.gmra.mrb[0].mxu0 %v1230
  %v1280 = vpop.f32.mrb[0].mxu0
  %v1281 = vadd.f32 0.0, %v1280
  %v1282 = vpop.f32.mrb[0].mxu0
  %v1283 = vpop.f32.mrb[0].mxu0
  %v1284 = vadd.f32 0.0, %v1283
  %v1285 = vpop.f32.mrb[0].mxu0
  %1286 = vmatprep.mubr.bf16.mxu0 0
  %1287 = vmatmul.mubr.bf16.gmra.mrb[0].mxu0 %v1233
  %v1288 = vpop.f32.mrb[0].mxu0
  %v1289 = vadd.f32 0.0, %v1288
  %v1290 = vpop.f32.mrb[0].mxu0
  %v1291 = vpop.f32.mrb[0].mxu0
  %v1292 = vadd.f32 0.0, %v1291
  %v1293 = vpop.f32.mrb[0].mxu0
  %1294 = vmatprep.mubr.bf16.mxu0 0
  %1295 = vmatmul.mubr.bf16.gmra.mrb[0].mxu0 %v1236
  %v1296 = vpop.f32.mrb[0].mxu0
  %v1297 = vadd.f32 0.0, %v1296
  %v1298 = vpop.f32.mrb[0].mxu0
  %v1299 = vpop.f32.mrb[0].mxu0
  %v1300 = vadd.f32 0.0, %v1299
  %v1301 = vpop.f32.mrb[0].mxu0
  %1302 = vdwg.mxu0
  %v1303 = vadd.f32 %v1161, %v1273
  %v1304 = vadd.f32 %v1162, %v1276
  %v1305 = vadd.f32 %v1163, %v1281
  %v1306 = vadd.f32 %v1164, %v1284
  %v1307 = vadd.f32 %v1165, %v1289
  %v1308 = vadd.f32 %v1166, %v1292
  %v1309 = vadd.f32 %v1167, %v1297
  %v1310 = vadd.f32 %v1168, %v1300
  %s1311 = scalar_lea.vmem %s5, 160
  %v1312 = vld [vmem:[%s1311] sm:$0xf]
  %v1313 = vld [vmem:[%s1311 + $0x4] sm:$0xf]
  %v1314 = vld [vmem:[%s1311 + $0x8] sm:$0xf]
  %v1315 = vld [vmem:[%s1311 + $0xc] sm:$0xf]
  %v1316 = vld [vmem:[%s1311 + $0x10] sm:$0xf]
  %v1317 = vld [vmem:[%s1311 + $0x14] sm:$0xf]
  %v1318 = vld [vmem:[%s1311 + $0x18] sm:$0xf]
  %v1319 = vld [vmem:[%s1311 + $0x1c] sm:$0xf]
  %v1320 = vld [vmem:[%s1311 + $0x20] sm:$0xf]
  %v1321 = vld [vmem:[%s1311 + $0x24] sm:$0xf]
  %vm1322 = vcmask 1045504
  %v1323 = vrot.slane %v765, 2
  %v1324 = vrot.slane %v766, 2
  %v1325 = vsel %vm1322, %v1323, %v1324
  %v1326 = vrot.slane %v767, 2
  %v1327 = vsel %vm1322, %v1324, %v1326
  %v1328 = vrot.slane %v768, 2
  %v1329 = vsel %vm1322, %v1326, %v1328
  %v1340 = vunpack.c.l.b16 %v1312
  %v1341 = vunpack.c.l.b16 %v1313
  %v1342 = vunpack.c.l.b16 %v1314
  %v1343 = vunpack.c.l.b16 %v1315
  %v1344 = vunpack.c.l.b16 %v1316
  %v1345 = vunpack.c.l.b16 %v1317
  %v1346 = vunpack.c.l.b16 %v1318
  %v1347 = vunpack.c.l.b16 %v1319
  %v1348 = vunpack.c.l.b16 %v1320
  %v1349 = vunpack.c.l.b16 %v1321
  %v1350 = vpack.c.b16 %v1341, %v1340
  %v1351 = vpack.c.b16 %v1343, %v1342
  %v1352 = vpack.c.b16 %v1345, %v1344
  %v1353 = vpack.c.b16 %v1347, %v1346
  %v1354 = vpack.c.b16 %v1349, %v1348
  %v1361 = vsel %vm851, %v1325, 0
  %v1364 = vsel %vm851, %v1327, 0
  %v1367 = vsel %vm851, %v1329, 0
  %v1370 = vsel %vm851, %v1328, 0
  %1372 = vmatprep.subr.bf16.mxu0 0
  %1373 = vmatpush1.bf16.msra.mxu0 %v1350
  %1374 = vmatprep.subr.bf16.mxu0 0
  %1375 = vmatpush1.bf16.msra.mxu0 %v1351
  %1376 = vmatprep.subr.bf16.mxu0 0
  %1377 = vmatpush1.bf16.msra.mxu0 %v1352
  %1378 = vmatprep.subr.bf16.mxu0 0
  %1379 = vmatpush1.bf16.msra.mxu0 %v1353
  %1380 = vmatprep.subr.bf16.mxu0 0
  %1381 = vmatpush1.bf16.msra.mxu0 %v1354
  %1382 = vmatprep.subr.bf16.mxu0 0
  %1383 = vmatpush1.bf16.msra.mxu0 0
  %1384 = vmatprep.subr.bf16.mxu0 0
  %1385 = vmatpush1.bf16.msra.mxu0 0
  %1386 = vmatprep.subr.bf16.mxu0 0
  %1387 = vmatpush1.bf16.msra.mxu0 0
  %1388 = vmatprep.subr.bf16.mxu0 0
  %1389 = vmatpush1.bf16.msra.mxu0 0
  %1390 = vmatprep.subr.bf16.mxu0 0
  %1391 = vmatpush1.bf16.msra.mxu0 0
  %1392 = vmatprep.subr.bf16.mxu0 0
  %1393 = vmatpush1.bf16.msra.mxu0 0
  %1394 = vmatprep.subr.bf16.mxu0 0
  %1395 = vmatpush1.bf16.msra.mxu0 0
  %1396 = vmatprep.subr.bf16.mxu0 0
  %1397 = vmatpush1.bf16.msra.mxu0 0
  %1398 = vmatprep.subr.bf16.mxu0 0
  %1399 = vmatpush1.bf16.msra.mxu0 0
  %1400 = vmatprep.subr.bf16.mxu0 0
  %1401 = vmatpush1.bf16.msra.mxu0 0
  %1402 = vmatprep.subr.bf16.mxu0 0
  %1403 = vmatpush1.bf16.msra.mxu0 0
  %1404 = vmatprep.mubr.bf16.mxu0 0
  %1405 = vmatmul.mubr.bf16.gmra.mrb[0].mxu0 %v1361
  %v1406 = vpop.f32.mrb[0].mxu0
  %v1407 = vadd.f32 0.0, %v1406
  %v1408 = vpop.f32.mrb[0].mxu0
  %v1409 = vpop.f32.mrb[0].mxu0
  %v1410 = vadd.f32 0.0, %v1409
  %v1411 = vpop.f32.mrb[0].mxu0
  %1412 = vmatprep.mubr.bf16.mxu0 0
  %1413 = vmatmul.mubr.bf16.gmra.mrb[0].mxu0 %v1364
  %v1414 = vpop.f32.mrb[0].mxu0
  %v1415 = vadd.f32 0.0, %v1414
  %v1416 = vpop.f32.mrb[0].mxu0
  %v1417 = vpop.f32.mrb[0].mxu0
  %v1418 = vadd.f32 0.0, %v1417
  %v1419 = vpop.f32.mrb[0].mxu0
  %1420 = vmatprep.mubr.bf16.mxu0 0
  %1421 = vmatmul.mubr.bf16.gmra.mrb[0].mxu0 %v1367
  %v1422 = vpop.f32.mrb[0].mxu0
  %v1423 = vadd.f32 0.0, %v1422
  %v1424 = vpop.f32.mrb[0].mxu0
  %v1425 = vpop.f32.mrb[0].mxu0
  %v1426 = vadd.f32 0.0, %v1425
  %v1427 = vpop.f32.mrb[0].mxu0
  %1428 = vmatprep.mubr.bf16.mxu0 0
  %1429 = vmatmul.mubr.bf16.gmra.mrb[0].mxu0 %v1370
  %v1430 = vpop.f32.mrb[0].mxu0
  %v1431 = vadd.f32 0.0, %v1430
  %v1432 = vpop.f32.mrb[0].mxu0
  %v1433 = vpop.f32.mrb[0].mxu0
  %v1434 = vadd.f32 0.0, %v1433
  %v1435 = vpop.f32.mrb[0].mxu0
  %1436 = vdwg.mxu0
  %v1437 = vadd.f32 %v1303, %v1407
  %v1438 = vadd.f32 %v1304, %v1410
  %v1439 = vadd.f32 %v1305, %v1415
  %v1440 = vadd.f32 %v1306, %v1418
  %v1441 = vadd.f32 %v1307, %v1423
  %v1442 = vadd.f32 %v1308, %v1426
  %v1443 = vadd.f32 %v1309, %v1431
  %v1444 = vadd.f32 %v1310, %v1434
  %v1445 = vlaneseq
  %v1446 = vshrl.u32 %v1445, 7
  %v1447 = vlaneseq
  %v1448 = vand.u32 %v1447, 127
  %v1449 = vmul.u32 %v1446, 8
  %vm1450 = vcmp.eq.s32.totalorder %v1448, %v1449
  %v1451 = vsel %vm1450, 1, 0
  %v1452 = vcvt.s32.f32 %v1451
  %v1453 = vld [vmem:[%s6] sm:$0x1]
  %v1455 = vlaneseq
  %v1456 = vshrl.u32 %v1455, 7
  %v1457 = vsub.s32 0, %v1456
  %v1458 = vrot.slane %v1453, %v1457
  %vm1460 = vcmask 465920
  %v1462 = vsel %vm1460, %v1452, 0
  %vm1464 = vcmask 1040384
  %v1466 = vsel %vm1464, %v1444, 0
  %1468 = vmatprep.subr.mxu0 0.0
  %1469 = vmatpush1.msra.mxu0 %v1437
  %1470 = vmatprep.subr.mxu0 0.0
  %1471 = vmatpush1.msra.mxu0 %v1438
  %1472 = vmatprep.subr.mxu0 0.0
  %1473 = vmatpush1.msra.mxu0 %v1439
  %1474 = vmatprep.subr.mxu0 0.0
  %1475 = vmatpush1.msra.mxu0 %v1440
  %1476 = vmatprep.subr.mxu0 0.0
  %1477 = vmatpush1.msra.mxu0 %v1441
  %1478 = vmatprep.subr.mxu0 0.0
  %1479 = vmatpush1.msra.mxu0 %v1442
  %1480 = vmatprep.subr.mxu0 0.0
  %1481 = vmatpush1.msra.mxu0 %v1443
  %1482 = vmatprep.subr.mxu0 0.0
  %1483 = vmatpush1.msra.mxu0 %v1466
  %1484 = vmatprep.subr.mxu0 0.0
  %1485 = vmatpush1.msra.mxu0 0.0
  %1486 = vmatprep.subr.mxu0 0.0
  %1487 = vmatpush1.msra.mxu0 0.0
  %1488 = vmatprep.subr.mxu0 0.0
  %1489 = vmatpush1.msra.mxu0 0.0
  %1490 = vmatprep.subr.mxu0 0.0
  %1491 = vmatpush1.msra.mxu0 0.0
  %1492 = vmatprep.subr.mxu0 0.0
  %1493 = vmatpush1.msra.mxu0 0.0
  %1494 = vmatprep.subr.mxu0 0.0
  %1495 = vmatpush1.msra.mxu0 0.0
  %1496 = vmatprep.subr.mxu0 0.0
  %1497 = vmatpush1.msra.mxu0 0.0
  %1498 = vmatprep.subr.mxu0 0.0
  %1499 = vmatpush1.msra.mxu0 0.0
  %1500 = vmatprep.subr.mxu0 0.0
  %1501 = vmatpush1.msra.mxu0 0.0
  %1502 = vmatprep.subr.mxu0 0.0
  %1503 = vmatpush1.msra.mxu0 0.0
  %1504 = vmatprep.subr.mxu0 0.0
  %1505 = vmatpush1.msra.mxu0 0.0
  %1506 = vmatprep.subr.mxu0 0.0
  %1507 = vmatpush1.msra.mxu0 0.0
  %1508 = vmatprep.subr.mxu0 0.0
  %1509 = vmatpush1.msra.mxu0 0.0
  %1510 = vmatprep.subr.mxu0 0.0
  %1511 = vmatpush1.msra.mxu0 0.0
  %1512 = vmatprep.subr.mxu0 0.0
  %1513 = vmatpush1.msra.mxu0 0.0
  %1514 = vmatprep.subr.mxu0 0.0
  %1515 = vmatpush1.msra.mxu0 0.0
  %1516 = vmatprep.subr.mxu0 0.0
  %1517 = vmatpush1.msra.mxu0 0.0
  %1518 = vmatprep.subr.mxu0 0.0
  %1519 = vmatpush1.msra.mxu0 0.0
  %1520 = vmatprep.subr.mxu0 0.0
  %1521 = vmatpush1.msra.mxu0 0.0
  %1522 = vmatprep.subr.mxu0 0.0
  %1523 = vmatpush1.msra.mxu0 0.0
  %1524 = vmatprep.subr.mxu0 0.0
  %1525 = vmatpush1.msra.mxu0 0.0
  %1526 = vmatprep.subr.mxu0 0.0
  %1527 = vmatpush1.msra.mxu0 0.0
  %1528 = vmatprep.subr.mxu0 0.0
  %1529 = vmatpush1.msra.mxu0 0.0
  %1530 = vmatprep.subr.mxu0 0.0
  %1531 = vmatpush1.msra.mxu0 0.0
  %1532 = vmatprep.mubr.f32.mxu0 0.0
  %1533 = vmatmul.mubr.f32.gmra.mrb[0].mxu0 %v1462
  %v1534 = vpop.f32.mrb[0].mxu0
  %v1535 = vadd.f32 %v1458, %v1534
  %v1536 = vpop.f32.mrb[0].mxu0
  %1537 = vdwg.mxu0
  %v1538 = vmax.f32 %v1535, 0.0
  %v1539 = vpack.c.bf16 %v1538, %v1538
  %v1540 = vld [vmem:[%s7] sm:$0xf]
  %v1541 = vld [vmem:[%s7 + $0x4] sm:$0xf]
  %v1542 = vld [vmem:[%s7 + $0x8] sm:$0xf]
  %v1543 = vld [vmem:[%s7 + $0xc] sm:$0xf]
  %v1544 = vld [vmem:[%s8] sm:$0x1]
  %v1546 = vlaneseq
  %v1547 = vshrl.u32 %v1546, 7
  %v1548 = vsub.s32 0, %v1547
  %v1549 = vrot.slane %v1544, %v1548
  %v1555 = vunpack.c.l.b16 %v1540
  %v1556 = vunpack.c.l.b16 %v1541
  %v1557 = vunpack.c.l.b16 %v1542
  %v1558 = vunpack.c.l.b16 %v1543
  %v1559 = vpack.c.b16 %v1556, %v1555
  %v1560 = vpack.c.b16 %v1558, %v1557
  %vm1563 = vcmask 261120
  %v1565 = vsel %vm1563, %v1539, 0
  %1567 = vmatprep.subr.bf16.mxu0 0
  %1568 = vmatpush1.bf16.msra.mxu0 %v1559
  %1569 = vmatprep.subr.bf16.mxu0 0
  %1570 = vmatpush1.bf16.msra.mxu0 %v1560
  %1571 = vmatprep.subr.bf16.mxu0 0
  %1572 = vmatpush1.bf16.msra.mxu0 0
  %1573 = vmatprep.subr.bf16.mxu0 0
  %1574 = vmatpush1.bf16.msra.mxu0 0
  %1575 = vmatprep.subr.bf16.mxu0 0
  %1576 = vmatpush1.bf16.msra.mxu0 0
  %1577 = vmatprep.subr.bf16.mxu0 0
  %1578 = vmatpush1.bf16.msra.mxu0 0
  %1579 = vmatprep.subr.bf16.mxu0 0
  %1580 = vmatpush1.bf16.msra.mxu0 0
  %1581 = vmatprep.subr.bf16.mxu0 0
  %1582 = vmatpush1.bf16.msra.mxu0 0
  %1583 = vmatprep.subr.bf16.mxu0 0
  %1584 = vmatpush1.bf16.msra.mxu0 0
  %1585 = vmatprep.subr.bf16.mxu0 0
  %1586 = vmatpush1.bf16.msra.mxu0 0
  %1587 = vmatprep.subr.bf16.mxu0 0
  %1588 = vmatpush1.bf16.msra.mxu0 0
  %1589 = vmatprep.subr.bf16.mxu0 0
  %1590 = vmatpush1.bf16.msra.mxu0 0
  %1591 = vmatprep.subr.bf16.mxu0 0
  %1592 = vmatpush1.bf16.msra.mxu0 0
  %1593 = vmatprep.subr.bf16.mxu0 0
  %1594 = vmatpush1.bf16.msra.mxu0 0
  %1595 = vmatprep.subr.bf16.mxu0 0
  %1596 = vmatpush1.bf16.msra.mxu0 0
  %1597 = vmatprep.subr.bf16.mxu0 0
  %1598 = vmatpush1.bf16.msra.mxu0 0
  %1599 = vmatprep.mubr.bf16.mxu0 0
  %1600 = vmatmul.mubr.bf16.gmra.mrb[0].mxu0 %v1565
  %v1601 = vpop.f32.mrb[0].mxu0
  %v1602 = vadd.f32 %v1549, %v1601
  %v1603 = vpop.f32.mrb[0].mxu0
  %v1604 = vpop.f32.mrb[0].mxu0
  %v1605 = vpop.f32.mrb[0].mxu0
  %1606 = vdwg.mxu0
  %1607 = vst [vmem:[%s9] sm:$0xff] %v1602
  // Predicated region
  $region38: #{a2c_fused_forward.1} parent=0 // pred_check
    _
  $region39: #{a2c_fused_forward.1} parent=0 // pred_check_branch
    %1609 = sbr.rel (0) target = $region41
  $region40: #{a2c_fused_forward.1} parent=0 // pred_region
    _
  $region41: #{a2c_fused_forward.1} parent=0 // pred_fallthru
    _
  // Predicated region
  $region42: #{a2c_fused_forward.1} parent=0 // pred_check
    _
  $region43: #{a2c_fused_forward.1} parent=0 // pred_check_branch
    %1611 = sbr.rel (0) target = $region45
  $region44: #{a2c_fused_forward.1} parent=0 // pred_region
    _
  $region45: #{a2c_fused_forward.1} parent=0 // pred_fallthru
    _

</llo_original>
